<compile_context>
chip_gen: v6e
topology: v6e:2x2x1
jax: 0.10.0
libtpu: 0.0.40
codegen_flags: <defaults>
</compile_context>

<pallas_src>
import functools

import jax
import jax.numpy as jnp
from jax.experimental import pallas as pl
from jax.experimental.pallas import tpu as pltpu

EPS = 1e-5


# ----------------------------- in-kernel helpers -----------------------------

def _shift_masks(hh, ww, s):
    """(1, S) validity masks for +-1 shifts of the flat (n, i, j) spatial axis."""
    # flat index q = n*hh*ww + i*ww + j ;  hh, ww are powers of two
    q = jax.lax.broadcasted_iota(jnp.int32, (1, s), 1)
    j = q & (ww - 1)
    i = (q >> (ww.bit_length() - 1)) & (hh - 1)
    row = {-1: i >= 1, 0: None, 1: i <= hh - 2}
    col = {-1: j >= 1, 0: None, 1: j <= ww - 2}
    return row, col


def _shifted_tap(y, di, dj, row_m, col_m, ww, s):
    """tap[c, (n,i,j)] = y[c, (n, i+di, j+dj)], zero-filled outside the grid."""
    d = di * ww + dj
    t = y if d == 0 else pltpu.roll(y, (-d) % s, axis=1)   # t[q] = y[q + d]
    m = row_m[di]
    if col_m[dj] is not None:
        m = col_m[dj] if m is None else jnp.logical_and(m, col_m[dj])
    return t if m is None else jnp.where(m, t, 0.0)


def _bn_relu(parts, gamma, beta):
    """Training-mode BatchNorm + ReLU on channel-major (C, S_k) slabs.

    `parts` jointly hold every N*H*W element of each channel exactly once, so
    per-channel batch statistics are accumulated over all slabs in ONE pass
    (sum and sum-of-squares); biased variance, eps = 1e-5 (PyTorch defaults).
    """
    total = sum(p.shape[1] for p in parts)
    ssum = ssq = None
    for p in parts:
        ps = jnp.sum(p, axis=1, keepdims=True)
        pq = jnp.sum(p * p, axis=1, keepdims=True)
        ssum = ps if ssum is None else ssum + ps
        ssq = pq if ssq is None else ssq + pq
    mean = ssum * (1.0 / total)
    var = ssq * (1.0 / total) - mean * mean
    scale = gamma * jax.lax.rsqrt(var + EPS)          # rsqrt -> EUP slot
    shift = beta - mean * scale
    return [jnp.maximum(p * scale + shift, 0.0) for p in parts]


def _mac_taps(acc, tap, w_ref, t, cin):
    """acc[co, q] += sum_ci w[t, ci, co] * tap[ci, q]  (VPU outer-product MAC)."""
    for ci in range(cin):
        acc = acc + w_ref[t, ci] * tap[ci:ci + 1, :]   # (Cout,1)*(1,S) -> (Cout,S)
    return acc


# -------------------------------- fused kernel --------------------------------

def _adjust_block_kernel(x00_ref, x01_ref, x10_ref, x11_ref,
                         g1_ref, b1_ref, w1_ref, g2_ref, b2_ref, w2_ref,
                         out_ref, *, hh, ww, cin, cmid):
    s = out_ref.shape[1]                         # N * OH * OW (flat spatial axis)
    row_m, col_m = _shift_masks(hh, ww, s)

    # ---- BN1 (batch stats) + ReLU, applied to the four polyphase components.
    xs = [x00_ref[...], x01_ref[...], x10_ref[...], x11_ref[...]]
    ys = _bn_relu(xs, g1_ref[...], b1_ref[...])   # 4 x (Cin, S)

    # ---- conv1: 3x3, stride 2, pad 1 (polyphase shifted-MAC).
    #   input row 2*i + ky - 1  ->  (row parity, major-index shift)
    sel = {0: (1, -1), 1: (0, 0), 2: (1, 0)}
    acc1 = jnp.zeros((cmid, s), jnp.float32)
    for ky in range(3):
        pr, di = sel[ky]
        for kx in range(3):
            pc, dj = sel[kx]
            tap = _shifted_tap(ys[pr * 2 + pc], di, dj, row_m, col_m, ww, s)
            acc1 = _mac_taps(acc1, tap, w1_ref, ky * 3 + kx, cin)

    # ---- BN2 + ReLU.
    y2 = _bn_relu([acc1], g2_ref[...], b2_ref[...])[0]   # (Cmid, S)

    # ---- conv2: 3x3, stride 1, pad 1 (shifted-MAC on the same flat layout).
    acc2 = jnp.zeros((cmid, s), jnp.float32)
    for ky in range(3):
        for kx in range(3):
            tap = _shifted_tap(y2, ky - 1, kx - 1, row_m, col_m, ww, s)
            acc2 = _mac_taps(acc2, tap, w2_ref, ky * 3 + kx, cmid)

    out_ref[...] = acc2                           # lane-dense (Cout, N*OH*OW)


# --------------------------------- wrapper ------------------------------------

def adjust_block_forward(x, params, *, stride=2):
    """AdjustBlock forward: relu(bn1) -> conv1(s=2) -> relu(bn2) -> conv2(s=1)."""
    assert stride == 2, "only the default stride=2 AdjustBlock is implemented"
    # TODO(synk): stride=1 variant would reuse the stride-1 shifted-MAC path of conv2.
    n, cin, h, w = x.shape
    assert h % 2 == 0 and w % 2 == 0
    hh, ww = h // 2, w // 2                       # = OH, OW after the stride-2 conv
    assert hh & (hh - 1) == 0 and ww & (ww - 1) == 0, "power-of-two spatial tiles"
    cmid = params["conv1_w"].shape[0]
    s = n * hh * ww

    # One-time layout prep (pure relayout, no im2col blow-up):
    #   polyphase split x[n, c, 2i+pr, 2j+pc] -> phase[pr,pc][c, n*hh*ww + i*ww + j]
    xp = x.astype(jnp.float32).reshape(n, cin, hh, 2, ww, 2)
    xp = jnp.transpose(xp, (3, 5, 1, 0, 2, 4)).reshape(2, 2, cin, s)
    x00, x01, x10, x11 = xp[0, 0], xp[0, 1], xp[1, 0], xp[1, 1]

    # Weights as (tap, ci, co, 1) so each (Cout, 1) column broadcasts along lanes.
    w1 = jnp.transpose(params["conv1_w"].astype(jnp.float32),
                       (2, 3, 1, 0)).reshape(9, cin, cmid, 1)
    w2 = jnp.transpose(params["conv2_w"].astype(jnp.float32),
                       (2, 3, 1, 0)).reshape(9, cmid, cmid, 1)
    g1 = params["bn1_g"].reshape(cin, 1).astype(jnp.float32)
    b1 = params["bn1_b"].reshape(cin, 1).astype(jnp.float32)
    g2 = params["bn2_g"].reshape(cmid, 1).astype(jnp.float32)
    b2 = params["bn2_b"].reshape(cmid, 1).astype(jnp.float32)

    vmem = pl.BlockSpec(memory_space=pltpu.MemorySpace.VMEM)
    kernel = functools.partial(_adjust_block_kernel,
                               hh=hh, ww=ww, cin=cin, cmid=cmid)
    out_flat = pl.pallas_call(
        kernel,
        out_shape=jax.ShapeDtypeStruct((cmid, s), jnp.float32),
        in_specs=[vmem] * 10,
        out_specs=vmem,
    )(x00, x01, x10, x11, g1, b1, w1, g2, b2, w2)

    # (Cout, N*OH*OW) -> (N, Cout, OH, OW)
    return jnp.transpose(out_flat.reshape(cmid, n, hh, ww), (1, 0, 2, 3))


# --------------------------- pure-JAX reference --------------------------------

def adjust_block_reference(x, params, *, stride=2):
    def bn_relu(v, g, b):
        mean = jnp.mean(v, axis=(0, 2, 3), keepdims=True)
        var = jnp.mean(jnp.square(v - mean), axis=(0, 2, 3), keepdims=True)
        vn = (v - mean) * jax.lax.rsqrt(var + EPS)
        return jnp.maximum(vn * g.reshape(1, -1, 1, 1) + b.reshape(1, -1, 1, 1), 0.0)

    def conv(v, w, s):
        return jax.lax.conv_general_dilated(
            v, w, window_strides=(s, s), padding=((1, 1), (1, 1)),
            dimension_numbers=("NCHW", "OIHW", "NCHW"),
            precision=jax.lax.Precision.HIGHEST)

    dy = bn_relu(x, params["bn1_g"], params["bn1_b"])
    out = conv(dy, params["conv1_w"], stride)
    out = conv(bn_relu(out, params["bn2_g"], params["bn2_b"]),
               params["conv2_w"], 1)
    return out


# ------------------------------------ main -------------------------------------

if __name__ == "__main__":
    N, IN_PLANES, PLANES, H, W = 2, 4, 8, 16, 16

    key = jax.random.PRNGKey(0)
    kx, k1, k2, k3, k4, k5, k6 = jax.random.split(key, 7)
    x = jax.random.normal(kx, (N, IN_PLANES, H, W), jnp.float32)
    params = {
        "bn1_g": 1.0 + 0.1 * jax.random.normal(k1, (IN_PLANES,), jnp.float32),
        "bn1_b": 0.1 * jax.random.normal(k2, (IN_PLANES,), jnp.float32),
        "conv1_w": 0.1 * jax.random.normal(k3, (PLANES, IN_PLANES, 3, 3), jnp.float32),
        "bn2_g": 1.0 + 0.1 * jax.random.normal(k4, (PLANES,), jnp.float32),
        "bn2_b": 0.1 * jax.random.normal(k5, (PLANES,), jnp.float32),
        "conv2_w": 0.1 * jax.random.normal(k6, (PLANES, PLANES, 3, 3), jnp.float32),
    }

    fwd = jax.jit(functools.partial(adjust_block_forward, params=params))
    out = fwd(x)
    jax.block_until_ready(out)
    assert out.shape == (N, PLANES, H // 2, W // 2), out.shape
    assert jnp.all(jnp.isfinite(out))

    ref = jax.jit(functools.partial(adjust_block_reference, params=params))(x)
    jax.block_until_ready(ref)
    max_err = float(jnp.max(jnp.abs(out - ref)))
    assert max_err < 1e-3, f"max abs err vs reference: {max_err}"

    print("KERNEL_OK")
</pallas_src>

<mosaic_0001>
module attributes {stable_mosaic.version = 11 : i64} {
  func.func @_adjust_block_kernel(%arg0: memref<4x128xf32, #tpu.memory_space<vmem>>, %arg1: memref<4x128xf32, #tpu.memory_space<vmem>>, %arg2: memref<4x128xf32, #tpu.memory_space<vmem>>, %arg3: memref<4x128xf32, #tpu.memory_space<vmem>>, %arg4: memref<4x1xf32, #tpu.memory_space<vmem>>, %arg5: memref<4x1xf32, #tpu.memory_space<vmem>>, %arg6: memref<9x4x8x1xf32, #tpu.memory_space<vmem>>, %arg7: memref<8x1xf32, #tpu.memory_space<vmem>>, %arg8: memref<8x1xf32, #tpu.memory_space<vmem>>, %arg9: memref<9x8x8x1xf32, #tpu.memory_space<vmem>>, %arg10: memref<8x128xf32, #tpu.memory_space<vmem>>) attributes {dimension_semantics = [], scalar_prefetch = 0 : i64, scratch_operands = 0 : i64, tpu.core_type = #tpu.core_type<tc>} {
    %0 = tpu.iota {dimensions = array<i32: 1>} : vector<1x128xi32>
    %c7_i32 = arith.constant 7 : i32
    %1 = vector.broadcast %c7_i32 : i32 to vector<1x128xi32>
    %2 = arith.andi %0, %1 : vector<1x128xi32>
    %c3_i32 = arith.constant 3 : i32
    %3 = vector.broadcast %c3_i32 : i32 to vector<1x128xi32>
    %4 = arith.shrsi %0, %3 : vector<1x128xi32>
    %c7_i32_0 = arith.constant 7 : i32
    %5 = vector.broadcast %c7_i32_0 : i32 to vector<1x128xi32>
    %6 = arith.andi %4, %5 : vector<1x128xi32>
    %c1_i32 = arith.constant 1 : i32
    %7 = vector.broadcast %c1_i32 : i32 to vector<1x128xi32>
    %8 = arith.cmpi sge, %6, %7 : vector<1x128xi32>
    %c6_i32 = arith.constant 6 : i32
    %9 = vector.broadcast %c6_i32 : i32 to vector<1x128xi32>
    %10 = arith.cmpi sle, %6, %9 : vector<1x128xi32>
    %c1_i32_1 = arith.constant 1 : i32
    %11 = vector.broadcast %c1_i32_1 : i32 to vector<1x128xi32>
    %12 = arith.cmpi sge, %2, %11 : vector<1x128xi32>
    %c6_i32_2 = arith.constant 6 : i32
    %13 = vector.broadcast %c6_i32_2 : i32 to vector<1x128xi32>
    %14 = arith.cmpi sle, %2, %13 : vector<1x128xi32>
    %c0 = arith.constant 0 : index
    %c0_3 = arith.constant 0 : index
    %15 = vector.load %arg0[%c0, %c0_3] : memref<4x128xf32, #tpu.memory_space<vmem>>, vector<4x128xf32>
    %c0_4 = arith.constant 0 : index
    %c0_5 = arith.constant 0 : index
    %16 = vector.load %arg1[%c0_4, %c0_5] : memref<4x128xf32, #tpu.memory_space<vmem>>, vector<4x128xf32>
    %c0_6 = arith.constant 0 : index
    %c0_7 = arith.constant 0 : index
    %17 = vector.load %arg2[%c0_6, %c0_7] : memref<4x128xf32, #tpu.memory_space<vmem>>, vector<4x128xf32>
    %c0_8 = arith.constant 0 : index
    %c0_9 = arith.constant 0 : index
    %18 = vector.load %arg3[%c0_8, %c0_9] : memref<4x128xf32, #tpu.memory_space<vmem>>, vector<4x128xf32>
    %c0_10 = arith.constant 0 : index
    %c0_11 = arith.constant 0 : index
    %19 = vector.load %arg4[%c0_10, %c0_11] : memref<4x1xf32, #tpu.memory_space<vmem>>, vector<4x1xf32>
    %c0_12 = arith.constant 0 : index
    %c0_13 = arith.constant 0 : index
    %20 = vector.load %arg5[%c0_12, %c0_13] : memref<4x1xf32, #tpu.memory_space<vmem>>, vector<4x1xf32>
    %cst = arith.constant dense<0.000000e+00> : vector<4xf32>
    %21 = vector.multi_reduction <add>, %15, %cst [1] : vector<4x128xf32> to vector<4xf32>
    %22 = vector.shape_cast %21 : vector<4xf32> to vector<4x1xf32>
    %23 = arith.mulf %15, %15 : vector<4x128xf32>
    %cst_14 = arith.constant dense<0.000000e+00> : vector<4xf32>
    %24 = vector.multi_reduction <add>, %23, %cst_14 [1] : vector<4x128xf32> to vector<4xf32>
    %25 = vector.shape_cast %24 : vector<4xf32> to vector<4x1xf32>
    %cst_15 = arith.constant dense<0.000000e+00> : vector<4xf32>
    %26 = vector.multi_reduction <add>, %16, %cst_15 [1] : vector<4x128xf32> to vector<4xf32>
    %27 = vector.shape_cast %26 : vector<4xf32> to vector<4x1xf32>
    %28 = arith.mulf %16, %16 : vector<4x128xf32>
    %cst_16 = arith.constant dense<0.000000e+00> : vector<4xf32>
    %29 = vector.multi_reduction <add>, %28, %cst_16 [1] : vector<4x128xf32> to vector<4xf32>
    %30 = vector.shape_cast %29 : vector<4xf32> to vector<4x1xf32>
    %31 = arith.addf %22, %27 : vector<4x1xf32>
    %32 = arith.addf %25, %30 : vector<4x1xf32>
    %cst_17 = arith.constant dense<0.000000e+00> : vector<4xf32>
    %33 = vector.multi_reduction <add>, %17, %cst_17 [1] : vector<4x128xf32> to vector<4xf32>
    %34 = vector.shape_cast %33 : vector<4xf32> to vector<4x1xf32>
    %35 = arith.mulf %17, %17 : vector<4x128xf32>
    %cst_18 = arith.constant dense<0.000000e+00> : vector<4xf32>
    %36 = vector.multi_reduction <add>, %35, %cst_18 [1] : vector<4x128xf32> to vector<4xf32>
    %37 = vector.shape_cast %36 : vector<4xf32> to vector<4x1xf32>
    %38 = arith.addf %31, %34 : vector<4x1xf32>
    %39 = arith.addf %32, %37 : vector<4x1xf32>
    %cst_19 = arith.constant dense<0.000000e+00> : vector<4xf32>
    %40 = vector.multi_reduction <add>, %18, %cst_19 [1] : vector<4x128xf32> to vector<4xf32>
    %41 = vector.shape_cast %40 : vector<4xf32> to vector<4x1xf32>
    %42 = arith.mulf %18, %18 : vector<4x128xf32>
    %cst_20 = arith.constant dense<0.000000e+00> : vector<4xf32>
    %43 = vector.multi_reduction <add>, %42, %cst_20 [1] : vector<4x128xf32> to vector<4xf32>
    %44 = vector.shape_cast %43 : vector<4xf32> to vector<4x1xf32>
    %45 = arith.addf %38, %41 : vector<4x1xf32>
    %46 = arith.addf %39, %44 : vector<4x1xf32>
    %cst_21 = arith.constant 0.001953125 : f32
    %47 = vector.broadcast %cst_21 : f32 to vector<4x1xf32>
    %48 = arith.mulf %45, %47 : vector<4x1xf32>
    %cst_22 = arith.constant 0.001953125 : f32
    %49 = vector.broadcast %cst_22 : f32 to vector<4x1xf32>
    %50 = arith.mulf %46, %49 : vector<4x1xf32>
    %51 = arith.mulf %48, %48 : vector<4x1xf32>
    %52 = arith.subf %50, %51 : vector<4x1xf32>
    %cst_23 = arith.constant 9.99999974E-6 : f32
    %53 = vector.broadcast %cst_23 : f32 to vector<4x1xf32>
    %54 = arith.addf %52, %53 : vector<4x1xf32>
    %55 = math.rsqrt %54 : vector<4x1xf32>
    %56 = arith.mulf %19, %55 : vector<4x1xf32>
    %57 = arith.mulf %48, %56 : vector<4x1xf32>
    %58 = arith.subf %20, %57 : vector<4x1xf32>
    %59 = vector.broadcast %56 : vector<4x1xf32> to vector<4x128xf32>
    %60 = arith.mulf %15, %59 : vector<4x128xf32>
    %61 = vector.broadcast %58 : vector<4x1xf32> to vector<4x128xf32>
    %62 = arith.addf %60, %61 : vector<4x128xf32>
    %cst_24 = arith.constant 0.000000e+00 : f32
    %63 = vector.broadcast %cst_24 : f32 to vector<4x128xf32>
    %64 = arith.maximumf %62, %63 : vector<4x128xf32>
    %65 = vector.broadcast %56 : vector<4x1xf32> to vector<4x128xf32>
    %66 = arith.mulf %16, %65 : vector<4x128xf32>
    %67 = vector.broadcast %58 : vector<4x1xf32> to vector<4x128xf32>
    %68 = arith.addf %66, %67 : vector<4x128xf32>
    %cst_25 = arith.constant 0.000000e+00 : f32
    %69 = vector.broadcast %cst_25 : f32 to vector<4x128xf32>
    %70 = arith.maximumf %68, %69 : vector<4x128xf32>
    %71 = vector.broadcast %56 : vector<4x1xf32> to vector<4x128xf32>
    %72 = arith.mulf %17, %71 : vector<4x128xf32>
    %73 = vector.broadcast %58 : vector<4x1xf32> to vector<4x128xf32>
    %74 = arith.addf %72, %73 : vector<4x128xf32>
    %cst_26 = arith.constant 0.000000e+00 : f32
    %75 = vector.broadcast %cst_26 : f32 to vector<4x128xf32>
    %76 = arith.maximumf %74, %75 : vector<4x128xf32>
    %77 = vector.broadcast %56 : vector<4x1xf32> to vector<4x128xf32>
    %78 = arith.mulf %18, %77 : vector<4x128xf32>
    %79 = vector.broadcast %58 : vector<4x1xf32> to vector<4x128xf32>
    %80 = arith.addf %78, %79 : vector<4x128xf32>
    %cst_27 = arith.constant 0.000000e+00 : f32
    %81 = vector.broadcast %cst_27 : f32 to vector<4x128xf32>
    %82 = arith.maximumf %80, %81 : vector<4x128xf32>
    %cst_28 = arith.constant 0.000000e+00 : f32
    %83 = vector.broadcast %cst_28 : f32 to vector<8x128xf32>
    %c9_i32 = arith.constant 9 : i32
    %84 = tpu.dynamic_rotate %82 by %c9_i32 dim 1 : vector<4x128xf32>, i32 -> vector<4x128xf32>
    %85 = arith.andi %8, %12 : vector<1x128xi1>
    %cst_29 = arith.constant 0.000000e+00 : f32
    %86 = vector.shape_cast %85 : vector<1x128xi1> to vector<1x128xi1>
    %87 = vector.broadcast %86 : vector<1x128xi1> to vector<4x128xi1>
    %88 = vector.broadcast %cst_29 : f32 to vector<4x128xf32>
    %89 = arith.select %87, %84, %88 : vector<4x128xi1>, vector<4x128xf32>
    %c0_30 = arith.constant 0 : index
    %c0_31 = arith.constant 0 : index
    %c0_32 = arith.constant 0 : index
    %c0_33 = arith.constant 0 : index
    %90 = vector.load %arg6[%c0_30, %c0_31, %c0_32, %c0_33] : memref<9x4x8x1xf32, #tpu.memory_space<vmem>>, vector<1x1x8x1xf32>
    %91 = vector.shape_cast %90 : vector<1x1x8x1xf32> to vector<8x1xf32>
    %92 = vector.extract_strided_slice %89 {offsets = [0, 0], sizes = [1, 128], strides = [1, 1]} : vector<4x128xf32> to vector<1x128xf32>
    %93 = vector.broadcast %91 : vector<8x1xf32> to vector<8x128xf32>
    %94 = vector.broadcast %92 : vector<1x128xf32> to vector<8x128xf32>
    %95 = arith.mulf %93, %94 : vector<8x128xf32>
    %96 = arith.addf %83, %95 : vector<8x128xf32>
    %c0_34 = arith.constant 0 : index
    %c1 = arith.constant 1 : index
    %c0_35 = arith.constant 0 : index
    %c0_36 = arith.constant 0 : index
    %97 = vector.load %arg6[%c0_34, %c1, %c0_35, %c0_36] : memref<9x4x8x1xf32, #tpu.memory_space<vmem>>, vector<1x1x8x1xf32>
    %98 = vector.shape_cast %97 : vector<1x1x8x1xf32> to vector<8x1xf32>
    %99 = vector.extract_strided_slice %89 {offsets = [1, 0], sizes = [1, 128], strides = [1, 1]} : vector<4x128xf32> to vector<1x128xf32>
    %100 = vector.broadcast %98 : vector<8x1xf32> to vector<8x128xf32>
    %101 = vector.broadcast %99 : vector<1x128xf32> to vector<8x128xf32>
    %102 = arith.mulf %100, %101 : vector<8x128xf32>
    %103 = arith.addf %96, %102 : vector<8x128xf32>
    %c0_37 = arith.constant 0 : index
    %c2 = arith.constant 2 : index
    %c0_38 = arith.constant 0 : index
    %c0_39 = arith.constant 0 : index
    %104 = vector.load %arg6[%c0_37, %c2, %c0_38, %c0_39] : memref<9x4x8x1xf32, #tpu.memory_space<vmem>>, vector<1x1x8x1xf32>
    %105 = vector.shape_cast %104 : vector<1x1x8x1xf32> to vector<8x1xf32>
    %106 = vector.extract_strided_slice %89 {offsets = [2, 0], sizes = [1, 128], strides = [1, 1]} : vector<4x128xf32> to vector<1x128xf32>
    %107 = vector.broadcast %105 : vector<8x1xf32> to vector<8x128xf32>
    %108 = vector.broadcast %106 : vector<1x128xf32> to vector<8x128xf32>
    %109 = arith.mulf %107, %108 : vector<8x128xf32>
    %110 = arith.addf %103, %109 : vector<8x128xf32>
    %c0_40 = arith.constant 0 : index
    %c3 = arith.constant 3 : index
    %c0_41 = arith.constant 0 : index
    %c0_42 = arith.constant 0 : index
    %111 = vector.load %arg6[%c0_40, %c3, %c0_41, %c0_42] : memref<9x4x8x1xf32, #tpu.memory_space<vmem>>, vector<1x1x8x1xf32>
    %112 = vector.shape_cast %111 : vector<1x1x8x1xf32> to vector<8x1xf32>
    %113 = vector.extract_strided_slice %89 {offsets = [3, 0], sizes = [1, 128], strides = [1, 1]} : vector<4x128xf32> to vector<1x128xf32>
    %114 = vector.broadcast %112 : vector<8x1xf32> to vector<8x128xf32>
    %115 = vector.broadcast %113 : vector<1x128xf32> to vector<8x128xf32>
    %116 = arith.mulf %114, %115 : vector<8x128xf32>
    %117 = arith.addf %110, %116 : vector<8x128xf32>
    %c8_i32 = arith.constant 8 : i32
    %118 = tpu.dynamic_rotate %76 by %c8_i32 dim 1 : vector<4x128xf32>, i32 -> vector<4x128xf32>
    %cst_43 = arith.constant 0.000000e+00 : f32
    %119 = vector.shape_cast %8 : vector<1x128xi1> to vector<1x128xi1>
    %120 = vector.broadcast %119 : vector<1x128xi1> to vector<4x128xi1>
    %121 = vector.broadcast %cst_43 : f32 to vector<4x128xf32>
    %122 = arith.select %120, %118, %121 : vector<4x128xi1>, vector<4x128xf32>
    %c1_44 = arith.constant 1 : index
    %c0_45 = arith.constant 0 : index
    %c0_46 = arith.constant 0 : index
    %c0_47 = arith.constant 0 : index
    %123 = vector.load %arg6[%c1_44, %c0_45, %c0_46, %c0_47] : memref<9x4x8x1xf32, #tpu.memory_space<vmem>>, vector<1x1x8x1xf32>
    %124 = vector.shape_cast %123 : vector<1x1x8x1xf32> to vector<8x1xf32>
    %125 = vector.extract_strided_slice %122 {offsets = [0, 0], sizes = [1, 128], strides = [1, 1]} : vector<4x128xf32> to vector<1x128xf32>
    %126 = vector.broadcast %124 : vector<8x1xf32> to vector<8x128xf32>
    %127 = vector.broadcast %125 : vector<1x128xf32> to vector<8x128xf32>
    %128 = arith.mulf %126, %127 : vector<8x128xf32>
    %129 = arith.addf %117, %128 : vector<8x128xf32>
    %c1_48 = arith.constant 1 : index
    %c1_49 = arith.constant 1 : index
    %c0_50 = arith.constant 0 : index
    %c0_51 = arith.constant 0 : index
    %130 = vector.load %arg6[%c1_48, %c1_49, %c0_50, %c0_51] : memref<9x4x8x1xf32, #tpu.memory_space<vmem>>, vector<1x1x8x1xf32>
    %131 = vector.shape_cast %130 : vector<1x1x8x1xf32> to vector<8x1xf32>
    %132 = vector.extract_strided_slice %122 {offsets = [1, 0], sizes = [1, 128], strides = [1, 1]} : vector<4x128xf32> to vector<1x128xf32>
    %133 = vector.broadcast %131 : vector<8x1xf32> to vector<8x128xf32>
    %134 = vector.broadcast %132 : vector<1x128xf32> to vector<8x128xf32>
    %135 = arith.mulf %133, %134 : vector<8x128xf32>
    %136 = arith.addf %129, %135 : vector<8x128xf32>
    %c1_52 = arith.constant 1 : index
    %c2_53 = arith.constant 2 : index
    %c0_54 = arith.constant 0 : index
    %c0_55 = arith.constant 0 : index
    %137 = vector.load %arg6[%c1_52, %c2_53, %c0_54, %c0_55] : memref<9x4x8x1xf32, #tpu.memory_space<vmem>>, vector<1x1x8x1xf32>
    %138 = vector.shape_cast %137 : vector<1x1x8x1xf32> to vector<8x1xf32>
    %139 = vector.extract_strided_slice %122 {offsets = [2, 0], sizes = [1, 128], strides = [1, 1]} : vector<4x128xf32> to vector<1x128xf32>
    %140 = vector.broadcast %138 : vector<8x1xf32> to vector<8x128xf32>
    %141 = vector.broadcast %139 : vector<1x128xf32> to vector<8x128xf32>
    %142 = arith.mulf %140, %141 : vector<8x128xf32>
    %143 = arith.addf %136, %142 : vector<8x128xf32>
    %c1_56 = arith.constant 1 : index
    %c3_57 = arith.constant 3 : index
    %c0_58 = arith.constant 0 : index
    %c0_59 = arith.constant 0 : index
    %144 = vector.load %arg6[%c1_56, %c3_57, %c0_58, %c0_59] : memref<9x4x8x1xf32, #tpu.memory_space<vmem>>, vector<1x1x8x1xf32>
    %145 = vector.shape_cast %144 : vector<1x1x8x1xf32> to vector<8x1xf32>
    %146 = vector.extract_strided_slice %122 {offsets = [3, 0], sizes = [1, 128], strides = [1, 1]} : vector<4x128xf32> to vector<1x128xf32>
    %147 = vector.broadcast %145 : vector<8x1xf32> to vector<8x128xf32>
    %148 = vector.broadcast %146 : vector<1x128xf32> to vector<8x128xf32>
    %149 = arith.mulf %147, %148 : vector<8x128xf32>
    %150 = arith.addf %143, %149 : vector<8x128xf32>
    %c8_i32_60 = arith.constant 8 : i32
    %151 = tpu.dynamic_rotate %82 by %c8_i32_60 dim 1 : vector<4x128xf32>, i32 -> vector<4x128xf32>
    %cst_61 = arith.constant 0.000000e+00 : f32
    %152 = vector.shape_cast %8 : vector<1x128xi1> to vector<1x128xi1>
    %153 = vector.broadcast %152 : vector<1x128xi1> to vector<4x128xi1>
    %154 = vector.broadcast %cst_61 : f32 to vector<4x128xf32>
    %155 = arith.select %153, %151, %154 : vector<4x128xi1>, vector<4x128xf32>
    %c2_62 = arith.constant 2 : index
    %c0_63 = arith.constant 0 : index
    %c0_64 = arith.constant 0 : index
    %c0_65 = arith.constant 0 : index
    %156 = vector.load %arg6[%c2_62, %c0_63, %c0_64, %c0_65] : memref<9x4x8x1xf32, #tpu.memory_space<vmem>>, vector<1x1x8x1xf32>
    %157 = vector.shape_cast %156 : vector<1x1x8x1xf32> to vector<8x1xf32>
    %158 = vector.extract_strided_slice %155 {offsets = [0, 0], sizes = [1, 128], strides = [1, 1]} : vector<4x128xf32> to vector<1x128xf32>
    %159 = vector.broadcast %157 : vector<8x1xf32> to vector<8x128xf32>
    %160 = vector.broadcast %158 : vector<1x128xf32> to vector<8x128xf32>
    %161 = arith.mulf %159, %160 : vector<8x128xf32>
    %162 = arith.addf %150, %161 : vector<8x128xf32>
    %c2_66 = arith.constant 2 : index
    %c1_67 = arith.constant 1 : index
    %c0_68 = arith.constant 0 : index
    %c0_69 = arith.constant 0 : index
    %163 = vector.load %arg6[%c2_66, %c1_67, %c0_68, %c0_69] : memref<9x4x8x1xf32, #tpu.memory_space<vmem>>, vector<1x1x8x1xf32>
    %164 = vector.shape_cast %163 : vector<1x1x8x1xf32> to vector<8x1xf32>
    %165 = vector.extract_strided_slice %155 {offsets = [1, 0], sizes = [1, 128], strides = [1, 1]} : vector<4x128xf32> to vector<1x128xf32>
    %166 = vector.broadcast %164 : vector<8x1xf32> to vector<8x128xf32>
    %167 = vector.broadcast %165 : vector<1x128xf32> to vector<8x128xf32>
    %168 = arith.mulf %166, %167 : vector<8x128xf32>
    %169 = arith.addf %162, %168 : vector<8x128xf32>
    %c2_70 = arith.constant 2 : index
    %c2_71 = arith.constant 2 : index
    %c0_72 = arith.constant 0 : index
    %c0_73 = arith.constant 0 : index
    %170 = vector.load %arg6[%c2_70, %c2_71, %c0_72, %c0_73] : memref<9x4x8x1xf32, #tpu.memory_space<vmem>>, vector<1x1x8x1xf32>
    %171 = vector.shape_cast %170 : vector<1x1x8x1xf32> to vector<8x1xf32>
    %172 = vector.extract_strided_slice %155 {offsets = [2, 0], sizes = [1, 128], strides = [1, 1]} : vector<4x128xf32> to vector<1x128xf32>
    %173 = vector.broadcast %171 : vector<8x1xf32> to vector<8x128xf32>
    %174 = vector.broadcast %172 : vector<1x128xf32> to vector<8x128xf32>
    %175 = arith.mulf %173, %174 : vector<8x128xf32>
    %176 = arith.addf %169, %175 : vector<8x128xf32>
    %c2_74 = arith.constant 2 : index
    %c3_75 = arith.constant 3 : index
    %c0_76 = arith.constant 0 : index
    %c0_77 = arith.constant 0 : index
    %177 = vector.load %arg6[%c2_74, %c3_75, %c0_76, %c0_77] : memref<9x4x8x1xf32, #tpu.memory_space<vmem>>, vector<1x1x8x1xf32>
    %178 = vector.shape_cast %177 : vector<1x1x8x1xf32> to vector<8x1xf32>
    %179 = vector.extract_strided_slice %155 {offsets = [3, 0], sizes = [1, 128], strides = [1, 1]} : vector<4x128xf32> to vector<1x128xf32>
    %180 = vector.broadcast %178 : vector<8x1xf32> to vector<8x128xf32>
    %181 = vector.broadcast %179 : vector<1x128xf32> to vector<8x128xf32>
    %182 = arith.mulf %180, %181 : vector<8x128xf32>
    %183 = arith.addf %176, %182 : vector<8x128xf32>
    %c1_i32_78 = arith.constant 1 : i32
    %184 = tpu.dynamic_rotate %70 by %c1_i32_78 dim 1 : vector<4x128xf32>, i32 -> vector<4x128xf32>
    %cst_79 = arith.constant 0.000000e+00 : f32
    %185 = vector.shape_cast %12 : vector<1x128xi1> to vector<1x128xi1>
    %186 = vector.broadcast %185 : vector<1x128xi1> to vector<4x128xi1>
    %187 = vector.broadcast %cst_79 : f32 to vector<4x128xf32>
    %188 = arith.select %186, %184, %187 : vector<4x128xi1>, vector<4x128xf32>
    %c3_80 = arith.constant 3 : index
    %c0_81 = arith.constant 0 : index
    %c0_82 = arith.constant 0 : index
    %c0_83 = arith.constant 0 : index
    %189 = vector.load %arg6[%c3_80, %c0_81, %c0_82, %c0_83] : memref<9x4x8x1xf32, #tpu.memory_space<vmem>>, vector<1x1x8x1xf32>
    %190 = vector.shape_cast %189 : vector<1x1x8x1xf32> to vector<8x1xf32>
    %191 = vector.extract_strided_slice %188 {offsets = [0, 0], sizes = [1, 128], strides = [1, 1]} : vector<4x128xf32> to vector<1x128xf32>
    %192 = vector.broadcast %190 : vector<8x1xf32> to vector<8x128xf32>
    %193 = vector.broadcast %191 : vector<1x128xf32> to vector<8x128xf32>
    %194 = arith.mulf %192, %193 : vector<8x128xf32>
    %195 = arith.addf %183, %194 : vector<8x128xf32>
    %c3_84 = arith.constant 3 : index
    %c1_85 = arith.constant 1 : index
    %c0_86 = arith.constant 0 : index
    %c0_87 = arith.constant 0 : index
    %196 = vector.load %arg6[%c3_84, %c1_85, %c0_86, %c0_87] : memref<9x4x8x1xf32, #tpu.memory_space<vmem>>, vector<1x1x8x1xf32>
    %197 = vector.shape_cast %196 : vector<1x1x8x1xf32> to vector<8x1xf32>
    %198 = vector.extract_strided_slice %188 {offsets = [1, 0], sizes = [1, 128], strides = [1, 1]} : vector<4x128xf32> to vector<1x128xf32>
    %199 = vector.broadcast %197 : vector<8x1xf32> to vector<8x128xf32>
    %200 = vector.broadcast %198 : vector<1x128xf32> to vector<8x128xf32>
    %201 = arith.mulf %199, %200 : vector<8x128xf32>
    %202 = arith.addf %195, %201 : vector<8x128xf32>
    %c3_88 = arith.constant 3 : index
    %c2_89 = arith.constant 2 : index
    %c0_90 = arith.constant 0 : index
    %c0_91 = arith.constant 0 : index
    %203 = vector.load %arg6[%c3_88, %c2_89, %c0_90, %c0_91] : memref<9x4x8x1xf32, #tpu.memory_space<vmem>>, vector<1x1x8x1xf32>
    %204 = vector.shape_cast %203 : vector<1x1x8x1xf32> to vector<8x1xf32>
    %205 = vector.extract_strided_slice %188 {offsets = [2, 0], sizes = [1, 128], strides = [1, 1]} : vector<4x128xf32> to vector<1x128xf32>
    %206 = vector.broadcast %204 : vector<8x1xf32> to vector<8x128xf32>
    %207 = vector.broadcast %205 : vector<1x128xf32> to vector<8x128xf32>
    %208 = arith.mulf %206, %207 : vector<8x128xf32>
    %209 = arith.addf %202, %208 : vector<8x128xf32>
    %c3_92 = arith.constant 3 : index
    %c3_93 = arith.constant 3 : index
    %c0_94 = arith.constant 0 : index
    %c0_95 = arith.constant 0 : index
    %210 = vector.load %arg6[%c3_92, %c3_93, %c0_94, %c0_95] : memref<9x4x8x1xf32, #tpu.memory_space<vmem>>, vector<1x1x8x1xf32>
    %211 = vector.shape_cast %210 : vector<1x1x8x1xf32> to vector<8x1xf32>
    %212 = vector.extract_strided_slice %188 {offsets = [3, 0], sizes = [1, 128], strides = [1, 1]} : vector<4x128xf32> to vector<1x128xf32>
    %213 = vector.broadcast %211 : vector<8x1xf32> to vector<8x128xf32>
    %214 = vector.broadcast %212 : vector<1x128xf32> to vector<8x128xf32>
    %215 = arith.mulf %213, %214 : vector<8x128xf32>
    %216 = arith.addf %209, %215 : vector<8x128xf32>
    %c4 = arith.constant 4 : index
    %c0_96 = arith.constant 0 : index
    %c0_97 = arith.constant 0 : index
    %c0_98 = arith.constant 0 : index
    %217 = vector.load %arg6[%c4, %c0_96, %c0_97, %c0_98] : memref<9x4x8x1xf32, #tpu.memory_space<vmem>>, vector<1x1x8x1xf32>
    %218 = vector.shape_cast %217 : vector<1x1x8x1xf32> to vector<8x1xf32>
    %219 = vector.extract_strided_slice %64 {offsets = [0, 0], sizes = [1, 128], strides = [1, 1]} : vector<4x128xf32> to vector<1x128xf32>
    %220 = vector.broadcast %218 : vector<8x1xf32> to vector<8x128xf32>
    %221 = vector.broadcast %219 : vector<1x128xf32> to vector<8x128xf32>
    %222 = arith.mulf %220, %221 : vector<8x128xf32>
    %223 = arith.addf %216, %222 : vector<8x128xf32>
    %c4_99 = arith.constant 4 : index
    %c1_100 = arith.constant 1 : index
    %c0_101 = arith.constant 0 : index
    %c0_102 = arith.constant 0 : index
    %224 = vector.load %arg6[%c4_99, %c1_100, %c0_101, %c0_102] : memref<9x4x8x1xf32, #tpu.memory_space<vmem>>, vector<1x1x8x1xf32>
    %225 = vector.shape_cast %224 : vector<1x1x8x1xf32> to vector<8x1xf32>
    %226 = vector.extract_strided_slice %64 {offsets = [1, 0], sizes = [1, 128], strides = [1, 1]} : vector<4x128xf32> to vector<1x128xf32>
    %227 = vector.broadcast %225 : vector<8x1xf32> to vector<8x128xf32>
    %228 = vector.broadcast %226 : vector<1x128xf32> to vector<8x128xf32>
    %229 = arith.mulf %227, %228 : vector<8x128xf32>
    %230 = arith.addf %223, %229 : vector<8x128xf32>
    %c4_103 = arith.constant 4 : index
    %c2_104 = arith.constant 2 : index
    %c0_105 = arith.constant 0 : index
    %c0_106 = arith.constant 0 : index
    %231 = vector.load %arg6[%c4_103, %c2_104, %c0_105, %c0_106] : memref<9x4x8x1xf32, #tpu.memory_space<vmem>>, vector<1x1x8x1xf32>
    %232 = vector.shape_cast %231 : vector<1x1x8x1xf32> to vector<8x1xf32>
    %233 = vector.extract_strided_slice %64 {offsets = [2, 0], sizes = [1, 128], strides = [1, 1]} : vector<4x128xf32> to vector<1x128xf32>
    %234 = vector.broadcast %232 : vector<8x1xf32> to vector<8x128xf32>
    %235 = vector.broadcast %233 : vector<1x128xf32> to vector<8x128xf32>
    %236 = arith.mulf %234, %235 : vector<8x128xf32>
    %237 = arith.addf %230, %236 : vector<8x128xf32>
    %c4_107 = arith.constant 4 : index
    %c3_108 = arith.constant 3 : index
    %c0_109 = arith.constant 0 : index
    %c0_110 = arith.constant 0 : index
    %238 = vector.load %arg6[%c4_107, %c3_108, %c0_109, %c0_110] : memref<9x4x8x1xf32, #tpu.memory_space<vmem>>, vector<1x1x8x1xf32>
    %239 = vector.shape_cast %238 : vector<1x1x8x1xf32> to vector<8x1xf32>
    %240 = vector.extract_strided_slice %64 {offsets = [3, 0], sizes = [1, 128], strides = [1, 1]} : vector<4x128xf32> to vector<1x128xf32>
    %241 = vector.broadcast %239 : vector<8x1xf32> to vector<8x128xf32>
    %242 = vector.broadcast %240 : vector<1x128xf32> to vector<8x128xf32>
    %243 = arith.mulf %241, %242 : vector<8x128xf32>
    %244 = arith.addf %237, %243 : vector<8x128xf32>
    %c5 = arith.constant 5 : index
    %c0_111 = arith.constant 0 : index
    %c0_112 = arith.constant 0 : index
    %c0_113 = arith.constant 0 : index
    %245 = vector.load %arg6[%c5, %c0_111, %c0_112, %c0_113] : memref<9x4x8x1xf32, #tpu.memory_space<vmem>>, vector<1x1x8x1xf32>
    %246 = vector.shape_cast %245 : vector<1x1x8x1xf32> to vector<8x1xf32>
    %247 = vector.extract_strided_slice %70 {offsets = [0, 0], sizes = [1, 128], strides = [1, 1]} : vector<4x128xf32> to vector<1x128xf32>
    %248 = vector.broadcast %246 : vector<8x1xf32> to vector<8x128xf32>
    %249 = vector.broadcast %247 : vector<1x128xf32> to vector<8x128xf32>
    %250 = arith.mulf %248, %249 : vector<8x128xf32>
    %251 = arith.addf %244, %250 : vector<8x128xf32>
    %c5_114 = arith.constant 5 : index
    %c1_115 = arith.constant 1 : index
    %c0_116 = arith.constant 0 : index
    %c0_117 = arith.constant 0 : index
    %252 = vector.load %arg6[%c5_114, %c1_115, %c0_116, %c0_117] : memref<9x4x8x1xf32, #tpu.memory_space<vmem>>, vector<1x1x8x1xf32>
    %253 = vector.shape_cast %252 : vector<1x1x8x1xf32> to vector<8x1xf32>
    %254 = vector.extract_strided_slice %70 {offsets = [1, 0], sizes = [1, 128], strides = [1, 1]} : vector<4x128xf32> to vector<1x128xf32>
    %255 = vector.broadcast %253 : vector<8x1xf32> to vector<8x128xf32>
    %256 = vector.broadcast %254 : vector<1x128xf32> to vector<8x128xf32>
    %257 = arith.mulf %255, %256 : vector<8x128xf32>
    %258 = arith.addf %251, %257 : vector<8x128xf32>
    %c5_118 = arith.constant 5 : index
    %c2_119 = arith.constant 2 : index
    %c0_120 = arith.constant 0 : index
    %c0_121 = arith.constant 0 : index
    %259 = vector.load %arg6[%c5_118, %c2_119, %c0_120, %c0_121] : memref<9x4x8x1xf32, #tpu.memory_space<vmem>>, vector<1x1x8x1xf32>
    %260 = vector.shape_cast %259 : vector<1x1x8x1xf32> to vector<8x1xf32>
    %261 = vector.extract_strided_slice %70 {offsets = [2, 0], sizes = [1, 128], strides = [1, 1]} : vector<4x128xf32> to vector<1x128xf32>
    %262 = vector.broadcast %260 : vector<8x1xf32> to vector<8x128xf32>
    %263 = vector.broadcast %261 : vector<1x128xf32> to vector<8x128xf32>
    %264 = arith.mulf %262, %263 : vector<8x128xf32>
    %265 = arith.addf %258, %264 : vector<8x128xf32>
    %c5_122 = arith.constant 5 : index
    %c3_123 = arith.constant 3 : index
    %c0_124 = arith.constant 0 : index
    %c0_125 = arith.constant 0 : index
    %266 = vector.load %arg6[%c5_122, %c3_123, %c0_124, %c0_125] : memref<9x4x8x1xf32, #tpu.memory_space<vmem>>, vector<1x1x8x1xf32>
    %267 = vector.shape_cast %266 : vector<1x1x8x1xf32> to vector<8x1xf32>
    %268 = vector.extract_strided_slice %70 {offsets = [3, 0], sizes = [1, 128], strides = [1, 1]} : vector<4x128xf32> to vector<1x128xf32>
    %269 = vector.broadcast %267 : vector<8x1xf32> to vector<8x128xf32>
    %270 = vector.broadcast %268 : vector<1x128xf32> to vector<8x128xf32>
    %271 = arith.mulf %269, %270 : vector<8x128xf32>
    %272 = arith.addf %265, %271 : vector<8x128xf32>
    %c1_i32_126 = arith.constant 1 : i32
    %273 = tpu.dynamic_rotate %82 by %c1_i32_126 dim 1 : vector<4x128xf32>, i32 -> vector<4x128xf32>
    %cst_127 = arith.constant 0.000000e+00 : f32
    %274 = vector.shape_cast %12 : vector<1x128xi1> to vector<1x128xi1>
    %275 = vector.broadcast %274 : vector<1x128xi1> to vector<4x128xi1>
    %276 = vector.broadcast %cst_127 : f32 to vector<4x128xf32>
    %277 = arith.select %275, %273, %276 : vector<4x128xi1>, vector<4x128xf32>
    %c6 = arith.constant 6 : index
    %c0_128 = arith.constant 0 : index
    %c0_129 = arith.constant 0 : index
    %c0_130 = arith.constant 0 : index
    %278 = vector.load %arg6[%c6, %c0_128, %c0_129, %c0_130] : memref<9x4x8x1xf32, #tpu.memory_space<vmem>>, vector<1x1x8x1xf32>
    %279 = vector.shape_cast %278 : vector<1x1x8x1xf32> to vector<8x1xf32>
    %280 = vector.extract_strided_slice %277 {offsets = [0, 0], sizes = [1, 128], strides = [1, 1]} : vector<4x128xf32> to vector<1x128xf32>
    %281 = vector.broadcast %279 : vector<8x1xf32> to vector<8x128xf32>
    %282 = vector.broadcast %280 : vector<1x128xf32> to vector<8x128xf32>
    %283 = arith.mulf %281, %282 : vector<8x128xf32>
    %284 = arith.addf %272, %283 : vector<8x128xf32>
    %c6_131 = arith.constant 6 : index
    %c1_132 = arith.constant 1 : index
    %c0_133 = arith.constant 0 : index
    %c0_134 = arith.constant 0 : index
    %285 = vector.load %arg6[%c6_131, %c1_132, %c0_133, %c0_134] : memref<9x4x8x1xf32, #tpu.memory_space<vmem>>, vector<1x1x8x1xf32>
    %286 = vector.shape_cast %285 : vector<1x1x8x1xf32> to vector<8x1xf32>
    %287 = vector.extract_strided_slice %277 {offsets = [1, 0], sizes = [1, 128], strides = [1, 1]} : vector<4x128xf32> to vector<1x128xf32>
    %288 = vector.broadcast %286 : vector<8x1xf32> to vector<8x128xf32>
    %289 = vector.broadcast %287 : vector<1x128xf32> to vector<8x128xf32>
    %290 = arith.mulf %288, %289 : vector<8x128xf32>
    %291 = arith.addf %284, %290 : vector<8x128xf32>
    %c6_135 = arith.constant 6 : index
    %c2_136 = arith.constant 2 : index
    %c0_137 = arith.constant 0 : index
    %c0_138 = arith.constant 0 : index
    %292 = vector.load %arg6[%c6_135, %c2_136, %c0_137, %c0_138] : memref<9x4x8x1xf32, #tpu.memory_space<vmem>>, vector<1x1x8x1xf32>
    %293 = vector.shape_cast %292 : vector<1x1x8x1xf32> to vector<8x1xf32>
    %294 = vector.extract_strided_slice %277 {offsets = [2, 0], sizes = [1, 128], strides = [1, 1]} : vector<4x128xf32> to vector<1x128xf32>
    %295 = vector.broadcast %293 : vector<8x1xf32> to vector<8x128xf32>
    %296 = vector.broadcast %294 : vector<1x128xf32> to vector<8x128xf32>
    %297 = arith.mulf %295, %296 : vector<8x128xf32>
    %298 = arith.addf %291, %297 : vector<8x128xf32>
    %c6_139 = arith.constant 6 : index
    %c3_140 = arith.constant 3 : index
    %c0_141 = arith.constant 0 : index
    %c0_142 = arith.constant 0 : index
    %299 = vector.load %arg6[%c6_139, %c3_140, %c0_141, %c0_142] : memref<9x4x8x1xf32, #tpu.memory_space<vmem>>, vector<1x1x8x1xf32>
    %300 = vector.shape_cast %299 : vector<1x1x8x1xf32> to vector<8x1xf32>
    %301 = vector.extract_strided_slice %277 {offsets = [3, 0], sizes = [1, 128], strides = [1, 1]} : vector<4x128xf32> to vector<1x128xf32>
    %302 = vector.broadcast %300 : vector<8x1xf32> to vector<8x128xf32>
    %303 = vector.broadcast %301 : vector<1x128xf32> to vector<8x128xf32>
    %304 = arith.mulf %302, %303 : vector<8x128xf32>
    %305 = arith.addf %298, %304 : vector<8x128xf32>
    %c7 = arith.constant 7 : index
    %c0_143 = arith.constant 0 : index
    %c0_144 = arith.constant 0 : index
    %c0_145 = arith.constant 0 : index
    %306 = vector.load %arg6[%c7, %c0_143, %c0_144, %c0_145] : memref<9x4x8x1xf32, #tpu.memory_space<vmem>>, vector<1x1x8x1xf32>
    %307 = vector.shape_cast %306 : vector<1x1x8x1xf32> to vector<8x1xf32>
    %308 = vector.extract_strided_slice %76 {offsets = [0, 0], sizes = [1, 128], strides = [1, 1]} : vector<4x128xf32> to vector<1x128xf32>
    %309 = vector.broadcast %307 : vector<8x1xf32> to vector<8x128xf32>
    %310 = vector.broadcast %308 : vector<1x128xf32> to vector<8x128xf32>
    %311 = arith.mulf %309, %310 : vector<8x128xf32>
    %312 = arith.addf %305, %311 : vector<8x128xf32>
    %c7_146 = arith.constant 7 : index
    %c1_147 = arith.constant 1 : index
    %c0_148 = arith.constant 0 : index
    %c0_149 = arith.constant 0 : index
    %313 = vector.load %arg6[%c7_146, %c1_147, %c0_148, %c0_149] : memref<9x4x8x1xf32, #tpu.memory_space<vmem>>, vector<1x1x8x1xf32>
    %314 = vector.shape_cast %313 : vector<1x1x8x1xf32> to vector<8x1xf32>
    %315 = vector.extract_strided_slice %76 {offsets = [1, 0], sizes = [1, 128], strides = [1, 1]} : vector<4x128xf32> to vector<1x128xf32>
    %316 = vector.broadcast %314 : vector<8x1xf32> to vector<8x128xf32>
    %317 = vector.broadcast %315 : vector<1x128xf32> to vector<8x128xf32>
    %318 = arith.mulf %316, %317 : vector<8x128xf32>
    %319 = arith.addf %312, %318 : vector<8x128xf32>
    %c7_150 = arith.constant 7 : index
    %c2_151 = arith.constant 2 : index
    %c0_152 = arith.constant 0 : index
    %c0_153 = arith.constant 0 : index
    %320 = vector.load %arg6[%c7_150, %c2_151, %c0_152, %c0_153] : memref<9x4x8x1xf32, #tpu.memory_space<vmem>>, vector<1x1x8x1xf32>
    %321 = vector.shape_cast %320 : vector<1x1x8x1xf32> to vector<8x1xf32>
    %322 = vector.extract_strided_slice %76 {offsets = [2, 0], sizes = [1, 128], strides = [1, 1]} : vector<4x128xf32> to vector<1x128xf32>
    %323 = vector.broadcast %321 : vector<8x1xf32> to vector<8x128xf32>
    %324 = vector.broadcast %322 : vector<1x128xf32> to vector<8x128xf32>
    %325 = arith.mulf %323, %324 : vector<8x128xf32>
    %326 = arith.addf %319, %325 : vector<8x128xf32>
    %c7_154 = arith.constant 7 : index
    %c3_155 = arith.constant 3 : index
    %c0_156 = arith.constant 0 : index
    %c0_157 = arith.constant 0 : index
    %327 = vector.load %arg6[%c7_154, %c3_155, %c0_156, %c0_157] : memref<9x4x8x1xf32, #tpu.memory_space<vmem>>, vector<1x1x8x1xf32>
    %328 = vector.shape_cast %327 : vector<1x1x8x1xf32> to vector<8x1xf32>
    %329 = vector.extract_strided_slice %76 {offsets = [3, 0], sizes = [1, 128], strides = [1, 1]} : vector<4x128xf32> to vector<1x128xf32>
    %330 = vector.broadcast %328 : vector<8x1xf32> to vector<8x128xf32>
    %331 = vector.broadcast %329 : vector<1x128xf32> to vector<8x128xf32>
    %332 = arith.mulf %330, %331 : vector<8x128xf32>
    %333 = arith.addf %326, %332 : vector<8x128xf32>
    %c8 = arith.constant 8 : index
    %c0_158 = arith.constant 0 : index
    %c0_159 = arith.constant 0 : index
    %c0_160 = arith.constant 0 : index
    %334 = vector.load %arg6[%c8, %c0_158, %c0_159, %c0_160] : memref<9x4x8x1xf32, #tpu.memory_space<vmem>>, vector<1x1x8x1xf32>
    %335 = vector.shape_cast %334 : vector<1x1x8x1xf32> to vector<8x1xf32>
    %336 = vector.extract_strided_slice %82 {offsets = [0, 0], sizes = [1, 128], strides = [1, 1]} : vector<4x128xf32> to vector<1x128xf32>
    %337 = vector.broadcast %335 : vector<8x1xf32> to vector<8x128xf32>
    %338 = vector.broadcast %336 : vector<1x128xf32> to vector<8x128xf32>
    %339 = arith.mulf %337, %338 : vector<8x128xf32>
    %340 = arith.addf %333, %339 : vector<8x128xf32>
    %c8_161 = arith.constant 8 : index
    %c1_162 = arith.constant 1 : index
    %c0_163 = arith.constant 0 : index
    %c0_164 = arith.constant 0 : index
    %341 = vector.load %arg6[%c8_161, %c1_162, %c0_163, %c0_164] : memref<9x4x8x1xf32, #tpu.memory_space<vmem>>, vector<1x1x8x1xf32>
    %342 = vector.shape_cast %341 : vector<1x1x8x1xf32> to vector<8x1xf32>
    %343 = vector.extract_strided_slice %82 {offsets = [1, 0], sizes = [1, 128], strides = [1, 1]} : vector<4x128xf32> to vector<1x128xf32>
    %344 = vector.broadcast %342 : vector<8x1xf32> to vector<8x128xf32>
    %345 = vector.broadcast %343 : vector<1x128xf32> to vector<8x128xf32>
    %346 = arith.mulf %344, %345 : vector<8x128xf32>
    %347 = arith.addf %340, %346 : vector<8x128xf32>
    %c8_165 = arith.constant 8 : index
    %c2_166 = arith.constant 2 : index
    %c0_167 = arith.constant 0 : index
    %c0_168 = arith.constant 0 : index
    %348 = vector.load %arg6[%c8_165, %c2_166, %c0_167, %c0_168] : memref<9x4x8x1xf32, #tpu.memory_space<vmem>>, vector<1x1x8x1xf32>
    %349 = vector.shape_cast %348 : vector<1x1x8x1xf32> to vector<8x1xf32>
    %350 = vector.extract_strided_slice %82 {offsets = [2, 0], sizes = [1, 128], strides = [1, 1]} : vector<4x128xf32> to vector<1x128xf32>
    %351 = vector.broadcast %349 : vector<8x1xf32> to vector<8x128xf32>
    %352 = vector.broadcast %350 : vector<1x128xf32> to vector<8x128xf32>
    %353 = arith.mulf %351, %352 : vector<8x128xf32>
    %354 = arith.addf %347, %353 : vector<8x128xf32>
    %c8_169 = arith.constant 8 : index
    %c3_170 = arith.constant 3 : index
    %c0_171 = arith.constant 0 : index
    %c0_172 = arith.constant 0 : index
    %355 = vector.load %arg6[%c8_169, %c3_170, %c0_171, %c0_172] : memref<9x4x8x1xf32, #tpu.memory_space<vmem>>, vector<1x1x8x1xf32>
    %356 = vector.shape_cast %355 : vector<1x1x8x1xf32> to vector<8x1xf32>
    %357 = vector.extract_strided_slice %82 {offsets = [3, 0], sizes = [1, 128], strides = [1, 1]} : vector<4x128xf32> to vector<1x128xf32>
    %358 = vector.broadcast %356 : vector<8x1xf32> to vector<8x128xf32>
    %359 = vector.broadcast %357 : vector<1x128xf32> to vector<8x128xf32>
    %360 = arith.mulf %358, %359 : vector<8x128xf32>
    %361 = arith.addf %354, %360 : vector<8x128xf32>
    %c0_173 = arith.constant 0 : index
    %c0_174 = arith.constant 0 : index
    %362 = vector.load %arg7[%c0_173, %c0_174] : memref<8x1xf32, #tpu.memory_space<vmem>>, vector<8x1xf32>
    %c0_175 = arith.constant 0 : index
    %c0_176 = arith.constant 0 : index
    %363 = vector.load %arg8[%c0_175, %c0_176] : memref<8x1xf32, #tpu.memory_space<vmem>>, vector<8x1xf32>
    %cst_177 = arith.constant dense<0.000000e+00> : vector<8xf32>
    %364 = vector.multi_reduction <add>, %361, %cst_177 [1] : vector<8x128xf32> to vector<8xf32>
    %365 = vector.shape_cast %364 : vector<8xf32> to vector<8x1xf32>
    %366 = arith.mulf %361, %361 : vector<8x128xf32>
    %cst_178 = arith.constant dense<0.000000e+00> : vector<8xf32>
    %367 = vector.multi_reduction <add>, %366, %cst_178 [1] : vector<8x128xf32> to vector<8xf32>
    %368 = vector.shape_cast %367 : vector<8xf32> to vector<8x1xf32>
    %cst_179 = arith.constant 7.812500e-03 : f32
    %369 = vector.broadcast %cst_179 : f32 to vector<8x1xf32>
    %370 = arith.mulf %365, %369 : vector<8x1xf32>
    %cst_180 = arith.constant 7.812500e-03 : f32
    %371 = vector.broadcast %cst_180 : f32 to vector<8x1xf32>
    %372 = arith.mulf %368, %371 : vector<8x1xf32>
    %373 = arith.mulf %370, %370 : vector<8x1xf32>
    %374 = arith.subf %372, %373 : vector<8x1xf32>
    %cst_181 = arith.constant 9.99999974E-6 : f32
    %375 = vector.broadcast %cst_181 : f32 to vector<8x1xf32>
    %376 = arith.addf %374, %375 : vector<8x1xf32>
    %377 = math.rsqrt %376 : vector<8x1xf32>
    %378 = arith.mulf %362, %377 : vector<8x1xf32>
    %379 = arith.mulf %370, %378 : vector<8x1xf32>
    %380 = arith.subf %363, %379 : vector<8x1xf32>
    %381 = vector.broadcast %378 : vector<8x1xf32> to vector<8x128xf32>
    %382 = arith.mulf %361, %381 : vector<8x128xf32>
    %383 = vector.broadcast %380 : vector<8x1xf32> to vector<8x128xf32>
    %384 = arith.addf %382, %383 : vector<8x128xf32>
    %cst_182 = arith.constant 0.000000e+00 : f32
    %385 = vector.broadcast %cst_182 : f32 to vector<8x128xf32>
    %386 = arith.maximumf %384, %385 : vector<8x128xf32>
    %cst_183 = arith.constant 0.000000e+00 : f32
    %387 = vector.broadcast %cst_183 : f32 to vector<8x128xf32>
    %c9_i32_184 = arith.constant 9 : i32
    %388 = tpu.dynamic_rotate %386 by %c9_i32_184 dim 1 : vector<8x128xf32>, i32 -> vector<8x128xf32>
    %389 = arith.andi %8, %12 : vector<1x128xi1>
    %cst_185 = arith.constant 0.000000e+00 : f32
    %390 = vector.shape_cast %389 : vector<1x128xi1> to vector<1x128xi1>
    %391 = vector.broadcast %390 : vector<1x128xi1> to vector<8x128xi1>
    %392 = vector.broadcast %cst_185 : f32 to vector<8x128xf32>
    %393 = arith.select %391, %388, %392 : vector<8x128xi1>, vector<8x128xf32>
    %c0_186 = arith.constant 0 : index
    %c0_187 = arith.constant 0 : index
    %c0_188 = arith.constant 0 : index
    %c0_189 = arith.constant 0 : index
    %394 = vector.load %arg9[%c0_186, %c0_187, %c0_188, %c0_189] : memref<9x8x8x1xf32, #tpu.memory_space<vmem>>, vector<1x1x8x1xf32>
    %395 = vector.shape_cast %394 : vector<1x1x8x1xf32> to vector<8x1xf32>
    %396 = vector.extract_strided_slice %393 {offsets = [0, 0], sizes = [1, 128], strides = [1, 1]} : vector<8x128xf32> to vector<1x128xf32>
    %397 = vector.broadcast %395 : vector<8x1xf32> to vector<8x128xf32>
    %398 = vector.broadcast %396 : vector<1x128xf32> to vector<8x128xf32>
    %399 = arith.mulf %397, %398 : vector<8x128xf32>
    %400 = arith.addf %387, %399 : vector<8x128xf32>
    %c0_190 = arith.constant 0 : index
    %c1_191 = arith.constant 1 : index
    %c0_192 = arith.constant 0 : index
    %c0_193 = arith.constant 0 : index
    %401 = vector.load %arg9[%c0_190, %c1_191, %c0_192, %c0_193] : memref<9x8x8x1xf32, #tpu.memory_space<vmem>>, vector<1x1x8x1xf32>
    %402 = vector.shape_cast %401 : vector<1x1x8x1xf32> to vector<8x1xf32>
    %403 = vector.extract_strided_slice %393 {offsets = [1, 0], sizes = [1, 128], strides = [1, 1]} : vector<8x128xf32> to vector<1x128xf32>
    %404 = vector.broadcast %402 : vector<8x1xf32> to vector<8x128xf32>
    %405 = vector.broadcast %403 : vector<1x128xf32> to vector<8x128xf32>
    %406 = arith.mulf %404, %405 : vector<8x128xf32>
    %407 = arith.addf %400, %406 : vector<8x128xf32>
    %c0_194 = arith.constant 0 : index
    %c2_195 = arith.constant 2 : index
    %c0_196 = arith.constant 0 : index
    %c0_197 = arith.constant 0 : index
    %408 = vector.load %arg9[%c0_194, %c2_195, %c0_196, %c0_197] : memref<9x8x8x1xf32, #tpu.memory_space<vmem>>, vector<1x1x8x1xf32>
    %409 = vector.shape_cast %408 : vector<1x1x8x1xf32> to vector<8x1xf32>
    %410 = vector.extract_strided_slice %393 {offsets = [2, 0], sizes = [1, 128], strides = [1, 1]} : vector<8x128xf32> to vector<1x128xf32>
    %411 = vector.broadcast %409 : vector<8x1xf32> to vector<8x128xf32>
    %412 = vector.broadcast %410 : vector<1x128xf32> to vector<8x128xf32>
    %413 = arith.mulf %411, %412 : vector<8x128xf32>
    %414 = arith.addf %407, %413 : vector<8x128xf32>
    %c0_198 = arith.constant 0 : index
    %c3_199 = arith.constant 3 : index
    %c0_200 = arith.constant 0 : index
    %c0_201 = arith.constant 0 : index
    %415 = vector.load %arg9[%c0_198, %c3_199, %c0_200, %c0_201] : memref<9x8x8x1xf32, #tpu.memory_space<vmem>>, vector<1x1x8x1xf32>
    %416 = vector.shape_cast %415 : vector<1x1x8x1xf32> to vector<8x1xf32>
    %417 = vector.extract_strided_slice %393 {offsets = [3, 0], sizes = [1, 128], strides = [1, 1]} : vector<8x128xf32> to vector<1x128xf32>
    %418 = vector.broadcast %416 : vector<8x1xf32> to vector<8x128xf32>
    %419 = vector.broadcast %417 : vector<1x128xf32> to vector<8x128xf32>
    %420 = arith.mulf %418, %419 : vector<8x128xf32>
    %421 = arith.addf %414, %420 : vector<8x128xf32>
    %c0_202 = arith.constant 0 : index
    %c4_203 = arith.constant 4 : index
    %c0_204 = arith.constant 0 : index
    %c0_205 = arith.constant 0 : index
    %422 = vector.load %arg9[%c0_202, %c4_203, %c0_204, %c0_205] : memref<9x8x8x1xf32, #tpu.memory_space<vmem>>, vector<1x1x8x1xf32>
    %423 = vector.shape_cast %422 : vector<1x1x8x1xf32> to vector<8x1xf32>
    %424 = vector.extract_strided_slice %393 {offsets = [4, 0], sizes = [1, 128], strides = [1, 1]} : vector<8x128xf32> to vector<1x128xf32>
    %425 = vector.broadcast %423 : vector<8x1xf32> to vector<8x128xf32>
    %426 = vector.broadcast %424 : vector<1x128xf32> to vector<8x128xf32>
    %427 = arith.mulf %425, %426 : vector<8x128xf32>
    %428 = arith.addf %421, %427 : vector<8x128xf32>
    %c0_206 = arith.constant 0 : index
    %c5_207 = arith.constant 5 : index
    %c0_208 = arith.constant 0 : index
    %c0_209 = arith.constant 0 : index
    %429 = vector.load %arg9[%c0_206, %c5_207, %c0_208, %c0_209] : memref<9x8x8x1xf32, #tpu.memory_space<vmem>>, vector<1x1x8x1xf32>
    %430 = vector.shape_cast %429 : vector<1x1x8x1xf32> to vector<8x1xf32>
    %431 = vector.extract_strided_slice %393 {offsets = [5, 0], sizes = [1, 128], strides = [1, 1]} : vector<8x128xf32> to vector<1x128xf32>
    %432 = vector.broadcast %430 : vector<8x1xf32> to vector<8x128xf32>
    %433 = vector.broadcast %431 : vector<1x128xf32> to vector<8x128xf32>
    %434 = arith.mulf %432, %433 : vector<8x128xf32>
    %435 = arith.addf %428, %434 : vector<8x128xf32>
    %c0_210 = arith.constant 0 : index
    %c6_211 = arith.constant 6 : index
    %c0_212 = arith.constant 0 : index
    %c0_213 = arith.constant 0 : index
    %436 = vector.load %arg9[%c0_210, %c6_211, %c0_212, %c0_213] : memref<9x8x8x1xf32, #tpu.memory_space<vmem>>, vector<1x1x8x1xf32>
    %437 = vector.shape_cast %436 : vector<1x1x8x1xf32> to vector<8x1xf32>
    %438 = vector.extract_strided_slice %393 {offsets = [6, 0], sizes = [1, 128], strides = [1, 1]} : vector<8x128xf32> to vector<1x128xf32>
    %439 = vector.broadcast %437 : vector<8x1xf32> to vector<8x128xf32>
    %440 = vector.broadcast %438 : vector<1x128xf32> to vector<8x128xf32>
    %441 = arith.mulf %439, %440 : vector<8x128xf32>
    %442 = arith.addf %435, %441 : vector<8x128xf32>
    %c0_214 = arith.constant 0 : index
    %c7_215 = arith.constant 7 : index
    %c0_216 = arith.constant 0 : index
    %c0_217 = arith.constant 0 : index
    %443 = vector.load %arg9[%c0_214, %c7_215, %c0_216, %c0_217] : memref<9x8x8x1xf32, #tpu.memory_space<vmem>>, vector<1x1x8x1xf32>
    %444 = vector.shape_cast %443 : vector<1x1x8x1xf32> to vector<8x1xf32>
    %445 = vector.extract_strided_slice %393 {offsets = [7, 0], sizes = [1, 128], strides = [1, 1]} : vector<8x128xf32> to vector<1x128xf32>
    %446 = vector.broadcast %444 : vector<8x1xf32> to vector<8x128xf32>
    %447 = vector.broadcast %445 : vector<1x128xf32> to vector<8x128xf32>
    %448 = arith.mulf %446, %447 : vector<8x128xf32>
    %449 = arith.addf %442, %448 : vector<8x128xf32>
    %c8_i32_218 = arith.constant 8 : i32
    %450 = tpu.dynamic_rotate %386 by %c8_i32_218 dim 1 : vector<8x128xf32>, i32 -> vector<8x128xf32>
    %cst_219 = arith.constant 0.000000e+00 : f32
    %451 = vector.shape_cast %8 : vector<1x128xi1> to vector<1x128xi1>
    %452 = vector.broadcast %451 : vector<1x128xi1> to vector<8x128xi1>
    %453 = vector.broadcast %cst_219 : f32 to vector<8x128xf32>
    %454 = arith.select %452, %450, %453 : vector<8x128xi1>, vector<8x128xf32>
    %c1_220 = arith.constant 1 : index
    %c0_221 = arith.constant 0 : index
    %c0_222 = arith.constant 0 : index
    %c0_223 = arith.constant 0 : index
    %455 = vector.load %arg9[%c1_220, %c0_221, %c0_222, %c0_223] : memref<9x8x8x1xf32, #tpu.memory_space<vmem>>, vector<1x1x8x1xf32>
    %456 = vector.shape_cast %455 : vector<1x1x8x1xf32> to vector<8x1xf32>
    %457 = vector.extract_strided_slice %454 {offsets = [0, 0], sizes = [1, 128], strides = [1, 1]} : vector<8x128xf32> to vector<1x128xf32>
    %458 = vector.broadcast %456 : vector<8x1xf32> to vector<8x128xf32>
    %459 = vector.broadcast %457 : vector<1x128xf32> to vector<8x128xf32>
    %460 = arith.mulf %458, %459 : vector<8x128xf32>
    %461 = arith.addf %449, %460 : vector<8x128xf32>
    %c1_224 = arith.constant 1 : index
    %c1_225 = arith.constant 1 : index
    %c0_226 = arith.constant 0 : index
    %c0_227 = arith.constant 0 : index
    %462 = vector.load %arg9[%c1_224, %c1_225, %c0_226, %c0_227] : memref<9x8x8x1xf32, #tpu.memory_space<vmem>>, vector<1x1x8x1xf32>
    %463 = vector.shape_cast %462 : vector<1x1x8x1xf32> to vector<8x1xf32>
    %464 = vector.extract_strided_slice %454 {offsets = [1, 0], sizes = [1, 128], strides = [1, 1]} : vector<8x128xf32> to vector<1x128xf32>
    %465 = vector.broadcast %463 : vector<8x1xf32> to vector<8x128xf32>
    %466 = vector.broadcast %464 : vector<1x128xf32> to vector<8x128xf32>
    %467 = arith.mulf %465, %466 : vector<8x128xf32>
    %468 = arith.addf %461, %467 : vector<8x128xf32>
    %c1_228 = arith.constant 1 : index
    %c2_229 = arith.constant 2 : index
    %c0_230 = arith.constant 0 : index
    %c0_231 = arith.constant 0 : index
    %469 = vector.load %arg9[%c1_228, %c2_229, %c0_230, %c0_231] : memref<9x8x8x1xf32, #tpu.memory_space<vmem>>, vector<1x1x8x1xf32>
    %470 = vector.shape_cast %469 : vector<1x1x8x1xf32> to vector<8x1xf32>
    %471 = vector.extract_strided_slice %454 {offsets = [2, 0], sizes = [1, 128], strides = [1, 1]} : vector<8x128xf32> to vector<1x128xf32>
    %472 = vector.broadcast %470 : vector<8x1xf32> to vector<8x128xf32>
    %473 = vector.broadcast %471 : vector<1x128xf32> to vector<8x128xf32>
    %474 = arith.mulf %472, %473 : vector<8x128xf32>
    %475 = arith.addf %468, %474 : vector<8x128xf32>
    %c1_232 = arith.constant 1 : index
    %c3_233 = arith.constant 3 : index
    %c0_234 = arith.constant 0 : index
    %c0_235 = arith.constant 0 : index
    %476 = vector.load %arg9[%c1_232, %c3_233, %c0_234, %c0_235] : memref<9x8x8x1xf32, #tpu.memory_space<vmem>>, vector<1x1x8x1xf32>
    %477 = vector.shape_cast %476 : vector<1x1x8x1xf32> to vector<8x1xf32>
    %478 = vector.extract_strided_slice %454 {offsets = [3, 0], sizes = [1, 128], strides = [1, 1]} : vector<8x128xf32> to vector<1x128xf32>
    %479 = vector.broadcast %477 : vector<8x1xf32> to vector<8x128xf32>
    %480 = vector.broadcast %478 : vector<1x128xf32> to vector<8x128xf32>
    %481 = arith.mulf %479, %480 : vector<8x128xf32>
    %482 = arith.addf %475, %481 : vector<8x128xf32>
    %c1_236 = arith.constant 1 : index
    %c4_237 = arith.constant 4 : index
    %c0_238 = arith.constant 0 : index
    %c0_239 = arith.constant 0 : index
    %483 = vector.load %arg9[%c1_236, %c4_237, %c0_238, %c0_239] : memref<9x8x8x1xf32, #tpu.memory_space<vmem>>, vector<1x1x8x1xf32>
    %484 = vector.shape_cast %483 : vector<1x1x8x1xf32> to vector<8x1xf32>
    %485 = vector.extract_strided_slice %454 {offsets = [4, 0], sizes = [1, 128], strides = [1, 1]} : vector<8x128xf32> to vector<1x128xf32>
    %486 = vector.broadcast %484 : vector<8x1xf32> to vector<8x128xf32>
    %487 = vector.broadcast %485 : vector<1x128xf32> to vector<8x128xf32>
    %488 = arith.mulf %486, %487 : vector<8x128xf32>
    %489 = arith.addf %482, %488 : vector<8x128xf32>
    %c1_240 = arith.constant 1 : index
    %c5_241 = arith.constant 5 : index
    %c0_242 = arith.constant 0 : index
    %c0_243 = arith.constant 0 : index
    %490 = vector.load %arg9[%c1_240, %c5_241, %c0_242, %c0_243] : memref<9x8x8x1xf32, #tpu.memory_space<vmem>>, vector<1x1x8x1xf32>
    %491 = vector.shape_cast %490 : vector<1x1x8x1xf32> to vector<8x1xf32>
    %492 = vector.extract_strided_slice %454 {offsets = [5, 0], sizes = [1, 128], strides = [1, 1]} : vector<8x128xf32> to vector<1x128xf32>
    %493 = vector.broadcast %491 : vector<8x1xf32> to vector<8x128xf32>
    %494 = vector.broadcast %492 : vector<1x128xf32> to vector<8x128xf32>
    %495 = arith.mulf %493, %494 : vector<8x128xf32>
    %496 = arith.addf %489, %495 : vector<8x128xf32>
    %c1_244 = arith.constant 1 : index
    %c6_245 = arith.constant 6 : index
    %c0_246 = arith.constant 0 : index
    %c0_247 = arith.constant 0 : index
    %497 = vector.load %arg9[%c1_244, %c6_245, %c0_246, %c0_247] : memref<9x8x8x1xf32, #tpu.memory_space<vmem>>, vector<1x1x8x1xf32>
    %498 = vector.shape_cast %497 : vector<1x1x8x1xf32> to vector<8x1xf32>
    %499 = vector.extract_strided_slice %454 {offsets = [6, 0], sizes = [1, 128], strides = [1, 1]} : vector<8x128xf32> to vector<1x128xf32>
    %500 = vector.broadcast %498 : vector<8x1xf32> to vector<8x128xf32>
    %501 = vector.broadcast %499 : vector<1x128xf32> to vector<8x128xf32>
    %502 = arith.mulf %500, %501 : vector<8x128xf32>
    %503 = arith.addf %496, %502 : vector<8x128xf32>
    %c1_248 = arith.constant 1 : index
    %c7_249 = arith.constant 7 : index
    %c0_250 = arith.constant 0 : index
    %c0_251 = arith.constant 0 : index
    %504 = vector.load %arg9[%c1_248, %c7_249, %c0_250, %c0_251] : memref<9x8x8x1xf32, #tpu.memory_space<vmem>>, vector<1x1x8x1xf32>
    %505 = vector.shape_cast %504 : vector<1x1x8x1xf32> to vector<8x1xf32>
    %506 = vector.extract_strided_slice %454 {offsets = [7, 0], sizes = [1, 128], strides = [1, 1]} : vector<8x128xf32> to vector<1x128xf32>
    %507 = vector.broadcast %505 : vector<8x1xf32> to vector<8x128xf32>
    %508 = vector.broadcast %506 : vector<1x128xf32> to vector<8x128xf32>
    %509 = arith.mulf %507, %508 : vector<8x128xf32>
    %510 = arith.addf %503, %509 : vector<8x128xf32>
    %c7_i32_252 = arith.constant 7 : i32
    %511 = tpu.dynamic_rotate %386 by %c7_i32_252 dim 1 : vector<8x128xf32>, i32 -> vector<8x128xf32>
    %512 = arith.andi %8, %14 : vector<1x128xi1>
    %cst_253 = arith.constant 0.000000e+00 : f32
    %513 = vector.shape_cast %512 : vector<1x128xi1> to vector<1x128xi1>
    %514 = vector.broadcast %513 : vector<1x128xi1> to vector<8x128xi1>
    %515 = vector.broadcast %cst_253 : f32 to vector<8x128xf32>
    %516 = arith.select %514, %511, %515 : vector<8x128xi1>, vector<8x128xf32>
    %c2_254 = arith.constant 2 : index
    %c0_255 = arith.constant 0 : index
    %c0_256 = arith.constant 0 : index
    %c0_257 = arith.constant 0 : index
    %517 = vector.load %arg9[%c2_254, %c0_255, %c0_256, %c0_257] : memref<9x8x8x1xf32, #tpu.memory_space<vmem>>, vector<1x1x8x1xf32>
    %518 = vector.shape_cast %517 : vector<1x1x8x1xf32> to vector<8x1xf32>
    %519 = vector.extract_strided_slice %516 {offsets = [0, 0], sizes = [1, 128], strides = [1, 1]} : vector<8x128xf32> to vector<1x128xf32>
    %520 = vector.broadcast %518 : vector<8x1xf32> to vector<8x128xf32>
    %521 = vector.broadcast %519 : vector<1x128xf32> to vector<8x128xf32>
    %522 = arith.mulf %520, %521 : vector<8x128xf32>
    %523 = arith.addf %510, %522 : vector<8x128xf32>
    %c2_258 = arith.constant 2 : index
    %c1_259 = arith.constant 1 : index
    %c0_260 = arith.constant 0 : index
    %c0_261 = arith.constant 0 : index
    %524 = vector.load %arg9[%c2_258, %c1_259, %c0_260, %c0_261] : memref<9x8x8x1xf32, #tpu.memory_space<vmem>>, vector<1x1x8x1xf32>
    %525 = vector.shape_cast %524 : vector<1x1x8x1xf32> to vector<8x1xf32>
    %526 = vector.extract_strided_slice %516 {offsets = [1, 0], sizes = [1, 128], strides = [1, 1]} : vector<8x128xf32> to vector<1x128xf32>
    %527 = vector.broadcast %525 : vector<8x1xf32> to vector<8x128xf32>
    %528 = vector.broadcast %526 : vector<1x128xf32> to vector<8x128xf32>
    %529 = arith.mulf %527, %528 : vector<8x128xf32>
    %530 = arith.addf %523, %529 : vector<8x128xf32>
    %c2_262 = arith.constant 2 : index
    %c2_263 = arith.constant 2 : index
    %c0_264 = arith.constant 0 : index
    %c0_265 = arith.constant 0 : index
    %531 = vector.load %arg9[%c2_262, %c2_263, %c0_264, %c0_265] : memref<9x8x8x1xf32, #tpu.memory_space<vmem>>, vector<1x1x8x1xf32>
    %532 = vector.shape_cast %531 : vector<1x1x8x1xf32> to vector<8x1xf32>
    %533 = vector.extract_strided_slice %516 {offsets = [2, 0], sizes = [1, 128], strides = [1, 1]} : vector<8x128xf32> to vector<1x128xf32>
    %534 = vector.broadcast %532 : vector<8x1xf32> to vector<8x128xf32>
    %535 = vector.broadcast %533 : vector<1x128xf32> to vector<8x128xf32>
    %536 = arith.mulf %534, %535 : vector<8x128xf32>
    %537 = arith.addf %530, %536 : vector<8x128xf32>
    %c2_266 = arith.constant 2 : index
    %c3_267 = arith.constant 3 : index
    %c0_268 = arith.constant 0 : index
    %c0_269 = arith.constant 0 : index
    %538 = vector.load %arg9[%c2_266, %c3_267, %c0_268, %c0_269] : memref<9x8x8x1xf32, #tpu.memory_space<vmem>>, vector<1x1x8x1xf32>
    %539 = vector.shape_cast %538 : vector<1x1x8x1xf32> to vector<8x1xf32>
    %540 = vector.extract_strided_slice %516 {offsets = [3, 0], sizes = [1, 128], strides = [1, 1]} : vector<8x128xf32> to vector<1x128xf32>
    %541 = vector.broadcast %539 : vector<8x1xf32> to vector<8x128xf32>
    %542 = vector.broadcast %540 : vector<1x128xf32> to vector<8x128xf32>
    %543 = arith.mulf %541, %542 : vector<8x128xf32>
    %544 = arith.addf %537, %543 : vector<8x128xf32>
    %c2_270 = arith.constant 2 : index
    %c4_271 = arith.constant 4 : index
    %c0_272 = arith.constant 0 : index
    %c0_273 = arith.constant 0 : index
    %545 = vector.load %arg9[%c2_270, %c4_271, %c0_272, %c0_273] : memref<9x8x8x1xf32, #tpu.memory_space<vmem>>, vector<1x1x8x1xf32>
    %546 = vector.shape_cast %545 : vector<1x1x8x1xf32> to vector<8x1xf32>
    %547 = vector.extract_strided_slice %516 {offsets = [4, 0], sizes = [1, 128], strides = [1, 1]} : vector<8x128xf32> to vector<1x128xf32>
    %548 = vector.broadcast %546 : vector<8x1xf32> to vector<8x128xf32>
    %549 = vector.broadcast %547 : vector<1x128xf32> to vector<8x128xf32>
    %550 = arith.mulf %548, %549 : vector<8x128xf32>
    %551 = arith.addf %544, %550 : vector<8x128xf32>
    %c2_274 = arith.constant 2 : index
    %c5_275 = arith.constant 5 : index
    %c0_276 = arith.constant 0 : index
    %c0_277 = arith.constant 0 : index
    %552 = vector.load %arg9[%c2_274, %c5_275, %c0_276, %c0_277] : memref<9x8x8x1xf32, #tpu.memory_space<vmem>>, vector<1x1x8x1xf32>
    %553 = vector.shape_cast %552 : vector<1x1x8x1xf32> to vector<8x1xf32>
    %554 = vector.extract_strided_slice %516 {offsets = [5, 0], sizes = [1, 128], strides = [1, 1]} : vector<8x128xf32> to vector<1x128xf32>
    %555 = vector.broadcast %553 : vector<8x1xf32> to vector<8x128xf32>
    %556 = vector.broadcast %554 : vector<1x128xf32> to vector<8x128xf32>
    %557 = arith.mulf %555, %556 : vector<8x128xf32>
    %558 = arith.addf %551, %557 : vector<8x128xf32>
    %c2_278 = arith.constant 2 : index
    %c6_279 = arith.constant 6 : index
    %c0_280 = arith.constant 0 : index
    %c0_281 = arith.constant 0 : index
    %559 = vector.load %arg9[%c2_278, %c6_279, %c0_280, %c0_281] : memref<9x8x8x1xf32, #tpu.memory_space<vmem>>, vector<1x1x8x1xf32>
    %560 = vector.shape_cast %559 : vector<1x1x8x1xf32> to vector<8x1xf32>
    %561 = vector.extract_strided_slice %516 {offsets = [6, 0], sizes = [1, 128], strides = [1, 1]} : vector<8x128xf32> to vector<1x128xf32>
    %562 = vector.broadcast %560 : vector<8x1xf32> to vector<8x128xf32>
    %563 = vector.broadcast %561 : vector<1x128xf32> to vector<8x128xf32>
    %564 = arith.mulf %562, %563 : vector<8x128xf32>
    %565 = arith.addf %558, %564 : vector<8x128xf32>
    %c2_282 = arith.constant 2 : index
    %c7_283 = arith.constant 7 : index
    %c0_284 = arith.constant 0 : index
    %c0_285 = arith.constant 0 : index
    %566 = vector.load %arg9[%c2_282, %c7_283, %c0_284, %c0_285] : memref<9x8x8x1xf32, #tpu.memory_space<vmem>>, vector<1x1x8x1xf32>
    %567 = vector.shape_cast %566 : vector<1x1x8x1xf32> to vector<8x1xf32>
    %568 = vector.extract_strided_slice %516 {offsets = [7, 0], sizes = [1, 128], strides = [1, 1]} : vector<8x128xf32> to vector<1x128xf32>
    %569 = vector.broadcast %567 : vector<8x1xf32> to vector<8x128xf32>
    %570 = vector.broadcast %568 : vector<1x128xf32> to vector<8x128xf32>
    %571 = arith.mulf %569, %570 : vector<8x128xf32>
    %572 = arith.addf %565, %571 : vector<8x128xf32>
    %c1_i32_286 = arith.constant 1 : i32
    %573 = tpu.dynamic_rotate %386 by %c1_i32_286 dim 1 : vector<8x128xf32>, i32 -> vector<8x128xf32>
    %cst_287 = arith.constant 0.000000e+00 : f32
    %574 = vector.shape_cast %12 : vector<1x128xi1> to vector<1x128xi1>
    %575 = vector.broadcast %574 : vector<1x128xi1> to vector<8x128xi1>
    %576 = vector.broadcast %cst_287 : f32 to vector<8x128xf32>
    %577 = arith.select %575, %573, %576 : vector<8x128xi1>, vector<8x128xf32>
    %c3_288 = arith.constant 3 : index
    %c0_289 = arith.constant 0 : index
    %c0_290 = arith.constant 0 : index
    %c0_291 = arith.constant 0 : index
    %578 = vector.load %arg9[%c3_288, %c0_289, %c0_290, %c0_291] : memref<9x8x8x1xf32, #tpu.memory_space<vmem>>, vector<1x1x8x1xf32>
    %579 = vector.shape_cast %578 : vector<1x1x8x1xf32> to vector<8x1xf32>
    %580 = vector.extract_strided_slice %577 {offsets = [0, 0], sizes = [1, 128], strides = [1, 1]} : vector<8x128xf32> to vector<1x128xf32>
    %581 = vector.broadcast %579 : vector<8x1xf32> to vector<8x128xf32>
    %582 = vector.broadcast %580 : vector<1x128xf32> to vector<8x128xf32>
    %583 = arith.mulf %581, %582 : vector<8x128xf32>
    %584 = arith.addf %572, %583 : vector<8x128xf32>
    %c3_292 = arith.constant 3 : index
    %c1_293 = arith.constant 1 : index
    %c0_294 = arith.constant 0 : index
    %c0_295 = arith.constant 0 : index
    %585 = vector.load %arg9[%c3_292, %c1_293, %c0_294, %c0_295] : memref<9x8x8x1xf32, #tpu.memory_space<vmem>>, vector<1x1x8x1xf32>
    %586 = vector.shape_cast %585 : vector<1x1x8x1xf32> to vector<8x1xf32>
    %587 = vector.extract_strided_slice %577 {offsets = [1, 0], sizes = [1, 128], strides = [1, 1]} : vector<8x128xf32> to vector<1x128xf32>
    %588 = vector.broadcast %586 : vector<8x1xf32> to vector<8x128xf32>
    %589 = vector.broadcast %587 : vector<1x128xf32> to vector<8x128xf32>
    %590 = arith.mulf %588, %589 : vector<8x128xf32>
    %591 = arith.addf %584, %590 : vector<8x128xf32>
    %c3_296 = arith.constant 3 : index
    %c2_297 = arith.constant 2 : index
    %c0_298 = arith.constant 0 : index
    %c0_299 = arith.constant 0 : index
    %592 = vector.load %arg9[%c3_296, %c2_297, %c0_298, %c0_299] : memref<9x8x8x1xf32, #tpu.memory_space<vmem>>, vector<1x1x8x1xf32>
    %593 = vector.shape_cast %592 : vector<1x1x8x1xf32> to vector<8x1xf32>
    %594 = vector.extract_strided_slice %577 {offsets = [2, 0], sizes = [1, 128], strides = [1, 1]} : vector<8x128xf32> to vector<1x128xf32>
    %595 = vector.broadcast %593 : vector<8x1xf32> to vector<8x128xf32>
    %596 = vector.broadcast %594 : vector<1x128xf32> to vector<8x128xf32>
    %597 = arith.mulf %595, %596 : vector<8x128xf32>
    %598 = arith.addf %591, %597 : vector<8x128xf32>
    %c3_300 = arith.constant 3 : index
    %c3_301 = arith.constant 3 : index
    %c0_302 = arith.constant 0 : index
    %c0_303 = arith.constant 0 : index
    %599 = vector.load %arg9[%c3_300, %c3_301, %c0_302, %c0_303] : memref<9x8x8x1xf32, #tpu.memory_space<vmem>>, vector<1x1x8x1xf32>
    %600 = vector.shape_cast %599 : vector<1x1x8x1xf32> to vector<8x1xf32>
    %601 = vector.extract_strided_slice %577 {offsets = [3, 0], sizes = [1, 128], strides = [1, 1]} : vector<8x128xf32> to vector<1x128xf32>
    %602 = vector.broadcast %600 : vector<8x1xf32> to vector<8x128xf32>
    %603 = vector.broadcast %601 : vector<1x128xf32> to vector<8x128xf32>
    %604 = arith.mulf %602, %603 : vector<8x128xf32>
    %605 = arith.addf %598, %604 : vector<8x128xf32>
    %c3_304 = arith.constant 3 : index
    %c4_305 = arith.constant 4 : index
    %c0_306 = arith.constant 0 : index
    %c0_307 = arith.constant 0 : index
    %606 = vector.load %arg9[%c3_304, %c4_305, %c0_306, %c0_307] : memref<9x8x8x1xf32, #tpu.memory_space<vmem>>, vector<1x1x8x1xf32>
    %607 = vector.shape_cast %606 : vector<1x1x8x1xf32> to vector<8x1xf32>
    %608 = vector.extract_strided_slice %577 {offsets = [4, 0], sizes = [1, 128], strides = [1, 1]} : vector<8x128xf32> to vector<1x128xf32>
    %609 = vector.broadcast %607 : vector<8x1xf32> to vector<8x128xf32>
    %610 = vector.broadcast %608 : vector<1x128xf32> to vector<8x128xf32>
    %611 = arith.mulf %609, %610 : vector<8x128xf32>
    %612 = arith.addf %605, %611 : vector<8x128xf32>
    %c3_308 = arith.constant 3 : index
    %c5_309 = arith.constant 5 : index
    %c0_310 = arith.constant 0 : index
    %c0_311 = arith.constant 0 : index
    %613 = vector.load %arg9[%c3_308, %c5_309, %c0_310, %c0_311] : memref<9x8x8x1xf32, #tpu.memory_space<vmem>>, vector<1x1x8x1xf32>
    %614 = vector.shape_cast %613 : vector<1x1x8x1xf32> to vector<8x1xf32>
    %615 = vector.extract_strided_slice %577 {offsets = [5, 0], sizes = [1, 128], strides = [1, 1]} : vector<8x128xf32> to vector<1x128xf32>
    %616 = vector.broadcast %614 : vector<8x1xf32> to vector<8x128xf32>
    %617 = vector.broadcast %615 : vector<1x128xf32> to vector<8x128xf32>
    %618 = arith.mulf %616, %617 : vector<8x128xf32>
    %619 = arith.addf %612, %618 : vector<8x128xf32>
    %c3_312 = arith.constant 3 : index
    %c6_313 = arith.constant 6 : index
    %c0_314 = arith.constant 0 : index
    %c0_315 = arith.constant 0 : index
    %620 = vector.load %arg9[%c3_312, %c6_313, %c0_314, %c0_315] : memref<9x8x8x1xf32, #tpu.memory_space<vmem>>, vector<1x1x8x1xf32>
    %621 = vector.shape_cast %620 : vector<1x1x8x1xf32> to vector<8x1xf32>
    %622 = vector.extract_strided_slice %577 {offsets = [6, 0], sizes = [1, 128], strides = [1, 1]} : vector<8x128xf32> to vector<1x128xf32>
    %623 = vector.broadcast %621 : vector<8x1xf32> to vector<8x128xf32>
    %624 = vector.broadcast %622 : vector<1x128xf32> to vector<8x128xf32>
    %625 = arith.mulf %623, %624 : vector<8x128xf32>
    %626 = arith.addf %619, %625 : vector<8x128xf32>
    %c3_316 = arith.constant 3 : index
    %c7_317 = arith.constant 7 : index
    %c0_318 = arith.constant 0 : index
    %c0_319 = arith.constant 0 : index
    %627 = vector.load %arg9[%c3_316, %c7_317, %c0_318, %c0_319] : memref<9x8x8x1xf32, #tpu.memory_space<vmem>>, vector<1x1x8x1xf32>
    %628 = vector.shape_cast %627 : vector<1x1x8x1xf32> to vector<8x1xf32>
    %629 = vector.extract_strided_slice %577 {offsets = [7, 0], sizes = [1, 128], strides = [1, 1]} : vector<8x128xf32> to vector<1x128xf32>
    %630 = vector.broadcast %628 : vector<8x1xf32> to vector<8x128xf32>
    %631 = vector.broadcast %629 : vector<1x128xf32> to vector<8x128xf32>
    %632 = arith.mulf %630, %631 : vector<8x128xf32>
    %633 = arith.addf %626, %632 : vector<8x128xf32>
    %c4_320 = arith.constant 4 : index
    %c0_321 = arith.constant 0 : index
    %c0_322 = arith.constant 0 : index
    %c0_323 = arith.constant 0 : index
    %634 = vector.load %arg9[%c4_320, %c0_321, %c0_322, %c0_323] : memref<9x8x8x1xf32, #tpu.memory_space<vmem>>, vector<1x1x8x1xf32>
    %635 = vector.shape_cast %634 : vector<1x1x8x1xf32> to vector<8x1xf32>
    %636 = vector.extract_strided_slice %386 {offsets = [0, 0], sizes = [1, 128], strides = [1, 1]} : vector<8x128xf32> to vector<1x128xf32>
    %637 = vector.broadcast %635 : vector<8x1xf32> to vector<8x128xf32>
    %638 = vector.broadcast %636 : vector<1x128xf32> to vector<8x128xf32>
    %639 = arith.mulf %637, %638 : vector<8x128xf32>
    %640 = arith.addf %633, %639 : vector<8x128xf32>
    %c4_324 = arith.constant 4 : index
    %c1_325 = arith.constant 1 : index
    %c0_326 = arith.constant 0 : index
    %c0_327 = arith.constant 0 : index
    %641 = vector.load %arg9[%c4_324, %c1_325, %c0_326, %c0_327] : memref<9x8x8x1xf32, #tpu.memory_space<vmem>>, vector<1x1x8x1xf32>
    %642 = vector.shape_cast %641 : vector<1x1x8x1xf32> to vector<8x1xf32>
    %643 = vector.extract_strided_slice %386 {offsets = [1, 0], sizes = [1, 128], strides = [1, 1]} : vector<8x128xf32> to vector<1x128xf32>
    %644 = vector.broadcast %642 : vector<8x1xf32> to vector<8x128xf32>
    %645 = vector.broadcast %643 : vector<1x128xf32> to vector<8x128xf32>
    %646 = arith.mulf %644, %645 : vector<8x128xf32>
    %647 = arith.addf %640, %646 : vector<8x128xf32>
    %c4_328 = arith.constant 4 : index
    %c2_329 = arith.constant 2 : index
    %c0_330 = arith.constant 0 : index
    %c0_331 = arith.constant 0 : index
    %648 = vector.load %arg9[%c4_328, %c2_329, %c0_330, %c0_331] : memref<9x8x8x1xf32, #tpu.memory_space<vmem>>, vector<1x1x8x1xf32>
    %649 = vector.shape_cast %648 : vector<1x1x8x1xf32> to vector<8x1xf32>
    %650 = vector.extract_strided_slice %386 {offsets = [2, 0], sizes = [1, 128], strides = [1, 1]} : vector<8x128xf32> to vector<1x128xf32>
    %651 = vector.broadcast %649 : vector<8x1xf32> to vector<8x128xf32>
    %652 = vector.broadcast %650 : vector<1x128xf32> to vector<8x128xf32>
    %653 = arith.mulf %651, %652 : vector<8x128xf32>
    %654 = arith.addf %647, %653 : vector<8x128xf32>
    %c4_332 = arith.constant 4 : index
    %c3_333 = arith.constant 3 : index
    %c0_334 = arith.constant 0 : index
    %c0_335 = arith.constant 0 : index
    %655 = vector.load %arg9[%c4_332, %c3_333, %c0_334, %c0_335] : memref<9x8x8x1xf32, #tpu.memory_space<vmem>>, vector<1x1x8x1xf32>
    %656 = vector.shape_cast %655 : vector<1x1x8x1xf32> to vector<8x1xf32>
    %657 = vector.extract_strided_slice %386 {offsets = [3, 0], sizes = [1, 128], strides = [1, 1]} : vector<8x128xf32> to vector<1x128xf32>
    %658 = vector.broadcast %656 : vector<8x1xf32> to vector<8x128xf32>
    %659 = vector.broadcast %657 : vector<1x128xf32> to vector<8x128xf32>
    %660 = arith.mulf %658, %659 : vector<8x128xf32>
    %661 = arith.addf %654, %660 : vector<8x128xf32>
    %c4_336 = arith.constant 4 : index
    %c4_337 = arith.constant 4 : index
    %c0_338 = arith.constant 0 : index
    %c0_339 = arith.constant 0 : index
    %662 = vector.load %arg9[%c4_336, %c4_337, %c0_338, %c0_339] : memref<9x8x8x1xf32, #tpu.memory_space<vmem>>, vector<1x1x8x1xf32>
    %663 = vector.shape_cast %662 : vector<1x1x8x1xf32> to vector<8x1xf32>
    %664 = vector.extract_strided_slice %386 {offsets = [4, 0], sizes = [1, 128], strides = [1, 1]} : vector<8x128xf32> to vector<1x128xf32>
    %665 = vector.broadcast %663 : vector<8x1xf32> to vector<8x128xf32>
    %666 = vector.broadcast %664 : vector<1x128xf32> to vector<8x128xf32>
    %667 = arith.mulf %665, %666 : vector<8x128xf32>
    %668 = arith.addf %661, %667 : vector<8x128xf32>
    %c4_340 = arith.constant 4 : index
    %c5_341 = arith.constant 5 : index
    %c0_342 = arith.constant 0 : index
    %c0_343 = arith.constant 0 : index
    %669 = vector.load %arg9[%c4_340, %c5_341, %c0_342, %c0_343] : memref<9x8x8x1xf32, #tpu.memory_space<vmem>>, vector<1x1x8x1xf32>
    %670 = vector.shape_cast %669 : vector<1x1x8x1xf32> to vector<8x1xf32>
    %671 = vector.extract_strided_slice %386 {offsets = [5, 0], sizes = [1, 128], strides = [1, 1]} : vector<8x128xf32> to vector<1x128xf32>
    %672 = vector.broadcast %670 : vector<8x1xf32> to vector<8x128xf32>
    %673 = vector.broadcast %671 : vector<1x128xf32> to vector<8x128xf32>
    %674 = arith.mulf %672, %673 : vector<8x128xf32>
    %675 = arith.addf %668, %674 : vector<8x128xf32>
    %c4_344 = arith.constant 4 : index
    %c6_345 = arith.constant 6 : index
    %c0_346 = arith.constant 0 : index
    %c0_347 = arith.constant 0 : index
    %676 = vector.load %arg9[%c4_344, %c6_345, %c0_346, %c0_347] : memref<9x8x8x1xf32, #tpu.memory_space<vmem>>, vector<1x1x8x1xf32>
    %677 = vector.shape_cast %676 : vector<1x1x8x1xf32> to vector<8x1xf32>
    %678 = vector.extract_strided_slice %386 {offsets = [6, 0], sizes = [1, 128], strides = [1, 1]} : vector<8x128xf32> to vector<1x128xf32>
    %679 = vector.broadcast %677 : vector<8x1xf32> to vector<8x128xf32>
    %680 = vector.broadcast %678 : vector<1x128xf32> to vector<8x128xf32>
    %681 = arith.mulf %679, %680 : vector<8x128xf32>
    %682 = arith.addf %675, %681 : vector<8x128xf32>
    %c4_348 = arith.constant 4 : index
    %c7_349 = arith.constant 7 : index
    %c0_350 = arith.constant 0 : index
    %c0_351 = arith.constant 0 : index
    %683 = vector.load %arg9[%c4_348, %c7_349, %c0_350, %c0_351] : memref<9x8x8x1xf32, #tpu.memory_space<vmem>>, vector<1x1x8x1xf32>
    %684 = vector.shape_cast %683 : vector<1x1x8x1xf32> to vector<8x1xf32>
    %685 = vector.extract_strided_slice %386 {offsets = [7, 0], sizes = [1, 128], strides = [1, 1]} : vector<8x128xf32> to vector<1x128xf32>
    %686 = vector.broadcast %684 : vector<8x1xf32> to vector<8x128xf32>
    %687 = vector.broadcast %685 : vector<1x128xf32> to vector<8x128xf32>
    %688 = arith.mulf %686, %687 : vector<8x128xf32>
    %689 = arith.addf %682, %688 : vector<8x128xf32>
    %c127_i32 = arith.constant 127 : i32
    %690 = tpu.dynamic_rotate %386 by %c127_i32 dim 1 : vector<8x128xf32>, i32 -> vector<8x128xf32>
    %cst_352 = arith.constant 0.000000e+00 : f32
    %691 = vector.shape_cast %14 : vector<1x128xi1> to vector<1x128xi1>
    %692 = vector.broadcast %691 : vector<1x128xi1> to vector<8x128xi1>
    %693 = vector.broadcast %cst_352 : f32 to vector<8x128xf32>
    %694 = arith.select %692, %690, %693 : vector<8x128xi1>, vector<8x128xf32>
    %c5_353 = arith.constant 5 : index
    %c0_354 = arith.constant 0 : index
    %c0_355 = arith.constant 0 : index
    %c0_356 = arith.constant 0 : index
    %695 = vector.load %arg9[%c5_353, %c0_354, %c0_355, %c0_356] : memref<9x8x8x1xf32, #tpu.memory_space<vmem>>, vector<1x1x8x1xf32>
    %696 = vector.shape_cast %695 : vector<1x1x8x1xf32> to vector<8x1xf32>
    %697 = vector.extract_strided_slice %694 {offsets = [0, 0], sizes = [1, 128], strides = [1, 1]} : vector<8x128xf32> to vector<1x128xf32>
    %698 = vector.broadcast %696 : vector<8x1xf32> to vector<8x128xf32>
    %699 = vector.broadcast %697 : vector<1x128xf32> to vector<8x128xf32>
    %700 = arith.mulf %698, %699 : vector<8x128xf32>
    %701 = arith.addf %689, %700 : vector<8x128xf32>
    %c5_357 = arith.constant 5 : index
    %c1_358 = arith.constant 1 : index
    %c0_359 = arith.constant 0 : index
    %c0_360 = arith.constant 0 : index
    %702 = vector.load %arg9[%c5_357, %c1_358, %c0_359, %c0_360] : memref<9x8x8x1xf32, #tpu.memory_space<vmem>>, vector<1x1x8x1xf32>
    %703 = vector.shape_cast %702 : vector<1x1x8x1xf32> to vector<8x1xf32>
    %704 = vector.extract_strided_slice %694 {offsets = [1, 0], sizes = [1, 128], strides = [1, 1]} : vector<8x128xf32> to vector<1x128xf32>
    %705 = vector.broadcast %703 : vector<8x1xf32> to vector<8x128xf32>
    %706 = vector.broadcast %704 : vector<1x128xf32> to vector<8x128xf32>
    %707 = arith.mulf %705, %706 : vector<8x128xf32>
    %708 = arith.addf %701, %707 : vector<8x128xf32>
    %c5_361 = arith.constant 5 : index
    %c2_362 = arith.constant 2 : index
    %c0_363 = arith.constant 0 : index
    %c0_364 = arith.constant 0 : index
    %709 = vector.load %arg9[%c5_361, %c2_362, %c0_363, %c0_364] : memref<9x8x8x1xf32, #tpu.memory_space<vmem>>, vector<1x1x8x1xf32>
    %710 = vector.shape_cast %709 : vector<1x1x8x1xf32> to vector<8x1xf32>
    %711 = vector.extract_strided_slice %694 {offsets = [2, 0], sizes = [1, 128], strides = [1, 1]} : vector<8x128xf32> to vector<1x128xf32>
    %712 = vector.broadcast %710 : vector<8x1xf32> to vector<8x128xf32>
    %713 = vector.broadcast %711 : vector<1x128xf32> to vector<8x128xf32>
    %714 = arith.mulf %712, %713 : vector<8x128xf32>
    %715 = arith.addf %708, %714 : vector<8x128xf32>
    %c5_365 = arith.constant 5 : index
    %c3_366 = arith.constant 3 : index
    %c0_367 = arith.constant 0 : index
    %c0_368 = arith.constant 0 : index
    %716 = vector.load %arg9[%c5_365, %c3_366, %c0_367, %c0_368] : memref<9x8x8x1xf32, #tpu.memory_space<vmem>>, vector<1x1x8x1xf32>
    %717 = vector.shape_cast %716 : vector<1x1x8x1xf32> to vector<8x1xf32>
    %718 = vector.extract_strided_slice %694 {offsets = [3, 0], sizes = [1, 128], strides = [1, 1]} : vector<8x128xf32> to vector<1x128xf32>
    %719 = vector.broadcast %717 : vector<8x1xf32> to vector<8x128xf32>
    %720 = vector.broadcast %718 : vector<1x128xf32> to vector<8x128xf32>
    %721 = arith.mulf %719, %720 : vector<8x128xf32>
    %722 = arith.addf %715, %721 : vector<8x128xf32>
    %c5_369 = arith.constant 5 : index
    %c4_370 = arith.constant 4 : index
    %c0_371 = arith.constant 0 : index
    %c0_372 = arith.constant 0 : index
    %723 = vector.load %arg9[%c5_369, %c4_370, %c0_371, %c0_372] : memref<9x8x8x1xf32, #tpu.memory_space<vmem>>, vector<1x1x8x1xf32>
    %724 = vector.shape_cast %723 : vector<1x1x8x1xf32> to vector<8x1xf32>
    %725 = vector.extract_strided_slice %694 {offsets = [4, 0], sizes = [1, 128], strides = [1, 1]} : vector<8x128xf32> to vector<1x128xf32>
    %726 = vector.broadcast %724 : vector<8x1xf32> to vector<8x128xf32>
    %727 = vector.broadcast %725 : vector<1x128xf32> to vector<8x128xf32>
    %728 = arith.mulf %726, %727 : vector<8x128xf32>
    %729 = arith.addf %722, %728 : vector<8x128xf32>
    %c5_373 = arith.constant 5 : index
    %c5_374 = arith.constant 5 : index
    %c0_375 = arith.constant 0 : index
    %c0_376 = arith.constant 0 : index
    %730 = vector.load %arg9[%c5_373, %c5_374, %c0_375, %c0_376] : memref<9x8x8x1xf32, #tpu.memory_space<vmem>>, vector<1x1x8x1xf32>
    %731 = vector.shape_cast %730 : vector<1x1x8x1xf32> to vector<8x1xf32>
    %732 = vector.extract_strided_slice %694 {offsets = [5, 0], sizes = [1, 128], strides = [1, 1]} : vector<8x128xf32> to vector<1x128xf32>
    %733 = vector.broadcast %731 : vector<8x1xf32> to vector<8x128xf32>
    %734 = vector.broadcast %732 : vector<1x128xf32> to vector<8x128xf32>
    %735 = arith.mulf %733, %734 : vector<8x128xf32>
    %736 = arith.addf %729, %735 : vector<8x128xf32>
    %c5_377 = arith.constant 5 : index
    %c6_378 = arith.constant 6 : index
    %c0_379 = arith.constant 0 : index
    %c0_380 = arith.constant 0 : index
    %737 = vector.load %arg9[%c5_377, %c6_378, %c0_379, %c0_380] : memref<9x8x8x1xf32, #tpu.memory_space<vmem>>, vector<1x1x8x1xf32>
    %738 = vector.shape_cast %737 : vector<1x1x8x1xf32> to vector<8x1xf32>
    %739 = vector.extract_strided_slice %694 {offsets = [6, 0], sizes = [1, 128], strides = [1, 1]} : vector<8x128xf32> to vector<1x128xf32>
    %740 = vector.broadcast %738 : vector<8x1xf32> to vector<8x128xf32>
    %741 = vector.broadcast %739 : vector<1x128xf32> to vector<8x128xf32>
    %742 = arith.mulf %740, %741 : vector<8x128xf32>
    %743 = arith.addf %736, %742 : vector<8x128xf32>
    %c5_381 = arith.constant 5 : index
    %c7_382 = arith.constant 7 : index
    %c0_383 = arith.constant 0 : index
    %c0_384 = arith.constant 0 : index
    %744 = vector.load %arg9[%c5_381, %c7_382, %c0_383, %c0_384] : memref<9x8x8x1xf32, #tpu.memory_space<vmem>>, vector<1x1x8x1xf32>
    %745 = vector.shape_cast %744 : vector<1x1x8x1xf32> to vector<8x1xf32>
    %746 = vector.extract_strided_slice %694 {offsets = [7, 0], sizes = [1, 128], strides = [1, 1]} : vector<8x128xf32> to vector<1x128xf32>
    %747 = vector.broadcast %745 : vector<8x1xf32> to vector<8x128xf32>
    %748 = vector.broadcast %746 : vector<1x128xf32> to vector<8x128xf32>
    %749 = arith.mulf %747, %748 : vector<8x128xf32>
    %750 = arith.addf %743, %749 : vector<8x128xf32>
    %c121_i32 = arith.constant 121 : i32
    %751 = tpu.dynamic_rotate %386 by %c121_i32 dim 1 : vector<8x128xf32>, i32 -> vector<8x128xf32>
    %752 = arith.andi %10, %12 : vector<1x128xi1>
    %cst_385 = arith.constant 0.000000e+00 : f32
    %753 = vector.shape_cast %752 : vector<1x128xi1> to vector<1x128xi1>
    %754 = vector.broadcast %753 : vector<1x128xi1> to vector<8x128xi1>
    %755 = vector.broadcast %cst_385 : f32 to vector<8x128xf32>
    %756 = arith.select %754, %751, %755 : vector<8x128xi1>, vector<8x128xf32>
    %c6_386 = arith.constant 6 : index
    %c0_387 = arith.constant 0 : index
    %c0_388 = arith.constant 0 : index
    %c0_389 = arith.constant 0 : index
    %757 = vector.load %arg9[%c6_386, %c0_387, %c0_388, %c0_389] : memref<9x8x8x1xf32, #tpu.memory_space<vmem>>, vector<1x1x8x1xf32>
    %758 = vector.shape_cast %757 : vector<1x1x8x1xf32> to vector<8x1xf32>
    %759 = vector.extract_strided_slice %756 {offsets = [0, 0], sizes = [1, 128], strides = [1, 1]} : vector<8x128xf32> to vector<1x128xf32>
    %760 = vector.broadcast %758 : vector<8x1xf32> to vector<8x128xf32>
    %761 = vector.broadcast %759 : vector<1x128xf32> to vector<8x128xf32>
    %762 = arith.mulf %760, %761 : vector<8x128xf32>
    %763 = arith.addf %750, %762 : vector<8x128xf32>
    %c6_390 = arith.constant 6 : index
    %c1_391 = arith.constant 1 : index
    %c0_392 = arith.constant 0 : index
    %c0_393 = arith.constant 0 : index
    %764 = vector.load %arg9[%c6_390, %c1_391, %c0_392, %c0_393] : memref<9x8x8x1xf32, #tpu.memory_space<vmem>>, vector<1x1x8x1xf32>
    %765 = vector.shape_cast %764 : vector<1x1x8x1xf32> to vector<8x1xf32>
    %766 = vector.extract_strided_slice %756 {offsets = [1, 0], sizes = [1, 128], strides = [1, 1]} : vector<8x128xf32> to vector<1x128xf32>
    %767 = vector.broadcast %765 : vector<8x1xf32> to vector<8x128xf32>
    %768 = vector.broadcast %766 : vector<1x128xf32> to vector<8x128xf32>
    %769 = arith.mulf %767, %768 : vector<8x128xf32>
    %770 = arith.addf %763, %769 : vector<8x128xf32>
    %c6_394 = arith.constant 6 : index
    %c2_395 = arith.constant 2 : index
    %c0_396 = arith.constant 0 : index
    %c0_397 = arith.constant 0 : index
    %771 = vector.load %arg9[%c6_394, %c2_395, %c0_396, %c0_397] : memref<9x8x8x1xf32, #tpu.memory_space<vmem>>, vector<1x1x8x1xf32>
    %772 = vector.shape_cast %771 : vector<1x1x8x1xf32> to vector<8x1xf32>
    %773 = vector.extract_strided_slice %756 {offsets = [2, 0], sizes = [1, 128], strides = [1, 1]} : vector<8x128xf32> to vector<1x128xf32>
    %774 = vector.broadcast %772 : vector<8x1xf32> to vector<8x128xf32>
    %775 = vector.broadcast %773 : vector<1x128xf32> to vector<8x128xf32>
    %776 = arith.mulf %774, %775 : vector<8x128xf32>
    %777 = arith.addf %770, %776 : vector<8x128xf32>
    %c6_398 = arith.constant 6 : index
    %c3_399 = arith.constant 3 : index
    %c0_400 = arith.constant 0 : index
    %c0_401 = arith.constant 0 : index
    %778 = vector.load %arg9[%c6_398, %c3_399, %c0_400, %c0_401] : memref<9x8x8x1xf32, #tpu.memory_space<vmem>>, vector<1x1x8x1xf32>
    %779 = vector.shape_cast %778 : vector<1x1x8x1xf32> to vector<8x1xf32>
    %780 = vector.extract_strided_slice %756 {offsets = [3, 0], sizes = [1, 128], strides = [1, 1]} : vector<8x128xf32> to vector<1x128xf32>
    %781 = vector.broadcast %779 : vector<8x1xf32> to vector<8x128xf32>
    %782 = vector.broadcast %780 : vector<1x128xf32> to vector<8x128xf32>
    %783 = arith.mulf %781, %782 : vector<8x128xf32>
    %784 = arith.addf %777, %783 : vector<8x128xf32>
    %c6_402 = arith.constant 6 : index
    %c4_403 = arith.constant 4 : index
    %c0_404 = arith.constant 0 : index
    %c0_405 = arith.constant 0 : index
    %785 = vector.load %arg9[%c6_402, %c4_403, %c0_404, %c0_405] : memref<9x8x8x1xf32, #tpu.memory_space<vmem>>, vector<1x1x8x1xf32>
    %786 = vector.shape_cast %785 : vector<1x1x8x1xf32> to vector<8x1xf32>
    %787 = vector.extract_strided_slice %756 {offsets = [4, 0], sizes = [1, 128], strides = [1, 1]} : vector<8x128xf32> to vector<1x128xf32>
    %788 = vector.broadcast %786 : vector<8x1xf32> to vector<8x128xf32>
    %789 = vector.broadcast %787 : vector<1x128xf32> to vector<8x128xf32>
    %790 = arith.mulf %788, %789 : vector<8x128xf32>
    %791 = arith.addf %784, %790 : vector<8x128xf32>
    %c6_406 = arith.constant 6 : index
    %c5_407 = arith.constant 5 : index
    %c0_408 = arith.constant 0 : index
    %c0_409 = arith.constant 0 : index
    %792 = vector.load %arg9[%c6_406, %c5_407, %c0_408, %c0_409] : memref<9x8x8x1xf32, #tpu.memory_space<vmem>>, vector<1x1x8x1xf32>
    %793 = vector.shape_cast %792 : vector<1x1x8x1xf32> to vector<8x1xf32>
    %794 = vector.extract_strided_slice %756 {offsets = [5, 0], sizes = [1, 128], strides = [1, 1]} : vector<8x128xf32> to vector<1x128xf32>
    %795 = vector.broadcast %793 : vector<8x1xf32> to vector<8x128xf32>
    %796 = vector.broadcast %794 : vector<1x128xf32> to vector<8x128xf32>
    %797 = arith.mulf %795, %796 : vector<8x128xf32>
    %798 = arith.addf %791, %797 : vector<8x128xf32>
    %c6_410 = arith.constant 6 : index
    %c6_411 = arith.constant 6 : index
    %c0_412 = arith.constant 0 : index
    %c0_413 = arith.constant 0 : index
    %799 = vector.load %arg9[%c6_410, %c6_411, %c0_412, %c0_413] : memref<9x8x8x1xf32, #tpu.memory_space<vmem>>, vector<1x1x8x1xf32>
    %800 = vector.shape_cast %799 : vector<1x1x8x1xf32> to vector<8x1xf32>
    %801 = vector.extract_strided_slice %756 {offsets = [6, 0], sizes = [1, 128], strides = [1, 1]} : vector<8x128xf32> to vector<1x128xf32>
    %802 = vector.broadcast %800 : vector<8x1xf32> to vector<8x128xf32>
    %803 = vector.broadcast %801 : vector<1x128xf32> to vector<8x128xf32>
    %804 = arith.mulf %802, %803 : vector<8x128xf32>
    %805 = arith.addf %798, %804 : vector<8x128xf32>
    %c6_414 = arith.constant 6 : index
    %c7_415 = arith.constant 7 : index
    %c0_416 = arith.constant 0 : index
    %c0_417 = arith.constant 0 : index
    %806 = vector.load %arg9[%c6_414, %c7_415, %c0_416, %c0_417] : memref<9x8x8x1xf32, #tpu.memory_space<vmem>>, vector<1x1x8x1xf32>
    %807 = vector.shape_cast %806 : vector<1x1x8x1xf32> to vector<8x1xf32>
    %808 = vector.extract_strided_slice %756 {offsets = [7, 0], sizes = [1, 128], strides = [1, 1]} : vector<8x128xf32> to vector<1x128xf32>
    %809 = vector.broadcast %807 : vector<8x1xf32> to vector<8x128xf32>
    %810 = vector.broadcast %808 : vector<1x128xf32> to vector<8x128xf32>
    %811 = arith.mulf %809, %810 : vector<8x128xf32>
    %812 = arith.addf %805, %811 : vector<8x128xf32>
    %c120_i32 = arith.constant 120 : i32
    %813 = tpu.dynamic_rotate %386 by %c120_i32 dim 1 : vector<8x128xf32>, i32 -> vector<8x128xf32>
    %cst_418 = arith.constant 0.000000e+00 : f32
    %814 = vector.shape_cast %10 : vector<1x128xi1> to vector<1x128xi1>
    %815 = vector.broadcast %814 : vector<1x128xi1> to vector<8x128xi1>
    %816 = vector.broadcast %cst_418 : f32 to vector<8x128xf32>
    %817 = arith.select %815, %813, %816 : vector<8x128xi1>, vector<8x128xf32>
    %c7_419 = arith.constant 7 : index
    %c0_420 = arith.constant 0 : index
    %c0_421 = arith.constant 0 : index
    %c0_422 = arith.constant 0 : index
    %818 = vector.load %arg9[%c7_419, %c0_420, %c0_421, %c0_422] : memref<9x8x8x1xf32, #tpu.memory_space<vmem>>, vector<1x1x8x1xf32>
    %819 = vector.shape_cast %818 : vector<1x1x8x1xf32> to vector<8x1xf32>
    %820 = vector.extract_strided_slice %817 {offsets = [0, 0], sizes = [1, 128], strides = [1, 1]} : vector<8x128xf32> to vector<1x128xf32>
    %821 = vector.broadcast %819 : vector<8x1xf32> to vector<8x128xf32>
    %822 = vector.broadcast %820 : vector<1x128xf32> to vector<8x128xf32>
    %823 = arith.mulf %821, %822 : vector<8x128xf32>
    %824 = arith.addf %812, %823 : vector<8x128xf32>
    %c7_423 = arith.constant 7 : index
    %c1_424 = arith.constant 1 : index
    %c0_425 = arith.constant 0 : index
    %c0_426 = arith.constant 0 : index
    %825 = vector.load %arg9[%c7_423, %c1_424, %c0_425, %c0_426] : memref<9x8x8x1xf32, #tpu.memory_space<vmem>>, vector<1x1x8x1xf32>
    %826 = vector.shape_cast %825 : vector<1x1x8x1xf32> to vector<8x1xf32>
    %827 = vector.extract_strided_slice %817 {offsets = [1, 0], sizes = [1, 128], strides = [1, 1]} : vector<8x128xf32> to vector<1x128xf32>
    %828 = vector.broadcast %826 : vector<8x1xf32> to vector<8x128xf32>
    %829 = vector.broadcast %827 : vector<1x128xf32> to vector<8x128xf32>
    %830 = arith.mulf %828, %829 : vector<8x128xf32>
    %831 = arith.addf %824, %830 : vector<8x128xf32>
    %c7_427 = arith.constant 7 : index
    %c2_428 = arith.constant 2 : index
    %c0_429 = arith.constant 0 : index
    %c0_430 = arith.constant 0 : index
    %832 = vector.load %arg9[%c7_427, %c2_428, %c0_429, %c0_430] : memref<9x8x8x1xf32, #tpu.memory_space<vmem>>, vector<1x1x8x1xf32>
    %833 = vector.shape_cast %832 : vector<1x1x8x1xf32> to vector<8x1xf32>
    %834 = vector.extract_strided_slice %817 {offsets = [2, 0], sizes = [1, 128], strides = [1, 1]} : vector<8x128xf32> to vector<1x128xf32>
    %835 = vector.broadcast %833 : vector<8x1xf32> to vector<8x128xf32>
    %836 = vector.broadcast %834 : vector<1x128xf32> to vector<8x128xf32>
    %837 = arith.mulf %835, %836 : vector<8x128xf32>
    %838 = arith.addf %831, %837 : vector<8x128xf32>
    %c7_431 = arith.constant 7 : index
    %c3_432 = arith.constant 3 : index
    %c0_433 = arith.constant 0 : index
    %c0_434 = arith.constant 0 : index
    %839 = vector.load %arg9[%c7_431, %c3_432, %c0_433, %c0_434] : memref<9x8x8x1xf32, #tpu.memory_space<vmem>>, vector<1x1x8x1xf32>
    %840 = vector.shape_cast %839 : vector<1x1x8x1xf32> to vector<8x1xf32>
    %841 = vector.extract_strided_slice %817 {offsets = [3, 0], sizes = [1, 128], strides = [1, 1]} : vector<8x128xf32> to vector<1x128xf32>
    %842 = vector.broadcast %840 : vector<8x1xf32> to vector<8x128xf32>
    %843 = vector.broadcast %841 : vector<1x128xf32> to vector<8x128xf32>
    %844 = arith.mulf %842, %843 : vector<8x128xf32>
    %845 = arith.addf %838, %844 : vector<8x128xf32>
    %c7_435 = arith.constant 7 : index
    %c4_436 = arith.constant 4 : index
    %c0_437 = arith.constant 0 : index
    %c0_438 = arith.constant 0 : index
    %846 = vector.load %arg9[%c7_435, %c4_436, %c0_437, %c0_438] : memref<9x8x8x1xf32, #tpu.memory_space<vmem>>, vector<1x1x8x1xf32>
    %847 = vector.shape_cast %846 : vector<1x1x8x1xf32> to vector<8x1xf32>
    %848 = vector.extract_strided_slice %817 {offsets = [4, 0], sizes = [1, 128], strides = [1, 1]} : vector<8x128xf32> to vector<1x128xf32>
    %849 = vector.broadcast %847 : vector<8x1xf32> to vector<8x128xf32>
    %850 = vector.broadcast %848 : vector<1x128xf32> to vector<8x128xf32>
    %851 = arith.mulf %849, %850 : vector<8x128xf32>
    %852 = arith.addf %845, %851 : vector<8x128xf32>
    %c7_439 = arith.constant 7 : index
    %c5_440 = arith.constant 5 : index
    %c0_441 = arith.constant 0 : index
    %c0_442 = arith.constant 0 : index
    %853 = vector.load %arg9[%c7_439, %c5_440, %c0_441, %c0_442] : memref<9x8x8x1xf32, #tpu.memory_space<vmem>>, vector<1x1x8x1xf32>
    %854 = vector.shape_cast %853 : vector<1x1x8x1xf32> to vector<8x1xf32>
    %855 = vector.extract_strided_slice %817 {offsets = [5, 0], sizes = [1, 128], strides = [1, 1]} : vector<8x128xf32> to vector<1x128xf32>
    %856 = vector.broadcast %854 : vector<8x1xf32> to vector<8x128xf32>
    %857 = vector.broadcast %855 : vector<1x128xf32> to vector<8x128xf32>
    %858 = arith.mulf %856, %857 : vector<8x128xf32>
    %859 = arith.addf %852, %858 : vector<8x128xf32>
    %c7_443 = arith.constant 7 : index
    %c6_444 = arith.constant 6 : index
    %c0_445 = arith.constant 0 : index
    %c0_446 = arith.constant 0 : index
    %860 = vector.load %arg9[%c7_443, %c6_444, %c0_445, %c0_446] : memref<9x8x8x1xf32, #tpu.memory_space<vmem>>, vector<1x1x8x1xf32>
    %861 = vector.shape_cast %860 : vector<1x1x8x1xf32> to vector<8x1xf32>
    %862 = vector.extract_strided_slice %817 {offsets = [6, 0], sizes = [1, 128], strides = [1, 1]} : vector<8x128xf32> to vector<1x128xf32>
    %863 = vector.broadcast %861 : vector<8x1xf32> to vector<8x128xf32>
    %864 = vector.broadcast %862 : vector<1x128xf32> to vector<8x128xf32>
    %865 = arith.mulf %863, %864 : vector<8x128xf32>
    %866 = arith.addf %859, %865 : vector<8x128xf32>
    %c7_447 = arith.constant 7 : index
    %c7_448 = arith.constant 7 : index
    %c0_449 = arith.constant 0 : index
    %c0_450 = arith.constant 0 : index
    %867 = vector.load %arg9[%c7_447, %c7_448, %c0_449, %c0_450] : memref<9x8x8x1xf32, #tpu.memory_space<vmem>>, vector<1x1x8x1xf32>
    %868 = vector.shape_cast %867 : vector<1x1x8x1xf32> to vector<8x1xf32>
    %869 = vector.extract_strided_slice %817 {offsets = [7, 0], sizes = [1, 128], strides = [1, 1]} : vector<8x128xf32> to vector<1x128xf32>
    %870 = vector.broadcast %868 : vector<8x1xf32> to vector<8x128xf32>
    %871 = vector.broadcast %869 : vector<1x128xf32> to vector<8x128xf32>
    %872 = arith.mulf %870, %871 : vector<8x128xf32>
    %873 = arith.addf %866, %872 : vector<8x128xf32>
    %c119_i32 = arith.constant 119 : i32
    %874 = tpu.dynamic_rotate %386 by %c119_i32 dim 1 : vector<8x128xf32>, i32 -> vector<8x128xf32>
    %875 = arith.andi %10, %14 : vector<1x128xi1>
    %cst_451 = arith.constant 0.000000e+00 : f32
    %876 = vector.shape_cast %875 : vector<1x128xi1> to vector<1x128xi1>
    %877 = vector.broadcast %876 : vector<1x128xi1> to vector<8x128xi1>
    %878 = vector.broadcast %cst_451 : f32 to vector<8x128xf32>
    %879 = arith.select %877, %874, %878 : vector<8x128xi1>, vector<8x128xf32>
    %c8_452 = arith.constant 8 : index
    %c0_453 = arith.constant 0 : index
    %c0_454 = arith.constant 0 : index
    %c0_455 = arith.constant 0 : index
    %880 = vector.load %arg9[%c8_452, %c0_453, %c0_454, %c0_455] : memref<9x8x8x1xf32, #tpu.memory_space<vmem>>, vector<1x1x8x1xf32>
    %881 = vector.shape_cast %880 : vector<1x1x8x1xf32> to vector<8x1xf32>
    %882 = vector.extract_strided_slice %879 {offsets = [0, 0], sizes = [1, 128], strides = [1, 1]} : vector<8x128xf32> to vector<1x128xf32>
    %883 = vector.broadcast %881 : vector<8x1xf32> to vector<8x128xf32>
    %884 = vector.broadcast %882 : vector<1x128xf32> to vector<8x128xf32>
    %885 = arith.mulf %883, %884 : vector<8x128xf32>
    %886 = arith.addf %873, %885 : vector<8x128xf32>
    %c8_456 = arith.constant 8 : index
    %c1_457 = arith.constant 1 : index
    %c0_458 = arith.constant 0 : index
    %c0_459 = arith.constant 0 : index
    %887 = vector.load %arg9[%c8_456, %c1_457, %c0_458, %c0_459] : memref<9x8x8x1xf32, #tpu.memory_space<vmem>>, vector<1x1x8x1xf32>
    %888 = vector.shape_cast %887 : vector<1x1x8x1xf32> to vector<8x1xf32>
    %889 = vector.extract_strided_slice %879 {offsets = [1, 0], sizes = [1, 128], strides = [1, 1]} : vector<8x128xf32> to vector<1x128xf32>
    %890 = vector.broadcast %888 : vector<8x1xf32> to vector<8x128xf32>
    %891 = vector.broadcast %889 : vector<1x128xf32> to vector<8x128xf32>
    %892 = arith.mulf %890, %891 : vector<8x128xf32>
    %893 = arith.addf %886, %892 : vector<8x128xf32>
    %c8_460 = arith.constant 8 : index
    %c2_461 = arith.constant 2 : index
    %c0_462 = arith.constant 0 : index
    %c0_463 = arith.constant 0 : index
    %894 = vector.load %arg9[%c8_460, %c2_461, %c0_462, %c0_463] : memref<9x8x8x1xf32, #tpu.memory_space<vmem>>, vector<1x1x8x1xf32>
    %895 = vector.shape_cast %894 : vector<1x1x8x1xf32> to vector<8x1xf32>
    %896 = vector.extract_strided_slice %879 {offsets = [2, 0], sizes = [1, 128], strides = [1, 1]} : vector<8x128xf32> to vector<1x128xf32>
    %897 = vector.broadcast %895 : vector<8x1xf32> to vector<8x128xf32>
    %898 = vector.broadcast %896 : vector<1x128xf32> to vector<8x128xf32>
    %899 = arith.mulf %897, %898 : vector<8x128xf32>
    %900 = arith.addf %893, %899 : vector<8x128xf32>
    %c8_464 = arith.constant 8 : index
    %c3_465 = arith.constant 3 : index
    %c0_466 = arith.constant 0 : index
    %c0_467 = arith.constant 0 : index
    %901 = vector.load %arg9[%c8_464, %c3_465, %c0_466, %c0_467] : memref<9x8x8x1xf32, #tpu.memory_space<vmem>>, vector<1x1x8x1xf32>
    %902 = vector.shape_cast %901 : vector<1x1x8x1xf32> to vector<8x1xf32>
    %903 = vector.extract_strided_slice %879 {offsets = [3, 0], sizes = [1, 128], strides = [1, 1]} : vector<8x128xf32> to vector<1x128xf32>
    %904 = vector.broadcast %902 : vector<8x1xf32> to vector<8x128xf32>
    %905 = vector.broadcast %903 : vector<1x128xf32> to vector<8x128xf32>
    %906 = arith.mulf %904, %905 : vector<8x128xf32>
    %907 = arith.addf %900, %906 : vector<8x128xf32>
    %c8_468 = arith.constant 8 : index
    %c4_469 = arith.constant 4 : index
    %c0_470 = arith.constant 0 : index
    %c0_471 = arith.constant 0 : index
    %908 = vector.load %arg9[%c8_468, %c4_469, %c0_470, %c0_471] : memref<9x8x8x1xf32, #tpu.memory_space<vmem>>, vector<1x1x8x1xf32>
    %909 = vector.shape_cast %908 : vector<1x1x8x1xf32> to vector<8x1xf32>
    %910 = vector.extract_strided_slice %879 {offsets = [4, 0], sizes = [1, 128], strides = [1, 1]} : vector<8x128xf32> to vector<1x128xf32>
    %911 = vector.broadcast %909 : vector<8x1xf32> to vector<8x128xf32>
    %912 = vector.broadcast %910 : vector<1x128xf32> to vector<8x128xf32>
    %913 = arith.mulf %911, %912 : vector<8x128xf32>
    %914 = arith.addf %907, %913 : vector<8x128xf32>
    %c8_472 = arith.constant 8 : index
    %c5_473 = arith.constant 5 : index
    %c0_474 = arith.constant 0 : index
    %c0_475 = arith.constant 0 : index
    %915 = vector.load %arg9[%c8_472, %c5_473, %c0_474, %c0_475] : memref<9x8x8x1xf32, #tpu.memory_space<vmem>>, vector<1x1x8x1xf32>
    %916 = vector.shape_cast %915 : vector<1x1x8x1xf32> to vector<8x1xf32>
    %917 = vector.extract_strided_slice %879 {offsets = [5, 0], sizes = [1, 128], strides = [1, 1]} : vector<8x128xf32> to vector<1x128xf32>
    %918 = vector.broadcast %916 : vector<8x1xf32> to vector<8x128xf32>
    %919 = vector.broadcast %917 : vector<1x128xf32> to vector<8x128xf32>
    %920 = arith.mulf %918, %919 : vector<8x128xf32>
    %921 = arith.addf %914, %920 : vector<8x128xf32>
    %c8_476 = arith.constant 8 : index
    %c6_477 = arith.constant 6 : index
    %c0_478 = arith.constant 0 : index
    %c0_479 = arith.constant 0 : index
    %922 = vector.load %arg9[%c8_476, %c6_477, %c0_478, %c0_479] : memref<9x8x8x1xf32, #tpu.memory_space<vmem>>, vector<1x1x8x1xf32>
    %923 = vector.shape_cast %922 : vector<1x1x8x1xf32> to vector<8x1xf32>
    %924 = vector.extract_strided_slice %879 {offsets = [6, 0], sizes = [1, 128], strides = [1, 1]} : vector<8x128xf32> to vector<1x128xf32>
    %925 = vector.broadcast %923 : vector<8x1xf32> to vector<8x128xf32>
    %926 = vector.broadcast %924 : vector<1x128xf32> to vector<8x128xf32>
    %927 = arith.mulf %925, %926 : vector<8x128xf32>
    %928 = arith.addf %921, %927 : vector<8x128xf32>
    %c8_480 = arith.constant 8 : index
    %c7_481 = arith.constant 7 : index
    %c0_482 = arith.constant 0 : index
    %c0_483 = arith.constant 0 : index
    %929 = vector.load %arg9[%c8_480, %c7_481, %c0_482, %c0_483] : memref<9x8x8x1xf32, #tpu.memory_space<vmem>>, vector<1x1x8x1xf32>
    %930 = vector.shape_cast %929 : vector<1x1x8x1xf32> to vector<8x1xf32>
    %931 = vector.extract_strided_slice %879 {offsets = [7, 0], sizes = [1, 128], strides = [1, 1]} : vector<8x128xf32> to vector<1x128xf32>
    %932 = vector.broadcast %930 : vector<8x1xf32> to vector<8x128xf32>
    %933 = vector.broadcast %931 : vector<1x128xf32> to vector<8x128xf32>
    %934 = arith.mulf %932, %933 : vector<8x128xf32>
    %935 = arith.addf %928, %934 : vector<8x128xf32>
    %c0_484 = arith.constant 0 : index
    %c0_485 = arith.constant 0 : index
    %936 = vector.load %arg10[%c0_484, %c0_485] : memref<8x128xf32, #tpu.memory_space<vmem>>, vector<8x128xf32>
    tpu.vector_store %arg10[%c0_484, %c0_485], %935 {strides = array<i32>} : memref<8x128xf32, #tpu.memory_space<vmem>>, vector<8x128xf32>,
    return
  }
}

</mosaic_0001>

<llo_original>
// kernel: adjust_block_forward.1
$region0: #{adjust_block_forward.1}
  #allocation0 [shape = 'u32[]', space=smem, size = 0x4, offset = 0x4, fixed_abs, tag = 'smem constant byte address 0x4 - core index']
  #allocation1 [shape = 'u32[144,128]{1,0:T(1,128)}', space=vmem, size = 0x12000, scoped, tag = 'internal scratch']
  %s0 = inlined_call_operand.vmem [shape: f32[4,128], index: 0, kind: input, shape index: {}]
  %s1 = inlined_call_operand.vmem [shape: f32[4,128], index: 1, kind: input, shape index: {}]
  %s2 = inlined_call_operand.vmem [shape: f32[4,128], index: 2, kind: input, shape index: {}]
  %s3 = inlined_call_operand.vmem [shape: f32[4,128], index: 3, kind: input, shape index: {}]
  %s4 = inlined_call_operand.vmem [shape: f32[4,1], index: 4, kind: input, shape index: {}]
  %s5 = inlined_call_operand.vmem [shape: f32[4,1], index: 5, kind: input, shape index: {}]
  %s6 = inlined_call_operand.vmem [shape: f32[9,4,8,1], index: 6, kind: input, shape index: {}]
  %s7 = inlined_call_operand.vmem [shape: f32[8,1], index: 7, kind: input, shape index: {}]
  %s8 = inlined_call_operand.vmem [shape: f32[8,1], index: 8, kind: input, shape index: {}]
  %s9 = inlined_call_operand.vmem [shape: f32[9,8,8,1], index: 9, kind: input, shape index: {}]
  %s10 = inlined_call_operand.vmem [shape: f32[8,128], index: 10, kind: output, shape index: {}]
  %s11 = sld [smem:[#allocation0]]
  $region50: #{adjust_block_forward.1} parent=0
    _
  %s13 = ssub.s32 1, %s11
  %s14 = scalar_select 0, %s13, %s11
  // Predicated region
  $region2: #{adjust_block_forward.1} parent=0 // pred_check
    _
  $region3: #{adjust_block_forward.1} parent=0 // pred_check_branch
    %16 = sbr.rel (0) target = $region5
  $region4: #{adjust_block_forward.1} parent=0 // pred_region
    _
  $region5: #{adjust_block_forward.1} parent=0 // pred_fallthru
    _
  // Predicated region
  $region6: #{adjust_block_forward.1} parent=0 // pred_check
    _
  $region7: #{adjust_block_forward.1} parent=0 // pred_check_branch
    %18 = sbr.rel (0) target = $region9
  $region8: #{adjust_block_forward.1} parent=0 // pred_region
    _
  $region9: #{adjust_block_forward.1} parent=0 // pred_fallthru
    _
  // Predicated region
  $region10: #{adjust_block_forward.1} parent=0 // pred_check
    _
  $region11: #{adjust_block_forward.1} parent=0 // pred_check_branch
    %20 = sbr.rel (0) target = $region13
  $region12: #{adjust_block_forward.1} parent=0 // pred_region
    _
  $region13: #{adjust_block_forward.1} parent=0 // pred_fallthru
    _
  // Predicated region
  $region14: #{adjust_block_forward.1} parent=0 // pred_check
    _
  $region15: #{adjust_block_forward.1} parent=0 // pred_check_branch
    %22 = sbr.rel (0) target = $region17
  $region16: #{adjust_block_forward.1} parent=0 // pred_region
    _
  $region17: #{adjust_block_forward.1} parent=0 // pred_fallthru
    _
  // Predicated region
  $region18: #{adjust_block_forward.1} parent=0 // pred_check
    _
  $region19: #{adjust_block_forward.1} parent=0 // pred_check_branch
    %24 = sbr.rel (0) target = $region21
  $region20: #{adjust_block_forward.1} parent=0 // pred_region
    _
  $region21: #{adjust_block_forward.1} parent=0 // pred_fallthru
    _
  // Predicated region
  $region22: #{adjust_block_forward.1} parent=0 // pred_check
    _
  $region23: #{adjust_block_forward.1} parent=0 // pred_check_branch
    %26 = sbr.rel (0) target = $region25
  $region24: #{adjust_block_forward.1} parent=0 // pred_region
    _
  $region25: #{adjust_block_forward.1} parent=0 // pred_fallthru
    _
  // Predicated region
  $region26: #{adjust_block_forward.1} parent=0 // pred_check
    _
  $region27: #{adjust_block_forward.1} parent=0 // pred_check_branch
    %28 = sbr.rel (0) target = $region29
  $region28: #{adjust_block_forward.1} parent=0 // pred_region
    _
  $region29: #{adjust_block_forward.1} parent=0 // pred_fallthru
    _
  // Predicated region
  $region30: #{adjust_block_forward.1} parent=0 // pred_check
    _
  $region31: #{adjust_block_forward.1} parent=0 // pred_check_branch
    %30 = sbr.rel (0) target = $region33
  $region32: #{adjust_block_forward.1} parent=0 // pred_region
    _
  $region33: #{adjust_block_forward.1} parent=0 // pred_fallthru
    _
  // Predicated region
  $region34: #{adjust_block_forward.1} parent=0 // pred_check
    _
  $region35: #{adjust_block_forward.1} parent=0 // pred_check_branch
    %32 = sbr.rel (0) target = $region37
  $region36: #{adjust_block_forward.1} parent=0 // pred_region
    _
  $region37: #{adjust_block_forward.1} parent=0 // pred_fallthru
    _
  // Predicated region
  $region38: #{adjust_block_forward.1} parent=0 // pred_check
    _
  $region39: #{adjust_block_forward.1} parent=0 // pred_check_branch
    %34 = sbr.rel (0) target = $region41
  $region40: #{adjust_block_forward.1} parent=0 // pred_region
    _
  $region41: #{adjust_block_forward.1} parent=0 // pred_fallthru
    _
  %v35 = vlaneseq
  %v36 = vand.u32 %v35, 127
  %v37 = vand.u32 %v36, 7
  %v38 = vshra.s32 %v36, 3
  %v39 = vand.u32 %v38, 7
  %vm40 = vcmp.ge.s32.totalorder %v39, 1
  %vm41 = vcmp.le.s32.totalorder %v39, 6
  %vm42 = vcmp.ge.s32.totalorder %v37, 1
  %vm43 = vcmp.le.s32.totalorder %v37, 6
  %v44 = vld [vmem:[%s0] sm:$0xf]
  %v45 = vld [vmem:[%s1] sm:$0xf]
  %v46 = vld [vmem:[%s2] sm:$0xf]
  %v47 = vld [vmem:[%s3] sm:$0xf]
  %v48 = vld [vmem:[%s4] sm:$0xf]
  %v49 = vld [vmem:[%s5] sm:$0xf]
  %vm50 = vcmask 1043456
  %v51 = vsel %vm50, %v44, 0.0
  %52 = vadd.xlane.f32.xlu0 %v51
  %v53 = vpop.xlane.xlu0 %52
  %v54 = vmul.f32 %v44, %v44
  %v55 = vsel %vm50, %v54, 0.0
  %56 = vadd.xlane.f32.xlu0 %v55
  %v57 = vpop.xlane.xlu0 %56
  %v58 = vsel %vm50, %v45, 0.0
  %59 = vadd.xlane.f32.xlu0 %v58
  %v60 = vpop.xlane.xlu0 %59
  %v61 = vmul.f32 %v45, %v45
  %v62 = vsel %vm50, %v61, 0.0
  %63 = vadd.xlane.f32.xlu0 %v62
  %v64 = vpop.xlane.xlu0 %63
  %v65 = vadd.f32 %v53, %v60
  %v66 = vadd.f32 %v57, %v64
  %v67 = vsel %vm50, %v46, 0.0
  %68 = vadd.xlane.f32.xlu0 %v67
  %v69 = vpop.xlane.xlu0 %68
  %v70 = vmul.f32 %v46, %v46
  %v71 = vsel %vm50, %v70, 0.0
  %72 = vadd.xlane.f32.xlu0 %v71
  %v73 = vpop.xlane.xlu0 %72
  %v74 = vadd.f32 %v65, %v69
  %v75 = vadd.f32 %v66, %v73
  %v76 = vsel %vm50, %v47, 0.0
  %77 = vadd.xlane.f32.xlu0 %v76
  %v78 = vpop.xlane.xlu0 %77
  %v79 = vmul.f32 %v47, %v47
  %v80 = vsel %vm50, %v79, 0.0
  %81 = vadd.xlane.f32.xlu0 %v80
  %v82 = vpop.xlane.xlu0 %81
  %v83 = vadd.f32 %v74, %v78
  %v84 = vadd.f32 %v75, %v82
  %v85 = vmul.f32 %v83, 0.001953125
  %v86 = vmul.f32 %v84, 0.001953125
  %v87 = vmul.f32 %v85, %v85
  %v88 = vsub.f32 %v86, %v87
  %v89 = vadd.f32 %v88, 1e-05
  %v90 = vrsqrt.pop %v89
  %v91 = vmul.f32 %v48, %v90
  %v92 = vmul.f32 %v85, %v91
  %v93 = vsub.f32 %v49, %v92
  %95 = vset.pattern.permute.xlu0 0
  %96 = vperm.xlu0 %95, %v91
  %v97 = vpop.permute.xlu0 %96
  %v99 = vmul.f32 %v44, %v97
  %101 = vset.pattern.permute.xlu0 0
  %102 = vperm.xlu0 %101, %v93
  %v103 = vpop.permute.xlu0 %102
  %v105 = vadd.f32 %v99, %v103
  %v106 = vmax.f32 %v105, 0.0
  %v107 = vmul.f32 %v45, %v97
  %v108 = vadd.f32 %v107, %v103
  %v109 = vmax.f32 %v108, 0.0
  %v110 = vmul.f32 %v46, %v97
  %v111 = vadd.f32 %v110, %v103
  %v112 = vmax.f32 %v111, 0.0
  %v113 = vmul.f32 %v47, %v97
  %v114 = vadd.f32 %v113, %v103
  %v115 = vmax.f32 %v114, 0.0
  %116 = vrot.lane.b32.xlu0 %v115, 9
  %v117 = vpop.permute.xlu0 %116
  %vm118 = vmand %vm40, %vm42
  %v119 = vsel %vm118, 1, 0
  %vm120 = vcmp.eq.s32.totalorder %v119, 1
  %v121 = vsel %vm120, %v117, 0.0
  %v122 = vld [vmem:[%s6] sm:$0xff]
  %124 = vset.pattern.permute.xlu0 0
  %125 = vperm.xlu0 %124, %v122
  %v126 = vpop.permute.xlu0 %125
  %v128 = vlaneseq
  %v129 = vshrl.u32 %v128, 7
  %v130 = vsub.s32 0, %v129
  %v131 = vrot.slane %v121, %v130
  %v132 = vmul.f32 %v126, %v131
  %v133 = vadd.f32 %v132, 0.0
  %s134 = scalar_lea.vmem %s6, 8
  %v135 = vld [vmem:[%s134] sm:$0xff]
  %137 = vset.pattern.permute.xlu0 0
  %138 = vperm.xlu0 %137, %v135
  %v139 = vpop.permute.xlu0 %138
  %v141 = vlaneseq
  %v142 = vshrl.u32 %v141, 7
  %v143 = vsub.s32 1, %v142
  %v144 = vrot.slane %v121, %v143
  %v145 = vmul.f32 %v139, %v144
  %v146 = vadd.f32 %v133, %v145
  %s147 = scalar_lea.vmem %s6, 16
  %v148 = vld [vmem:[%s147] sm:$0xff]
  %150 = vset.pattern.permute.xlu0 0
  %151 = vperm.xlu0 %150, %v148
  %v152 = vpop.permute.xlu0 %151
  %v154 = vlaneseq
  %v155 = vshrl.u32 %v154, 7
  %v156 = vsub.s32 2, %v155
  %v157 = vrot.slane %v121, %v156
  %v158 = vmul.f32 %v152, %v157
  %v159 = vadd.f32 %v146, %v158
  %s160 = scalar_lea.vmem %s6, 24
  %v161 = vld [vmem:[%s160] sm:$0xff]
  %163 = vset.pattern.permute.xlu0 0
  %164 = vperm.xlu0 %163, %v161
  %v165 = vpop.permute.xlu0 %164
  %v167 = vlaneseq
  %v168 = vshrl.u32 %v167, 7
  %v169 = vsub.s32 3, %v168
  %v170 = vrot.slane %v121, %v169
  %v171 = vmul.f32 %v165, %v170
  %v172 = vadd.f32 %v159, %v171
  %173 = vrot.lane.b32.xlu0 %v112, 8
  %v174 = vpop.permute.xlu0 %173
  %v175 = vsel %vm40, 1, 0
  %vm176 = vcmp.eq.s32.totalorder %v175, 1
  %v177 = vsel %vm176, %v174, 0.0
  %s178 = scalar_lea.vmem %s6, 32
  %v179 = vld [vmem:[%s178] sm:$0xff]
  %181 = vset.pattern.permute.xlu0 0
  %182 = vperm.xlu0 %181, %v179
  %v183 = vpop.permute.xlu0 %182
  %v185 = vlaneseq
  %v186 = vshrl.u32 %v185, 7
  %v187 = vsub.s32 0, %v186
  %v188 = vrot.slane %v177, %v187
  %v189 = vmul.f32 %v183, %v188
  %v190 = vadd.f32 %v172, %v189
  %s191 = scalar_lea.vmem %s6, 40
  %v192 = vld [vmem:[%s191] sm:$0xff]
  %194 = vset.pattern.permute.xlu0 0
  %195 = vperm.xlu0 %194, %v192
  %v196 = vpop.permute.xlu0 %195
  %v198 = vlaneseq
  %v199 = vshrl.u32 %v198, 7
  %v200 = vsub.s32 1, %v199
  %v201 = vrot.slane %v177, %v200
  %v202 = vmul.f32 %v196, %v201
  %v203 = vadd.f32 %v190, %v202
  %s204 = scalar_lea.vmem %s6, 48
  %v205 = vld [vmem:[%s204] sm:$0xff]
  %207 = vset.pattern.permute.xlu0 0
  %208 = vperm.xlu0 %207, %v205
  %v209 = vpop.permute.xlu0 %208
  %v211 = vlaneseq
  %v212 = vshrl.u32 %v211, 7
  %v213 = vsub.s32 2, %v212
  %v214 = vrot.slane %v177, %v213
  %v215 = vmul.f32 %v209, %v214
  %v216 = vadd.f32 %v203, %v215
  %s217 = scalar_lea.vmem %s6, 56
  %v218 = vld [vmem:[%s217] sm:$0xff]
  %220 = vset.pattern.permute.xlu0 0
  %221 = vperm.xlu0 %220, %v218
  %v222 = vpop.permute.xlu0 %221
  %v224 = vlaneseq
  %v225 = vshrl.u32 %v224, 7
  %v226 = vsub.s32 3, %v225
  %v227 = vrot.slane %v177, %v226
  %v228 = vmul.f32 %v222, %v227
  %v229 = vadd.f32 %v216, %v228
  %230 = vrot.lane.b32.xlu0 %v115, 8
  %v231 = vpop.permute.xlu0 %230
  %v232 = vsel %vm176, %v231, 0.0
  %s233 = scalar_lea.vmem %s6, 64
  %v234 = vld [vmem:[%s233] sm:$0xff]
  %236 = vset.pattern.permute.xlu0 0
  %237 = vperm.xlu0 %236, %v234
  %v238 = vpop.permute.xlu0 %237
  %v240 = vlaneseq
  %v241 = vshrl.u32 %v240, 7
  %v242 = vsub.s32 0, %v241
  %v243 = vrot.slane %v232, %v242
  %v244 = vmul.f32 %v238, %v243
  %v245 = vadd.f32 %v229, %v244
  %s246 = scalar_lea.vmem %s6, 72
  %v247 = vld [vmem:[%s246] sm:$0xff]
  %249 = vset.pattern.permute.xlu0 0
  %250 = vperm.xlu0 %249, %v247
  %v251 = vpop.permute.xlu0 %250
  %v253 = vlaneseq
  %v254 = vshrl.u32 %v253, 7
  %v255 = vsub.s32 1, %v254
  %v256 = vrot.slane %v232, %v255
  %v257 = vmul.f32 %v251, %v256
  %v258 = vadd.f32 %v245, %v257
  %s259 = scalar_lea.vmem %s6, 80
  %v260 = vld [vmem:[%s259] sm:$0xff]
  %262 = vset.pattern.permute.xlu0 0
  %263 = vperm.xlu0 %262, %v260
  %v264 = vpop.permute.xlu0 %263
  %v266 = vlaneseq
  %v267 = vshrl.u32 %v266, 7
  %v268 = vsub.s32 2, %v267
  %v269 = vrot.slane %v232, %v268
  %v270 = vmul.f32 %v264, %v269
  %v271 = vadd.f32 %v258, %v270
  %s272 = scalar_lea.vmem %s6, 88
  %v273 = vld [vmem:[%s272] sm:$0xff]
  %275 = vset.pattern.permute.xlu0 0
  %276 = vperm.xlu0 %275, %v273
  %v277 = vpop.permute.xlu0 %276
  %v279 = vlaneseq
  %v280 = vshrl.u32 %v279, 7
  %v281 = vsub.s32 3, %v280
  %v282 = vrot.slane %v232, %v281
  %v283 = vmul.f32 %v277, %v282
  %v284 = vadd.f32 %v271, %v283
  %285 = vrot.lane.b32.xlu0 %v109, 1
  %v286 = vpop.permute.xlu0 %285
  %v287 = vsel %vm42, 1, 0
  %vm288 = vcmp.eq.s32.totalorder %v287, 1
  %v289 = vsel %vm288, %v286, 0.0
  %s290 = scalar_lea.vmem %s6, 96
  %v291 = vld [vmem:[%s290] sm:$0xff]
  %293 = vset.pattern.permute.xlu0 0
  %294 = vperm.xlu0 %293, %v291
  %v295 = vpop.permute.xlu0 %294
  %v297 = vlaneseq
  %v298 = vshrl.u32 %v297, 7
  %v299 = vsub.s32 0, %v298
  %v300 = vrot.slane %v289, %v299
  %v301 = vmul.f32 %v295, %v300
  %v302 = vadd.f32 %v284, %v301
  %s303 = scalar_lea.vmem %s6, 104
  %v304 = vld [vmem:[%s303] sm:$0xff]
  %306 = vset.pattern.permute.xlu0 0
  %307 = vperm.xlu0 %306, %v304
  %v308 = vpop.permute.xlu0 %307
  %v310 = vlaneseq
  %v311 = vshrl.u32 %v310, 7
  %v312 = vsub.s32 1, %v311
  %v313 = vrot.slane %v289, %v312
  %v314 = vmul.f32 %v308, %v313
  %v315 = vadd.f32 %v302, %v314
  %s316 = scalar_lea.vmem %s6, 112
  %v317 = vld [vmem:[%s316] sm:$0xff]
  %319 = vset.pattern.permute.xlu0 0
  %320 = vperm.xlu0 %319, %v317
  %v321 = vpop.permute.xlu0 %320
  %v323 = vlaneseq
  %v324 = vshrl.u32 %v323, 7
  %v325 = vsub.s32 2, %v324
  %v326 = vrot.slane %v289, %v325
  %v327 = vmul.f32 %v321, %v326
  %v328 = vadd.f32 %v315, %v327
  %s329 = scalar_lea.vmem %s6, 120
  %v330 = vld [vmem:[%s329] sm:$0xff]
  %332 = vset.pattern.permute.xlu0 0
  %333 = vperm.xlu0 %332, %v330
  %v334 = vpop.permute.xlu0 %333
  %v336 = vlaneseq
  %v337 = vshrl.u32 %v336, 7
  %v338 = vsub.s32 3, %v337
  %v339 = vrot.slane %v289, %v338
  %v340 = vmul.f32 %v334, %v339
  %v341 = vadd.f32 %v328, %v340
  %s342 = scalar_lea.vmem %s6, 128
  %v343 = vld [vmem:[%s342] sm:$0xff]
  %345 = vset.pattern.permute.xlu0 0
  %346 = vperm.xlu0 %345, %v343
  %v347 = vpop.permute.xlu0 %346
  %v349 = vlaneseq
  %v350 = vshrl.u32 %v349, 7
  %v351 = vsub.s32 0, %v350
  %v352 = vrot.slane %v106, %v351
  %v353 = vmul.f32 %v347, %v352
  %v354 = vadd.f32 %v341, %v353
  %s355 = scalar_lea.vmem %s6, 136
  %v356 = vld [vmem:[%s355] sm:$0xff]
  %358 = vset.pattern.permute.xlu0 0
  %359 = vperm.xlu0 %358, %v356
  %v360 = vpop.permute.xlu0 %359
  %v362 = vlaneseq
  %v363 = vshrl.u32 %v362, 7
  %v364 = vsub.s32 1, %v363
  %v365 = vrot.slane %v106, %v364
  %v366 = vmul.f32 %v360, %v365
  %v367 = vadd.f32 %v354, %v366
  %s368 = scalar_lea.vmem %s6, 144
  %v369 = vld [vmem:[%s368] sm:$0xff]
  %371 = vset.pattern.permute.xlu0 0
  %372 = vperm.xlu0 %371, %v369
  %v373 = vpop.permute.xlu0 %372
  %v375 = vlaneseq
  %v376 = vshrl.u32 %v375, 7
  %v377 = vsub.s32 2, %v376
  %v378 = vrot.slane %v106, %v377
  %v379 = vmul.f32 %v373, %v378
  %v380 = vadd.f32 %v367, %v379
  %s381 = scalar_lea.vmem %s6, 152
  %v382 = vld [vmem:[%s381] sm:$0xff]
  %384 = vset.pattern.permute.xlu0 0
  %385 = vperm.xlu0 %384, %v382
  %v386 = vpop.permute.xlu0 %385
  %v388 = vlaneseq
  %v389 = vshrl.u32 %v388, 7
  %v390 = vsub.s32 3, %v389
  %v391 = vrot.slane %v106, %v390
  %v392 = vmul.f32 %v386, %v391
  %v393 = vadd.f32 %v380, %v392
  %s394 = scalar_lea.vmem %s6, 160
  %v395 = vld [vmem:[%s394] sm:$0xff]
  %397 = vset.pattern.permute.xlu0 0
  %398 = vperm.xlu0 %397, %v395
  %v399 = vpop.permute.xlu0 %398
  %v401 = vlaneseq
  %v402 = vshrl.u32 %v401, 7
  %v403 = vsub.s32 0, %v402
  %v404 = vrot.slane %v109, %v403
  %v405 = vmul.f32 %v399, %v404
  %v406 = vadd.f32 %v393, %v405
  %s407 = scalar_lea.vmem %s6, 168
  %v408 = vld [vmem:[%s407] sm:$0xff]
  %410 = vset.pattern.permute.xlu0 0
  %411 = vperm.xlu0 %410, %v408
  %v412 = vpop.permute.xlu0 %411
  %v414 = vlaneseq
  %v415 = vshrl.u32 %v414, 7
  %v416 = vsub.s32 1, %v415
  %v417 = vrot.slane %v109, %v416
  %v418 = vmul.f32 %v412, %v417
  %v419 = vadd.f32 %v406, %v418
  %s420 = scalar_lea.vmem %s6, 176
  %v421 = vld [vmem:[%s420] sm:$0xff]
  %423 = vset.pattern.permute.xlu0 0
  %424 = vperm.xlu0 %423, %v421
  %v425 = vpop.permute.xlu0 %424
  %v427 = vlaneseq
  %v428 = vshrl.u32 %v427, 7
  %v429 = vsub.s32 2, %v428
  %v430 = vrot.slane %v109, %v429
  %v431 = vmul.f32 %v425, %v430
  %v432 = vadd.f32 %v419, %v431
  %s433 = scalar_lea.vmem %s6, 184
  %v434 = vld [vmem:[%s433] sm:$0xff]
  %436 = vset.pattern.permute.xlu0 0
  %437 = vperm.xlu0 %436, %v434
  %v438 = vpop.permute.xlu0 %437
  %v440 = vlaneseq
  %v441 = vshrl.u32 %v440, 7
  %v442 = vsub.s32 3, %v441
  %v443 = vrot.slane %v109, %v442
  %v444 = vmul.f32 %v438, %v443
  %v445 = vadd.f32 %v432, %v444
  %446 = vrot.lane.b32.xlu0 %v115, 1
  %v447 = vpop.permute.xlu0 %446
  %v448 = vsel %vm288, %v447, 0.0
  %s449 = scalar_lea.vmem %s6, 192
  %v450 = vld [vmem:[%s449] sm:$0xff]
  %452 = vset.pattern.permute.xlu0 0
  %453 = vperm.xlu0 %452, %v450
  %v454 = vpop.permute.xlu0 %453
  %v456 = vlaneseq
  %v457 = vshrl.u32 %v456, 7
  %v458 = vsub.s32 0, %v457
  %v459 = vrot.slane %v448, %v458
  %v460 = vmul.f32 %v454, %v459
  %v461 = vadd.f32 %v445, %v460
  %s462 = scalar_lea.vmem %s6, 200
  %v463 = vld [vmem:[%s462] sm:$0xff]
  %465 = vset.pattern.permute.xlu0 0
  %466 = vperm.xlu0 %465, %v463
  %v467 = vpop.permute.xlu0 %466
  %v469 = vlaneseq
  %v470 = vshrl.u32 %v469, 7
  %v471 = vsub.s32 1, %v470
  %v472 = vrot.slane %v448, %v471
  %v473 = vmul.f32 %v467, %v472
  %v474 = vadd.f32 %v461, %v473
  %s475 = scalar_lea.vmem %s6, 208
  %v476 = vld [vmem:[%s475] sm:$0xff]
  %478 = vset.pattern.permute.xlu0 0
  %479 = vperm.xlu0 %478, %v476
  %v480 = vpop.permute.xlu0 %479
  %v482 = vlaneseq
  %v483 = vshrl.u32 %v482, 7
  %v484 = vsub.s32 2, %v483
  %v485 = vrot.slane %v448, %v484
  %v486 = vmul.f32 %v480, %v485
  %v487 = vadd.f32 %v474, %v486
  %s488 = scalar_lea.vmem %s6, 216
  %v489 = vld [vmem:[%s488] sm:$0xff]
  %491 = vset.pattern.permute.xlu0 0
  %492 = vperm.xlu0 %491, %v489
  %v493 = vpop.permute.xlu0 %492
  %v495 = vlaneseq
  %v496 = vshrl.u32 %v495, 7
  %v497 = vsub.s32 3, %v496
  %v498 = vrot.slane %v448, %v497
  %v499 = vmul.f32 %v493, %v498
  %v500 = vadd.f32 %v487, %v499
  %s501 = scalar_lea.vmem %s6, 224
  %v502 = vld [vmem:[%s501] sm:$0xff]
  %504 = vset.pattern.permute.xlu0 0
  %505 = vperm.xlu0 %504, %v502
  %v506 = vpop.permute.xlu0 %505
  %v508 = vlaneseq
  %v509 = vshrl.u32 %v508, 7
  %v510 = vsub.s32 0, %v509
  %v511 = vrot.slane %v112, %v510
  %v512 = vmul.f32 %v506, %v511
  %v513 = vadd.f32 %v500, %v512
  %s514 = scalar_lea.vmem %s6, 232
  %v515 = vld [vmem:[%s514] sm:$0xff]
  %517 = vset.pattern.permute.xlu0 0
  %518 = vperm.xlu0 %517, %v515
  %v519 = vpop.permute.xlu0 %518
  %v521 = vlaneseq
  %v522 = vshrl.u32 %v521, 7
  %v523 = vsub.s32 1, %v522
  %v524 = vrot.slane %v112, %v523
  %v525 = vmul.f32 %v519, %v524
  %v526 = vadd.f32 %v513, %v525
  %s527 = scalar_lea.vmem %s6, 240
  %v528 = vld [vmem:[%s527] sm:$0xff]
  %530 = vset.pattern.permute.xlu0 0
  %531 = vperm.xlu0 %530, %v528
  %v532 = vpop.permute.xlu0 %531
  %v534 = vlaneseq
  %v535 = vshrl.u32 %v534, 7
  %v536 = vsub.s32 2, %v535
  %v537 = vrot.slane %v112, %v536
  %v538 = vmul.f32 %v532, %v537
  %v539 = vadd.f32 %v526, %v538
  %s540 = scalar_lea.vmem %s6, 248
  %v541 = vld [vmem:[%s540] sm:$0xff]
  %543 = vset.pattern.permute.xlu0 0
  %544 = vperm.xlu0 %543, %v541
  %v545 = vpop.permute.xlu0 %544
  %v547 = vlaneseq
  %v548 = vshrl.u32 %v547, 7
  %v549 = vsub.s32 3, %v548
  %v550 = vrot.slane %v112, %v549
  %v551 = vmul.f32 %v545, %v550
  %v552 = vadd.f32 %v539, %v551
  %s553 = scalar_lea.vmem %s6, 256
  %v554 = vld [vmem:[%s553] sm:$0xff]
  %556 = vset.pattern.permute.xlu0 0
  %557 = vperm.xlu0 %556, %v554
  %v558 = vpop.permute.xlu0 %557
  %v560 = vlaneseq
  %v561 = vshrl.u32 %v560, 7
  %v562 = vsub.s32 0, %v561
  %v563 = vrot.slane %v115, %v562
  %v564 = vmul.f32 %v558, %v563
  %v565 = vadd.f32 %v552, %v564
  %s566 = scalar_lea.vmem %s6, 264
  %v567 = vld [vmem:[%s566] sm:$0xff]
  %569 = vset.pattern.permute.xlu0 0
  %570 = vperm.xlu0 %569, %v567
  %v571 = vpop.permute.xlu0 %570
  %v573 = vlaneseq
  %v574 = vshrl.u32 %v573, 7
  %v575 = vsub.s32 1, %v574
  %v576 = vrot.slane %v115, %v575
  %v577 = vmul.f32 %v571, %v576
  %v578 = vadd.f32 %v565, %v577
  %s579 = scalar_lea.vmem %s6, 272
  %v580 = vld [vmem:[%s579] sm:$0xff]
  %582 = vset.pattern.permute.xlu0 0
  %583 = vperm.xlu0 %582, %v580
  %v584 = vpop.permute.xlu0 %583
  %v586 = vlaneseq
  %v587 = vshrl.u32 %v586, 7
  %v588 = vsub.s32 2, %v587
  %v589 = vrot.slane %v115, %v588
  %v590 = vmul.f32 %v584, %v589
  %v591 = vadd.f32 %v578, %v590
  %s592 = scalar_lea.vmem %s6, 280
  %v593 = vld [vmem:[%s592] sm:$0xff]
  %595 = vset.pattern.permute.xlu0 0
  %596 = vperm.xlu0 %595, %v593
  %v597 = vpop.permute.xlu0 %596
  %v599 = vlaneseq
  %v600 = vshrl.u32 %v599, 7
  %v601 = vsub.s32 3, %v600
  %v602 = vrot.slane %v115, %v601
  %v603 = vmul.f32 %v597, %v602
  %v604 = vadd.f32 %v591, %v603
  %v605 = vld [vmem:[%s7] sm:$0xff]
  %v606 = vld [vmem:[%s8] sm:$0xff]
  %607 = vadd.xlane.f32.xlu0 %v604
  %v608 = vpop.xlane.xlu0 %607
  %v609 = vmul.f32 %v604, %v604
  %610 = vadd.xlane.f32.xlu0 %v609
  %v611 = vpop.xlane.xlu0 %610
  %v612 = vmul.f32 %v608, 0.0078125
  %v613 = vmul.f32 %v611, 0.0078125
  %v614 = vmul.f32 %v612, %v612
  %v615 = vsub.f32 %v613, %v614
  %v616 = vadd.f32 %v615, 1e-05
  %v617 = vrsqrt.pop %v616
  %v618 = vmul.f32 %v605, %v617
  %v619 = vmul.f32 %v612, %v618
  %v620 = vsub.f32 %v606, %v619
  %622 = vset.pattern.permute.xlu0 0
  %623 = vperm.xlu0 %622, %v618
  %v624 = vpop.permute.xlu0 %623
  %v626 = vmul.f32 %v604, %v624
  %628 = vset.pattern.permute.xlu0 0
  %629 = vperm.xlu0 %628, %v620
  %v630 = vpop.permute.xlu0 %629
  %v632 = vadd.f32 %v626, %v630
  %v633 = vmax.f32 %v632, 0.0
  %634 = vrot.lane.b32.xlu0 %v633, 9
  %v635 = vpop.permute.xlu0 %634
  %v636 = vsel %vm120, %v635, 0.0
  %v637 = vld [vmem:[%s9] sm:$0xff]
  %639 = vset.pattern.permute.xlu0 0
  %640 = vperm.xlu0 %639, %v637
  %v641 = vpop.permute.xlu0 %640
  %v643 = vlaneseq
  %v644 = vshrl.u32 %v643, 7
  %v645 = vsub.s32 0, %v644
  %v646 = vrot.slane %v636, %v645
  %v647 = vmul.f32 %v641, %v646
  %v648 = vadd.f32 %v647, 0.0
  %s649 = scalar_lea.vmem %s9, 8
  %v650 = vld [vmem:[%s649] sm:$0xff]
  %652 = vset.pattern.permute.xlu0 0
  %653 = vperm.xlu0 %652, %v650
  %v654 = vpop.permute.xlu0 %653
  %v656 = vlaneseq
  %v657 = vshrl.u32 %v656, 7
  %v658 = vsub.s32 1, %v657
  %v659 = vrot.slane %v636, %v658
  %v660 = vmul.f32 %v654, %v659
  %v661 = vadd.f32 %v648, %v660
  %s662 = scalar_lea.vmem %s9, 16
  %v663 = vld [vmem:[%s662] sm:$0xff]
  %665 = vset.pattern.permute.xlu0 0
  %666 = vperm.xlu0 %665, %v663
  %v667 = vpop.permute.xlu0 %666
  %v669 = vlaneseq
  %v670 = vshrl.u32 %v669, 7
  %v671 = vsub.s32 2, %v670
  %v672 = vrot.slane %v636, %v671
  %v673 = vmul.f32 %v667, %v672
  %v674 = vadd.f32 %v661, %v673
  %s675 = scalar_lea.vmem %s9, 24
  %v676 = vld [vmem:[%s675] sm:$0xff]
  %678 = vset.pattern.permute.xlu0 0
  %679 = vperm.xlu0 %678, %v676
  %v680 = vpop.permute.xlu0 %679
  %v682 = vlaneseq
  %v683 = vshrl.u32 %v682, 7
  %v684 = vsub.s32 3, %v683
  %v685 = vrot.slane %v636, %v684
  %v686 = vmul.f32 %v680, %v685
  %v687 = vadd.f32 %v674, %v686
  %s688 = scalar_lea.vmem %s9, 32
  %v689 = vld [vmem:[%s688] sm:$0xff]
  %691 = vset.pattern.permute.xlu0 0
  %692 = vperm.xlu0 %691, %v689
  %v693 = vpop.permute.xlu0 %692
  %v695 = vlaneseq
  %v696 = vshrl.u32 %v695, 7
  %v697 = vsub.s32 4, %v696
  %v698 = vrot.slane %v636, %v697
  %v699 = vmul.f32 %v693, %v698
  %v700 = vadd.f32 %v687, %v699
  %s701 = scalar_lea.vmem %s9, 40
  %v702 = vld [vmem:[%s701] sm:$0xff]
  %704 = vset.pattern.permute.xlu0 0
  %705 = vperm.xlu0 %704, %v702
  %v706 = vpop.permute.xlu0 %705
  %v708 = vlaneseq
  %v709 = vshrl.u32 %v708, 7
  %v710 = vsub.s32 5, %v709
  %v711 = vrot.slane %v636, %v710
  %v712 = vmul.f32 %v706, %v711
  %v713 = vadd.f32 %v700, %v712
  %s714 = scalar_lea.vmem %s9, 48
  %v715 = vld [vmem:[%s714] sm:$0xff]
  %717 = vset.pattern.permute.xlu0 0
  %718 = vperm.xlu0 %717, %v715
  %v719 = vpop.permute.xlu0 %718
  %v721 = vlaneseq
  %v722 = vshrl.u32 %v721, 7
  %v723 = vsub.s32 6, %v722
  %v724 = vrot.slane %v636, %v723
  %v725 = vmul.f32 %v719, %v724
  %v726 = vadd.f32 %v713, %v725
  %s727 = scalar_lea.vmem %s9, 56
  %v728 = vld [vmem:[%s727] sm:$0xff]
  %730 = vset.pattern.permute.xlu0 0
  %731 = vperm.xlu0 %730, %v728
  %v732 = vpop.permute.xlu0 %731
  %v734 = vlaneseq
  %v735 = vshrl.u32 %v734, 7
  %v736 = vsub.s32 7, %v735
  %v737 = vrot.slane %v636, %v736
  %v738 = vmul.f32 %v732, %v737
  %v739 = vadd.f32 %v726, %v738
  %740 = vrot.lane.b32.xlu0 %v633, 8
  %v741 = vpop.permute.xlu0 %740
  %v742 = vsel %vm176, %v741, 0.0
  %s743 = scalar_lea.vmem %s9, 64
  %v744 = vld [vmem:[%s743] sm:$0xff]
  %746 = vset.pattern.permute.xlu0 0
  %747 = vperm.xlu0 %746, %v744
  %v748 = vpop.permute.xlu0 %747
  %v750 = vlaneseq
  %v751 = vshrl.u32 %v750, 7
  %v752 = vsub.s32 0, %v751
  %v753 = vrot.slane %v742, %v752
  %v754 = vmul.f32 %v748, %v753
  %v755 = vadd.f32 %v739, %v754
  %s756 = scalar_lea.vmem %s9, 72
  %v757 = vld [vmem:[%s756] sm:$0xff]
  %759 = vset.pattern.permute.xlu0 0
  %760 = vperm.xlu0 %759, %v757
  %v761 = vpop.permute.xlu0 %760
  %v763 = vlaneseq
  %v764 = vshrl.u32 %v763, 7
  %v765 = vsub.s32 1, %v764
  %v766 = vrot.slane %v742, %v765
  %v767 = vmul.f32 %v761, %v766
  %v768 = vadd.f32 %v755, %v767
  %s769 = scalar_lea.vmem %s9, 80
  %v770 = vld [vmem:[%s769] sm:$0xff]
  %772 = vset.pattern.permute.xlu0 0
  %773 = vperm.xlu0 %772, %v770
  %v774 = vpop.permute.xlu0 %773
  %v776 = vlaneseq
  %v777 = vshrl.u32 %v776, 7
  %v778 = vsub.s32 2, %v777
  %v779 = vrot.slane %v742, %v778
  %v780 = vmul.f32 %v774, %v779
  %v781 = vadd.f32 %v768, %v780
  %s782 = scalar_lea.vmem %s9, 88
  %v783 = vld [vmem:[%s782] sm:$0xff]
  %785 = vset.pattern.permute.xlu0 0
  %786 = vperm.xlu0 %785, %v783
  %v787 = vpop.permute.xlu0 %786
  %v789 = vlaneseq
  %v790 = vshrl.u32 %v789, 7
  %v791 = vsub.s32 3, %v790
  %v792 = vrot.slane %v742, %v791
  %v793 = vmul.f32 %v787, %v792
  %v794 = vadd.f32 %v781, %v793
  %s795 = scalar_lea.vmem %s9, 96
  %v796 = vld [vmem:[%s795] sm:$0xff]
  %798 = vset.pattern.permute.xlu0 0
  %799 = vperm.xlu0 %798, %v796
  %v800 = vpop.permute.xlu0 %799
  %v802 = vlaneseq
  %v803 = vshrl.u32 %v802, 7
  %v804 = vsub.s32 4, %v803
  %v805 = vrot.slane %v742, %v804
  %v806 = vmul.f32 %v800, %v805
  %v807 = vadd.f32 %v794, %v806
  %s808 = scalar_lea.vmem %s9, 104
  %v809 = vld [vmem:[%s808] sm:$0xff]
  %811 = vset.pattern.permute.xlu0 0
  %812 = vperm.xlu0 %811, %v809
  %v813 = vpop.permute.xlu0 %812
  %v815 = vlaneseq
  %v816 = vshrl.u32 %v815, 7
  %v817 = vsub.s32 5, %v816
  %v818 = vrot.slane %v742, %v817
  %v819 = vmul.f32 %v813, %v818
  %v820 = vadd.f32 %v807, %v819
  %s821 = scalar_lea.vmem %s9, 112
  %v822 = vld [vmem:[%s821] sm:$0xff]
  %824 = vset.pattern.permute.xlu0 0
  %825 = vperm.xlu0 %824, %v822
  %v826 = vpop.permute.xlu0 %825
  %v828 = vlaneseq
  %v829 = vshrl.u32 %v828, 7
  %v830 = vsub.s32 6, %v829
  %v831 = vrot.slane %v742, %v830
  %v832 = vmul.f32 %v826, %v831
  %v833 = vadd.f32 %v820, %v832
  %s834 = scalar_lea.vmem %s9, 120
  %v835 = vld [vmem:[%s834] sm:$0xff]
  %837 = vset.pattern.permute.xlu0 0
  %838 = vperm.xlu0 %837, %v835
  %v839 = vpop.permute.xlu0 %838
  %v841 = vlaneseq
  %v842 = vshrl.u32 %v841, 7
  %v843 = vsub.s32 7, %v842
  %v844 = vrot.slane %v742, %v843
  %v845 = vmul.f32 %v839, %v844
  %v846 = vadd.f32 %v833, %v845
  %847 = vrot.lane.b32.xlu0 %v633, 7
  %v848 = vpop.permute.xlu0 %847
  %vm849 = vmand %vm40, %vm43
  %v850 = vsel %vm849, 1, 0
  %vm851 = vcmp.eq.s32.totalorder %v850, 1
  %v852 = vsel %vm851, %v848, 0.0
  %s853 = scalar_lea.vmem %s9, 128
  %v854 = vld [vmem:[%s853] sm:$0xff]
  %856 = vset.pattern.permute.xlu0 0
  %857 = vperm.xlu0 %856, %v854
  %v858 = vpop.permute.xlu0 %857
  %v860 = vlaneseq
  %v861 = vshrl.u32 %v860, 7
  %v862 = vsub.s32 0, %v861
  %v863 = vrot.slane %v852, %v862
  %v864 = vmul.f32 %v858, %v863
  %v865 = vadd.f32 %v846, %v864
  %s866 = scalar_lea.vmem %s9, 136
  %v867 = vld [vmem:[%s866] sm:$0xff]
  %869 = vset.pattern.permute.xlu0 0
  %870 = vperm.xlu0 %869, %v867
  %v871 = vpop.permute.xlu0 %870
  %v873 = vlaneseq
  %v874 = vshrl.u32 %v873, 7
  %v875 = vsub.s32 1, %v874
  %v876 = vrot.slane %v852, %v875
  %v877 = vmul.f32 %v871, %v876
  %v878 = vadd.f32 %v865, %v877
  %s879 = scalar_lea.vmem %s9, 144
  %v880 = vld [vmem:[%s879] sm:$0xff]
  %882 = vset.pattern.permute.xlu0 0
  %883 = vperm.xlu0 %882, %v880
  %v884 = vpop.permute.xlu0 %883
  %v886 = vlaneseq
  %v887 = vshrl.u32 %v886, 7
  %v888 = vsub.s32 2, %v887
  %v889 = vrot.slane %v852, %v888
  %v890 = vmul.f32 %v884, %v889
  %v891 = vadd.f32 %v878, %v890
  %s892 = scalar_lea.vmem %s9, 152
  %v893 = vld [vmem:[%s892] sm:$0xff]
  %895 = vset.pattern.permute.xlu0 0
  %896 = vperm.xlu0 %895, %v893
  %v897 = vpop.permute.xlu0 %896
  %v899 = vlaneseq
  %v900 = vshrl.u32 %v899, 7
  %v901 = vsub.s32 3, %v900
  %v902 = vrot.slane %v852, %v901
  %v903 = vmul.f32 %v897, %v902
  %v904 = vadd.f32 %v891, %v903
  %s905 = scalar_lea.vmem %s9, 160
  %v906 = vld [vmem:[%s905] sm:$0xff]
  %908 = vset.pattern.permute.xlu0 0
  %909 = vperm.xlu0 %908, %v906
  %v910 = vpop.permute.xlu0 %909
  %v912 = vlaneseq
  %v913 = vshrl.u32 %v912, 7
  %v914 = vsub.s32 4, %v913
  %v915 = vrot.slane %v852, %v914
  %v916 = vmul.f32 %v910, %v915
  %v917 = vadd.f32 %v904, %v916
  %s918 = scalar_lea.vmem %s9, 168
  %v919 = vld [vmem:[%s918] sm:$0xff]
  %921 = vset.pattern.permute.xlu0 0
  %922 = vperm.xlu0 %921, %v919
  %v923 = vpop.permute.xlu0 %922
  %v925 = vlaneseq
  %v926 = vshrl.u32 %v925, 7
  %v927 = vsub.s32 5, %v926
  %v928 = vrot.slane %v852, %v927
  %v929 = vmul.f32 %v923, %v928
  %v930 = vadd.f32 %v917, %v929
  %s931 = scalar_lea.vmem %s9, 176
  %v932 = vld [vmem:[%s931] sm:$0xff]
  %934 = vset.pattern.permute.xlu0 0
  %935 = vperm.xlu0 %934, %v932
  %v936 = vpop.permute.xlu0 %935
  %v938 = vlaneseq
  %v939 = vshrl.u32 %v938, 7
  %v940 = vsub.s32 6, %v939
  %v941 = vrot.slane %v852, %v940
  %v942 = vmul.f32 %v936, %v941
  %v943 = vadd.f32 %v930, %v942
  %s944 = scalar_lea.vmem %s9, 184
  %v945 = vld [vmem:[%s944] sm:$0xff]
  %947 = vset.pattern.permute.xlu0 0
  %948 = vperm.xlu0 %947, %v945
  %v949 = vpop.permute.xlu0 %948
  %v951 = vlaneseq
  %v952 = vshrl.u32 %v951, 7
  %v953 = vsub.s32 7, %v952
  %v954 = vrot.slane %v852, %v953
  %v955 = vmul.f32 %v949, %v954
  %v956 = vadd.f32 %v943, %v955
  %957 = vrot.lane.b32.xlu0 %v633, 1
  %v958 = vpop.permute.xlu0 %957
  %v959 = vsel %vm288, %v958, 0.0
  %s960 = scalar_lea.vmem %s9, 192
  %v961 = vld [vmem:[%s960] sm:$0xff]
  %963 = vset.pattern.permute.xlu0 0
  %964 = vperm.xlu0 %963, %v961
  %v965 = vpop.permute.xlu0 %964
  %v967 = vlaneseq
  %v968 = vshrl.u32 %v967, 7
  %v969 = vsub.s32 0, %v968
  %v970 = vrot.slane %v959, %v969
  %v971 = vmul.f32 %v965, %v970
  %v972 = vadd.f32 %v956, %v971
  %s973 = scalar_lea.vmem %s9, 200
  %v974 = vld [vmem:[%s973] sm:$0xff]
  %976 = vset.pattern.permute.xlu0 0
  %977 = vperm.xlu0 %976, %v974
  %v978 = vpop.permute.xlu0 %977
  %v980 = vlaneseq
  %v981 = vshrl.u32 %v980, 7
  %v982 = vsub.s32 1, %v981
  %v983 = vrot.slane %v959, %v982
  %v984 = vmul.f32 %v978, %v983
  %v985 = vadd.f32 %v972, %v984
  %s986 = scalar_lea.vmem %s9, 208
  %v987 = vld [vmem:[%s986] sm:$0xff]
  %989 = vset.pattern.permute.xlu0 0
  %990 = vperm.xlu0 %989, %v987
  %v991 = vpop.permute.xlu0 %990
  %v993 = vlaneseq
  %v994 = vshrl.u32 %v993, 7
  %v995 = vsub.s32 2, %v994
  %v996 = vrot.slane %v959, %v995
  %v997 = vmul.f32 %v991, %v996
  %v998 = vadd.f32 %v985, %v997
  %s999 = scalar_lea.vmem %s9, 216
  %v1000 = vld [vmem:[%s999] sm:$0xff]
  %1002 = vset.pattern.permute.xlu0 0
  %1003 = vperm.xlu0 %1002, %v1000
  %v1004 = vpop.permute.xlu0 %1003
  %v1006 = vlaneseq
  %v1007 = vshrl.u32 %v1006, 7
  %v1008 = vsub.s32 3, %v1007
  %v1009 = vrot.slane %v959, %v1008
  %v1010 = vmul.f32 %v1004, %v1009
  %v1011 = vadd.f32 %v998, %v1010
  %s1012 = scalar_lea.vmem %s9, 224
  %v1013 = vld [vmem:[%s1012] sm:$0xff]
  %1015 = vset.pattern.permute.xlu0 0
  %1016 = vperm.xlu0 %1015, %v1013
  %v1017 = vpop.permute.xlu0 %1016
  %v1019 = vlaneseq
  %v1020 = vshrl.u32 %v1019, 7
  %v1021 = vsub.s32 4, %v1020
  %v1022 = vrot.slane %v959, %v1021
  %v1023 = vmul.f32 %v1017, %v1022
  %v1024 = vadd.f32 %v1011, %v1023
  %s1025 = scalar_lea.vmem %s9, 232
  %v1026 = vld [vmem:[%s1025] sm:$0xff]
  %1028 = vset.pattern.permute.xlu0 0
  %1029 = vperm.xlu0 %1028, %v1026
  %v1030 = vpop.permute.xlu0 %1029
  %v1032 = vlaneseq
  %v1033 = vshrl.u32 %v1032, 7
  %v1034 = vsub.s32 5, %v1033
  %v1035 = vrot.slane %v959, %v1034
  %v1036 = vmul.f32 %v1030, %v1035
  %v1037 = vadd.f32 %v1024, %v1036
  %s1038 = scalar_lea.vmem %s9, 240
  %v1039 = vld [vmem:[%s1038] sm:$0xff]
  %1041 = vset.pattern.permute.xlu0 0
  %1042 = vperm.xlu0 %1041, %v1039
  %v1043 = vpop.permute.xlu0 %1042
  %v1045 = vlaneseq
  %v1046 = vshrl.u32 %v1045, 7
  %v1047 = vsub.s32 6, %v1046
  %v1048 = vrot.slane %v959, %v1047
  %v1049 = vmul.f32 %v1043, %v1048
  %v1050 = vadd.f32 %v1037, %v1049
  %s1051 = scalar_lea.vmem %s9, 248
  %v1052 = vld [vmem:[%s1051] sm:$0xff]
  %1054 = vset.pattern.permute.xlu0 0
  %1055 = vperm.xlu0 %1054, %v1052
  %v1056 = vpop.permute.xlu0 %1055
  %v1058 = vlaneseq
  %v1059 = vshrl.u32 %v1058, 7
  %v1060 = vsub.s32 7, %v1059
  %v1061 = vrot.slane %v959, %v1060
  %v1062 = vmul.f32 %v1056, %v1061
  %v1063 = vadd.f32 %v1050, %v1062
  %s1064 = scalar_lea.vmem %s9, 256
  %v1065 = vld [vmem:[%s1064] sm:$0xff]
  %1067 = vset.pattern.permute.xlu0 0
  %1068 = vperm.xlu0 %1067, %v1065
  %v1069 = vpop.permute.xlu0 %1068
  %v1071 = vlaneseq
  %v1072 = vshrl.u32 %v1071, 7
  %v1073 = vsub.s32 0, %v1072
  %v1074 = vrot.slane %v633, %v1073
  %v1075 = vmul.f32 %v1069, %v1074
  %v1076 = vadd.f32 %v1063, %v1075
  %s1077 = scalar_lea.vmem %s9, 264
  %v1078 = vld [vmem:[%s1077] sm:$0xff]
  %1080 = vset.pattern.permute.xlu0 0
  %1081 = vperm.xlu0 %1080, %v1078
  %v1082 = vpop.permute.xlu0 %1081
  %v1084 = vlaneseq
  %v1085 = vshrl.u32 %v1084, 7
  %v1086 = vsub.s32 1, %v1085
  %v1087 = vrot.slane %v633, %v1086
  %v1088 = vmul.f32 %v1082, %v1087
  %v1089 = vadd.f32 %v1076, %v1088
  %s1090 = scalar_lea.vmem %s9, 272
  %v1091 = vld [vmem:[%s1090] sm:$0xff]
  %1093 = vset.pattern.permute.xlu0 0
  %1094 = vperm.xlu0 %1093, %v1091
  %v1095 = vpop.permute.xlu0 %1094
  %v1097 = vlaneseq
  %v1098 = vshrl.u32 %v1097, 7
  %v1099 = vsub.s32 2, %v1098
  %v1100 = vrot.slane %v633, %v1099
  %v1101 = vmul.f32 %v1095, %v1100
  %v1102 = vadd.f32 %v1089, %v1101
  %s1103 = scalar_lea.vmem %s9, 280
  %v1104 = vld [vmem:[%s1103] sm:$0xff]
  %1106 = vset.pattern.permute.xlu0 0
  %1107 = vperm.xlu0 %1106, %v1104
  %v1108 = vpop.permute.xlu0 %1107
  %v1110 = vlaneseq
  %v1111 = vshrl.u32 %v1110, 7
  %v1112 = vsub.s32 3, %v1111
  %v1113 = vrot.slane %v633, %v1112
  %v1114 = vmul.f32 %v1108, %v1113
  %v1115 = vadd.f32 %v1102, %v1114
  %s1116 = scalar_lea.vmem %s9, 288
  %v1117 = vld [vmem:[%s1116] sm:$0xff]
  %1119 = vset.pattern.permute.xlu0 0
  %1120 = vperm.xlu0 %1119, %v1117
  %v1121 = vpop.permute.xlu0 %1120
  %v1123 = vlaneseq
  %v1124 = vshrl.u32 %v1123, 7
  %v1125 = vsub.s32 4, %v1124
  %v1126 = vrot.slane %v633, %v1125
  %v1127 = vmul.f32 %v1121, %v1126
  %v1128 = vadd.f32 %v1115, %v1127
  %s1129 = scalar_lea.vmem %s9, 296
  %v1130 = vld [vmem:[%s1129] sm:$0xff]
  %1132 = vset.pattern.permute.xlu0 0
  %1133 = vperm.xlu0 %1132, %v1130
  %v1134 = vpop.permute.xlu0 %1133
  %v1136 = vlaneseq
  %v1137 = vshrl.u32 %v1136, 7
  %v1138 = vsub.s32 5, %v1137
  %v1139 = vrot.slane %v633, %v1138
  %v1140 = vmul.f32 %v1134, %v1139
  %v1141 = vadd.f32 %v1128, %v1140
  %s1142 = scalar_lea.vmem %s9, 304
  %v1143 = vld [vmem:[%s1142] sm:$0xff]
  %1145 = vset.pattern.permute.xlu0 0
  %1146 = vperm.xlu0 %1145, %v1143
  %v1147 = vpop.permute.xlu0 %1146
  %v1149 = vlaneseq
  %v1150 = vshrl.u32 %v1149, 7
  %v1151 = vsub.s32 6, %v1150
  %v1152 = vrot.slane %v633, %v1151
  %v1153 = vmul.f32 %v1147, %v1152
  %v1154 = vadd.f32 %v1141, %v1153
  %s1155 = scalar_lea.vmem %s9, 312
  %v1156 = vld [vmem:[%s1155] sm:$0xff]
  %1158 = vset.pattern.permute.xlu0 0
  %1159 = vperm.xlu0 %1158, %v1156
  %v1160 = vpop.permute.xlu0 %1159
  %v1162 = vlaneseq
  %v1163 = vshrl.u32 %v1162, 7
  %v1164 = vsub.s32 7, %v1163
  %v1165 = vrot.slane %v633, %v1164
  %v1166 = vmul.f32 %v1160, %v1165
  %v1167 = vadd.f32 %v1154, %v1166
  %1168 = vrot.lane.b32.xlu0 %v633, 127
  %v1169 = vpop.permute.xlu0 %1168
  %v1170 = vsel %vm43, 1, 0
  %vm1171 = vcmp.eq.s32.totalorder %v1170, 1
  %v1172 = vsel %vm1171, %v1169, 0.0
  %s1173 = scalar_lea.vmem %s9, 320
  %v1174 = vld [vmem:[%s1173] sm:$0xff]
  %1176 = vset.pattern.permute.xlu0 0
  %1177 = vperm.xlu0 %1176, %v1174
  %v1178 = vpop.permute.xlu0 %1177
  %v1180 = vlaneseq
  %v1181 = vshrl.u32 %v1180, 7
  %v1182 = vsub.s32 0, %v1181
  %v1183 = vrot.slane %v1172, %v1182
  %v1184 = vmul.f32 %v1178, %v1183
  %v1185 = vadd.f32 %v1167, %v1184
  %s1186 = scalar_lea.vmem %s9, 328
  %v1187 = vld [vmem:[%s1186] sm:$0xff]
  %1189 = vset.pattern.permute.xlu0 0
  %1190 = vperm.xlu0 %1189, %v1187
  %v1191 = vpop.permute.xlu0 %1190
  %v1193 = vlaneseq
  %v1194 = vshrl.u32 %v1193, 7
  %v1195 = vsub.s32 1, %v1194
  %v1196 = vrot.slane %v1172, %v1195
  %v1197 = vmul.f32 %v1191, %v1196
  %v1198 = vadd.f32 %v1185, %v1197
  %s1199 = scalar_lea.vmem %s9, 336
  %v1200 = vld [vmem:[%s1199] sm:$0xff]
  %1202 = vset.pattern.permute.xlu0 0
  %1203 = vperm.xlu0 %1202, %v1200
  %v1204 = vpop.permute.xlu0 %1203
  %v1206 = vlaneseq
  %v1207 = vshrl.u32 %v1206, 7
  %v1208 = vsub.s32 2, %v1207
  %v1209 = vrot.slane %v1172, %v1208
  %v1210 = vmul.f32 %v1204, %v1209
  %v1211 = vadd.f32 %v1198, %v1210
  %s1212 = scalar_lea.vmem %s9, 344
  %v1213 = vld [vmem:[%s1212] sm:$0xff]
  %1215 = vset.pattern.permute.xlu0 0
  %1216 = vperm.xlu0 %1215, %v1213
  %v1217 = vpop.permute.xlu0 %1216
  %v1219 = vlaneseq
  %v1220 = vshrl.u32 %v1219, 7
  %v1221 = vsub.s32 3, %v1220
  %v1222 = vrot.slane %v1172, %v1221
  %v1223 = vmul.f32 %v1217, %v1222
  %v1224 = vadd.f32 %v1211, %v1223
  %s1225 = scalar_lea.vmem %s9, 352
  %v1226 = vld [vmem:[%s1225] sm:$0xff]
  %1228 = vset.pattern.permute.xlu0 0
  %1229 = vperm.xlu0 %1228, %v1226
  %v1230 = vpop.permute.xlu0 %1229
  %v1232 = vlaneseq
  %v1233 = vshrl.u32 %v1232, 7
  %v1234 = vsub.s32 4, %v1233
  %v1235 = vrot.slane %v1172, %v1234
  %v1236 = vmul.f32 %v1230, %v1235
  %v1237 = vadd.f32 %v1224, %v1236
  %s1238 = scalar_lea.vmem %s9, 360
  %v1239 = vld [vmem:[%s1238] sm:$0xff]
  %1241 = vset.pattern.permute.xlu0 0
  %1242 = vperm.xlu0 %1241, %v1239
  %v1243 = vpop.permute.xlu0 %1242
  %v1245 = vlaneseq
  %v1246 = vshrl.u32 %v1245, 7
  %v1247 = vsub.s32 5, %v1246
  %v1248 = vrot.slane %v1172, %v1247
  %v1249 = vmul.f32 %v1243, %v1248
  %v1250 = vadd.f32 %v1237, %v1249
  %s1251 = scalar_lea.vmem %s9, 368
  %v1252 = vld [vmem:[%s1251] sm:$0xff]
  %1254 = vset.pattern.permute.xlu0 0
  %1255 = vperm.xlu0 %1254, %v1252
  %v1256 = vpop.permute.xlu0 %1255
  %v1258 = vlaneseq
  %v1259 = vshrl.u32 %v1258, 7
  %v1260 = vsub.s32 6, %v1259
  %v1261 = vrot.slane %v1172, %v1260
  %v1262 = vmul.f32 %v1256, %v1261
  %v1263 = vadd.f32 %v1250, %v1262
  %s1264 = scalar_lea.vmem %s9, 376
  %v1265 = vld [vmem:[%s1264] sm:$0xff]
  %1267 = vset.pattern.permute.xlu0 0
  %1268 = vperm.xlu0 %1267, %v1265
  %v1269 = vpop.permute.xlu0 %1268
  %v1271 = vlaneseq
  %v1272 = vshrl.u32 %v1271, 7
  %v1273 = vsub.s32 7, %v1272
  %v1274 = vrot.slane %v1172, %v1273
  %v1275 = vmul.f32 %v1269, %v1274
  %v1276 = vadd.f32 %v1263, %v1275
  %1277 = vrot.lane.b32.xlu0 %v633, 121
  %v1278 = vpop.permute.xlu0 %1277
  %vm1279 = vmand %vm41, %vm42
  %v1280 = vsel %vm1279, 1, 0
  %vm1281 = vcmp.eq.s32.totalorder %v1280, 1
  %v1282 = vsel %vm1281, %v1278, 0.0
  %s1283 = scalar_lea.vmem %s9, 384
  %v1284 = vld [vmem:[%s1283] sm:$0xff]
  %1286 = vset.pattern.permute.xlu0 0
  %1287 = vperm.xlu0 %1286, %v1284
  %v1288 = vpop.permute.xlu0 %1287
  %v1290 = vlaneseq
  %v1291 = vshrl.u32 %v1290, 7
  %v1292 = vsub.s32 0, %v1291
  %v1293 = vrot.slane %v1282, %v1292
  %v1294 = vmul.f32 %v1288, %v1293
  %v1295 = vadd.f32 %v1276, %v1294
  %s1296 = scalar_lea.vmem %s9, 392
  %v1297 = vld [vmem:[%s1296] sm:$0xff]
  %1299 = vset.pattern.permute.xlu0 0
  %1300 = vperm.xlu0 %1299, %v1297
  %v1301 = vpop.permute.xlu0 %1300
  %v1303 = vlaneseq
  %v1304 = vshrl.u32 %v1303, 7
  %v1305 = vsub.s32 1, %v1304
  %v1306 = vrot.slane %v1282, %v1305
  %v1307 = vmul.f32 %v1301, %v1306
  %v1308 = vadd.f32 %v1295, %v1307
  %s1309 = scalar_lea.vmem %s9, 400
  %v1310 = vld [vmem:[%s1309] sm:$0xff]
  %1312 = vset.pattern.permute.xlu0 0
  %1313 = vperm.xlu0 %1312, %v1310
  %v1314 = vpop.permute.xlu0 %1313
  %v1316 = vlaneseq
  %v1317 = vshrl.u32 %v1316, 7
  %v1318 = vsub.s32 2, %v1317
  %v1319 = vrot.slane %v1282, %v1318
  %v1320 = vmul.f32 %v1314, %v1319
  %v1321 = vadd.f32 %v1308, %v1320
  %s1322 = scalar_lea.vmem %s9, 408
  %v1323 = vld [vmem:[%s1322] sm:$0xff]
  %1325 = vset.pattern.permute.xlu0 0
  %1326 = vperm.xlu0 %1325, %v1323
  %v1327 = vpop.permute.xlu0 %1326
  %v1329 = vlaneseq
  %v1330 = vshrl.u32 %v1329, 7
  %v1331 = vsub.s32 3, %v1330
  %v1332 = vrot.slane %v1282, %v1331
  %v1333 = vmul.f32 %v1327, %v1332
  %v1334 = vadd.f32 %v1321, %v1333
  %s1335 = scalar_lea.vmem %s9, 416
  %v1336 = vld [vmem:[%s1335] sm:$0xff]
  %1338 = vset.pattern.permute.xlu0 0
  %1339 = vperm.xlu0 %1338, %v1336
  %v1340 = vpop.permute.xlu0 %1339
  %v1342 = vlaneseq
  %v1343 = vshrl.u32 %v1342, 7
  %v1344 = vsub.s32 4, %v1343
  %v1345 = vrot.slane %v1282, %v1344
  %v1346 = vmul.f32 %v1340, %v1345
  %v1347 = vadd.f32 %v1334, %v1346
  %s1348 = scalar_lea.vmem %s9, 424
  %v1349 = vld [vmem:[%s1348] sm:$0xff]
  %1351 = vset.pattern.permute.xlu0 0
  %1352 = vperm.xlu0 %1351, %v1349
  %v1353 = vpop.permute.xlu0 %1352
  %v1355 = vlaneseq
  %v1356 = vshrl.u32 %v1355, 7
  %v1357 = vsub.s32 5, %v1356
  %v1358 = vrot.slane %v1282, %v1357
  %v1359 = vmul.f32 %v1353, %v1358
  %v1360 = vadd.f32 %v1347, %v1359
  %s1361 = scalar_lea.vmem %s9, 432
  %v1362 = vld [vmem:[%s1361] sm:$0xff]
  %1364 = vset.pattern.permute.xlu0 0
  %1365 = vperm.xlu0 %1364, %v1362
  %v1366 = vpop.permute.xlu0 %1365
  %v1368 = vlaneseq
  %v1369 = vshrl.u32 %v1368, 7
  %v1370 = vsub.s32 6, %v1369
  %v1371 = vrot.slane %v1282, %v1370
  %v1372 = vmul.f32 %v1366, %v1371
  %v1373 = vadd.f32 %v1360, %v1372
  %s1374 = scalar_lea.vmem %s9, 440
  %v1375 = vld [vmem:[%s1374] sm:$0xff]
  %1377 = vset.pattern.permute.xlu0 0
  %1378 = vperm.xlu0 %1377, %v1375
  %v1379 = vpop.permute.xlu0 %1378
  %v1381 = vlaneseq
  %v1382 = vshrl.u32 %v1381, 7
  %v1383 = vsub.s32 7, %v1382
  %v1384 = vrot.slane %v1282, %v1383
  %v1385 = vmul.f32 %v1379, %v1384
  %v1386 = vadd.f32 %v1373, %v1385
  %1387 = vrot.lane.b32.xlu0 %v633, 120
  %v1388 = vpop.permute.xlu0 %1387
  %v1389 = vsel %vm41, 1, 0
  %vm1390 = vcmp.eq.s32.totalorder %v1389, 1
  %v1391 = vsel %vm1390, %v1388, 0.0
  %s1392 = scalar_lea.vmem %s9, 448
  %v1393 = vld [vmem:[%s1392] sm:$0xff]
  %1395 = vset.pattern.permute.xlu0 0
  %1396 = vperm.xlu0 %1395, %v1393
  %v1397 = vpop.permute.xlu0 %1396
  %v1399 = vlaneseq
  %v1400 = vshrl.u32 %v1399, 7
  %v1401 = vsub.s32 0, %v1400
  %v1402 = vrot.slane %v1391, %v1401
  %v1403 = vmul.f32 %v1397, %v1402
  %v1404 = vadd.f32 %v1386, %v1403
  %s1405 = scalar_lea.vmem %s9, 456
  %v1406 = vld [vmem:[%s1405] sm:$0xff]
  %1408 = vset.pattern.permute.xlu0 0
  %1409 = vperm.xlu0 %1408, %v1406
  %v1410 = vpop.permute.xlu0 %1409
  %v1412 = vlaneseq
  %v1413 = vshrl.u32 %v1412, 7
  %v1414 = vsub.s32 1, %v1413
  %v1415 = vrot.slane %v1391, %v1414
  %v1416 = vmul.f32 %v1410, %v1415
  %v1417 = vadd.f32 %v1404, %v1416
  %s1418 = scalar_lea.vmem %s9, 464
  %v1419 = vld [vmem:[%s1418] sm:$0xff]
  %1421 = vset.pattern.permute.xlu0 0
  %1422 = vperm.xlu0 %1421, %v1419
  %v1423 = vpop.permute.xlu0 %1422
  %v1425 = vlaneseq
  %v1426 = vshrl.u32 %v1425, 7
  %v1427 = vsub.s32 2, %v1426
  %v1428 = vrot.slane %v1391, %v1427
  %v1429 = vmul.f32 %v1423, %v1428
  %v1430 = vadd.f32 %v1417, %v1429
  %s1431 = scalar_lea.vmem %s9, 472
  %v1432 = vld [vmem:[%s1431] sm:$0xff]
  %1434 = vset.pattern.permute.xlu0 0
  %1435 = vperm.xlu0 %1434, %v1432
  %v1436 = vpop.permute.xlu0 %1435
  %v1438 = vlaneseq
  %v1439 = vshrl.u32 %v1438, 7
  %v1440 = vsub.s32 3, %v1439
  %v1441 = vrot.slane %v1391, %v1440
  %v1442 = vmul.f32 %v1436, %v1441
  %v1443 = vadd.f32 %v1430, %v1442
  %s1444 = scalar_lea.vmem %s9, 480
  %v1445 = vld [vmem:[%s1444] sm:$0xff]
  %1447 = vset.pattern.permute.xlu0 0
  %1448 = vperm.xlu0 %1447, %v1445
  %v1449 = vpop.permute.xlu0 %1448
  %v1451 = vlaneseq
  %v1452 = vshrl.u32 %v1451, 7
  %v1453 = vsub.s32 4, %v1452
  %v1454 = vrot.slane %v1391, %v1453
  %v1455 = vmul.f32 %v1449, %v1454
  %v1456 = vadd.f32 %v1443, %v1455
  %s1457 = scalar_lea.vmem %s9, 488
  %v1458 = vld [vmem:[%s1457] sm:$0xff]
  %1460 = vset.pattern.permute.xlu0 0
  %1461 = vperm.xlu0 %1460, %v1458
  %v1462 = vpop.permute.xlu0 %1461
  %v1464 = vlaneseq
  %v1465 = vshrl.u32 %v1464, 7
  %v1466 = vsub.s32 5, %v1465
  %v1467 = vrot.slane %v1391, %v1466
  %v1468 = vmul.f32 %v1462, %v1467
  %v1469 = vadd.f32 %v1456, %v1468
  %s1470 = scalar_lea.vmem %s9, 496
  %v1471 = vld [vmem:[%s1470] sm:$0xff]
  %1473 = vset.pattern.permute.xlu0 0
  %1474 = vperm.xlu0 %1473, %v1471
  %v1475 = vpop.permute.xlu0 %1474
  %v1477 = vlaneseq
  %v1478 = vshrl.u32 %v1477, 7
  %v1479 = vsub.s32 6, %v1478
  %v1480 = vrot.slane %v1391, %v1479
  %v1481 = vmul.f32 %v1475, %v1480
  %v1482 = vadd.f32 %v1469, %v1481
  %s1483 = scalar_lea.vmem %s9, 504
  %v1484 = vld [vmem:[%s1483] sm:$0xff]
  %1486 = vset.pattern.permute.xlu0 0
  %1487 = vperm.xlu0 %1486, %v1484
  %v1488 = vpop.permute.xlu0 %1487
  %v1490 = vlaneseq
  %v1491 = vshrl.u32 %v1490, 7
  %v1492 = vsub.s32 7, %v1491
  %v1493 = vrot.slane %v1391, %v1492
  %v1494 = vmul.f32 %v1488, %v1493
  %v1495 = vadd.f32 %v1482, %v1494
  %1496 = vrot.lane.b32.xlu0 %v633, 119
  %v1497 = vpop.permute.xlu0 %1496
  %vm1498 = vmand %vm41, %vm43
  %v1499 = vsel %vm1498, 1, 0
  %vm1500 = vcmp.eq.s32.totalorder %v1499, 1
  %v1501 = vsel %vm1500, %v1497, 0.0
  %s1502 = scalar_lea.vmem %s9, 512
  %v1503 = vld [vmem:[%s1502] sm:$0xff]
  %1505 = vset.pattern.permute.xlu0 0
  %1506 = vperm.xlu0 %1505, %v1503
  %v1507 = vpop.permute.xlu0 %1506
  %v1509 = vlaneseq
  %v1510 = vshrl.u32 %v1509, 7
  %v1511 = vsub.s32 0, %v1510
  %v1512 = vrot.slane %v1501, %v1511
  %v1513 = vmul.f32 %v1507, %v1512
  %v1514 = vadd.f32 %v1495, %v1513
  %s1515 = scalar_lea.vmem %s9, 520
  %v1516 = vld [vmem:[%s1515] sm:$0xff]
  %1518 = vset.pattern.permute.xlu0 0
  %1519 = vperm.xlu0 %1518, %v1516
  %v1520 = vpop.permute.xlu0 %1519
  %v1522 = vlaneseq
  %v1523 = vshrl.u32 %v1522, 7
  %v1524 = vsub.s32 1, %v1523
  %v1525 = vrot.slane %v1501, %v1524
  %v1526 = vmul.f32 %v1520, %v1525
  %v1527 = vadd.f32 %v1514, %v1526
  %s1528 = scalar_lea.vmem %s9, 528
  %v1529 = vld [vmem:[%s1528] sm:$0xff]
  %1531 = vset.pattern.permute.xlu0 0
  %1532 = vperm.xlu0 %1531, %v1529
  %v1533 = vpop.permute.xlu0 %1532
  %v1535 = vlaneseq
  %v1536 = vshrl.u32 %v1535, 7
  %v1537 = vsub.s32 2, %v1536
  %v1538 = vrot.slane %v1501, %v1537
  %v1539 = vmul.f32 %v1533, %v1538
  %v1540 = vadd.f32 %v1527, %v1539
  %s1541 = scalar_lea.vmem %s9, 536
  %v1542 = vld [vmem:[%s1541] sm:$0xff]
  %1544 = vset.pattern.permute.xlu0 0
  %1545 = vperm.xlu0 %1544, %v1542
  %v1546 = vpop.permute.xlu0 %1545
  %v1548 = vlaneseq
  %v1549 = vshrl.u32 %v1548, 7
  %v1550 = vsub.s32 3, %v1549
  %v1551 = vrot.slane %v1501, %v1550
  %v1552 = vmul.f32 %v1546, %v1551
  %v1553 = vadd.f32 %v1540, %v1552
  %s1554 = scalar_lea.vmem %s9, 544
  %v1555 = vld [vmem:[%s1554] sm:$0xff]
  %1557 = vset.pattern.permute.xlu0 0
  %1558 = vperm.xlu0 %1557, %v1555
  %v1559 = vpop.permute.xlu0 %1558
  %v1561 = vlaneseq
  %v1562 = vshrl.u32 %v1561, 7
  %v1563 = vsub.s32 4, %v1562
  %v1564 = vrot.slane %v1501, %v1563
  %v1565 = vmul.f32 %v1559, %v1564
  %v1566 = vadd.f32 %v1553, %v1565
  %s1567 = scalar_lea.vmem %s9, 552
  %v1568 = vld [vmem:[%s1567] sm:$0xff]
  %1570 = vset.pattern.permute.xlu0 0
  %1571 = vperm.xlu0 %1570, %v1568
  %v1572 = vpop.permute.xlu0 %1571
  %v1574 = vlaneseq
  %v1575 = vshrl.u32 %v1574, 7
  %v1576 = vsub.s32 5, %v1575
  %v1577 = vrot.slane %v1501, %v1576
  %v1578 = vmul.f32 %v1572, %v1577
  %v1579 = vadd.f32 %v1566, %v1578
  %s1580 = scalar_lea.vmem %s9, 560
  %v1581 = vld [vmem:[%s1580] sm:$0xff]
  %1583 = vset.pattern.permute.xlu0 0
  %1584 = vperm.xlu0 %1583, %v1581
  %v1585 = vpop.permute.xlu0 %1584
  %v1587 = vlaneseq
  %v1588 = vshrl.u32 %v1587, 7
  %v1589 = vsub.s32 6, %v1588
  %v1590 = vrot.slane %v1501, %v1589
  %v1591 = vmul.f32 %v1585, %v1590
  %v1592 = vadd.f32 %v1579, %v1591
  %s1593 = scalar_lea.vmem %s9, 568
  %v1594 = vld [vmem:[%s1593] sm:$0xff]
  %1596 = vset.pattern.permute.xlu0 0
  %1597 = vperm.xlu0 %1596, %v1594
  %v1598 = vpop.permute.xlu0 %1597
  %v1600 = vlaneseq
  %v1601 = vshrl.u32 %v1600, 7
  %v1602 = vsub.s32 7, %v1601
  %v1603 = vrot.slane %v1501, %v1602
  %v1604 = vmul.f32 %v1598, %v1603
  %v1605 = vadd.f32 %v1592, %v1604
  %1606 = vst [vmem:[%s10] sm:$0xff] %v1605
  // Predicated region
  $region42: #{adjust_block_forward.1} parent=0 // pred_check
    _
  $region43: #{adjust_block_forward.1} parent=0 // pred_check_branch
    %1608 = sbr.rel (0) target = $region45
  $region44: #{adjust_block_forward.1} parent=0 // pred_region
    _
  $region45: #{adjust_block_forward.1} parent=0 // pred_fallthru
    _
  // Predicated region
  $region46: #{adjust_block_forward.1} parent=0 // pred_check
    _
  $region47: #{adjust_block_forward.1} parent=0 // pred_check_branch
    %1610 = sbr.rel (0) target = $region49
  $region48: #{adjust_block_forward.1} parent=0 // pred_region
    _
  $region49: #{adjust_block_forward.1} parent=0 // pred_fallthru
    _

</llo_original>
